<compile_context>
chip_gen: v7x
topology: tpu7x:2x2x1
jax: 0.10.0
libtpu: 0.0.40
codegen_flags: <defaults>
</compile_context>

<pallas_src>
import jax
import jax.numpy as jnp
from jax.experimental import pallas as pl
from jax.experimental.pallas import tpu as pltpu

NUM_DD_LAYERS = 4  # Linear(D, D) + Sigmoid blocks in the module


def _gen_logistic_kernel(z_ref, w0_ref, b0_ref, ws_ref, bs_ref, o_ref):
    """Whole forward pass for one batch tile.

    z_ref : (tb, latent_dim) f32
    w0_ref: (latent_dim, D)  bf16   first Linear weight, stored (in, out)
    b0_ref: (1, D)           f32
    ws_ref: (L, D, D)        bf16   D->D weights, stored (in, out)
    bs_ref: (L, 1, D)        f32
    o_ref : (tb, D)
    """
    # Linear(latent -> D), no activation (matches the nn.Sequential order).
    h = jnp.dot(z_ref[...].astype(jnp.bfloat16), w0_ref[...],
                preferred_element_type=jnp.float32) + b0_ref[...]

    # 4 x (Linear(D, D) + Sigmoid), statically unrolled; weights are resident.
    for l in range(ws_ref.shape[0]):
        h = jnp.dot(h.astype(jnp.bfloat16), ws_ref[l],
                    preferred_element_type=jnp.float32) + bs_ref[l]
        # sigmoid: exp on the EUP + exact reciprocal (no VPU divide sequence)
        h = pl.reciprocal(1.0 + jnp.exp(-h), approx=False)

    o_ref[...] = h.astype(o_ref.dtype)


def _pick_batch_tile(B):
    """Largest batch tile that divides B, is a sublane multiple (8), and
    leaves >= 2 tiles once B >= 16 so both v7x TensorCores get work."""
    if B >= 16 and B % 16 == 0:
        tb = min(B // 2, 128)
        if B % tb == 0 and tb % 8 == 0:
            return tb
    return B


def _padded_bytes(rows, cols, itemsize):
    return (-(-rows // 8) * 8) * (-(-cols // 128) * 128) * itemsize


def _vmem_limit_bytes(tb, latent_dim, D, L):
    bf16, f32 = 2, 4
    need = (
        2 * _padded_bytes(tb, latent_dim, f32)     # z tile (double-buffered)
        + 2 * _padded_bytes(latent_dim, D, bf16)   # w0
        + 2 * _padded_bytes(1, D, f32)             # b0
        + 2 * L * _padded_bytes(D, D, bf16)        # ws stack
        + 2 * L * _padded_bytes(1, D, f32)         # bs stack
        + 2 * _padded_bytes(tb, D, f32)            # output tile
        + _padded_bytes(tb, D, f32)                # live hidden-state slack
    )
    # 2x headroom, 4 MiB floor, <= 32 MiB (v7x scoped-VMEM-safe ceiling).
    return int(min(max(2 * need, 4 << 20), 32 << 20))


def generator_logistic_forward(z, w0, b0, ws, bs, img_size=(5, 1, 84)):
    """z: (B, latent_dim) -> (B, *img_size), matching x.view(-1, 5, 1, 84)."""
    B, latent_dim = z.shape
    L, D, _ = ws.shape

    # bf16 weights go straight to the MXU; biases stay f32.
    w0 = w0.astype(jnp.bfloat16)
    ws = ws.astype(jnp.bfloat16)
    b0 = b0.astype(jnp.float32)
    bs = bs.astype(jnp.float32)

    tb = _pick_batch_tile(B)
    grid = (B // tb,)

    out_flat = pl.pallas_call(
        _gen_logistic_kernel,
        out_shape=jax.ShapeDtypeStruct((B, D), z.dtype),
        grid_spec=pltpu.PrefetchScalarGridSpec(
            num_scalar_prefetch=0,
            grid=grid,
            in_specs=[
                pl.BlockSpec((tb, latent_dim), lambda i: (i, 0)),  # z tile
                pl.BlockSpec((latent_dim, D), lambda i: (0, 0)),   # w0 (resident)
                pl.BlockSpec((1, D), lambda i: (0, 0)),            # b0 (resident)
                pl.BlockSpec((L, D, D), lambda i: (0, 0, 0)),      # ws (resident)
                pl.BlockSpec((L, 1, D), lambda i: (0, 0, 0)),      # bs (resident)
            ],
            out_specs=pl.BlockSpec((tb, D), lambda i: (i, 0)),
        ),
        compiler_params=pltpu.CompilerParams(
            dimension_semantics=("parallel",),  # batch tiles -> both v7x cores
            vmem_limit_bytes=_vmem_limit_bytes(tb, latent_dim, D, L),
        ),
    )(z, w0, b0, ws, bs)

    # glue: matches the module's hard-coded `x.view(-1, 5, 1, 84)`
    return out_flat.reshape((B,) + tuple(img_size))


def init_params(key, latent_dim, D, dtype=jnp.float32, num_dd_layers=NUM_DD_LAYERS):
    """PyTorch nn.Linear default init: U(-1/sqrt(fan_in), 1/sqrt(fan_in)).
    Weights are stored pre-transposed as (in, out)."""
    keys = jax.random.split(key, 2 + 2 * num_dd_layers)
    bl = 1.0 / float(latent_dim) ** 0.5
    bd = 1.0 / float(D) ** 0.5
    w0 = jax.random.uniform(keys[0], (latent_dim, D), dtype, -bl, bl)
    b0 = jax.random.uniform(keys[1], (1, D), dtype, -bl, bl)
    ws = [jax.random.uniform(keys[2 + 2 * l], (D, D), dtype, -bd, bd)
          for l in range(num_dd_layers)]
    bs = [jax.random.uniform(keys[3 + 2 * l], (1, D), dtype, -bd, bd)
          for l in range(num_dd_layers)]
    return w0, b0, jnp.stack(ws, 0), jnp.stack(bs, 0)


def reference_forward_bf16(z, w0, b0, ws, bs, img_size=(5, 1, 84)):
    """Pure-JAX reference mirroring the kernel's bf16-weight / f32-acc numerics."""
    w0 = w0.astype(jnp.bfloat16)
    ws = ws.astype(jnp.bfloat16)
    h = jnp.dot(z.astype(jnp.bfloat16), w0,
                preferred_element_type=jnp.float32) + b0.astype(jnp.float32)
    for l in range(ws.shape[0]):
        h = jnp.dot(h.astype(jnp.bfloat16), ws[l],
                    preferred_element_type=jnp.float32) + bs[l].astype(jnp.float32)
        h = 1.0 / (1.0 + jnp.exp(-h))
    return h.astype(z.dtype).reshape((z.shape[0],) + tuple(img_size))


def reference_forward_f32(z, w0, b0, ws, bs, img_size=(5, 1, 84)):
    """Pure f32 forward, i.e. the exact PyTorch-module semantics."""
    h = z @ w0 + b0
    for l in range(ws.shape[0]):
        h = h @ ws[l] + bs[l]
        h = 1.0 / (1.0 + jnp.exp(-h))
    return h.astype(z.dtype).reshape((z.shape[0],) + tuple(img_size))


if __name__ == "__main__":
    # Shapes implied by the module: view(-1, 5, 1, 84) => img_size=(5,1,84), D=420.
    img_size = (5, 1, 84)
    D = img_size[0] * img_size[1] * img_size[2]
    latent_dim = 64
    batch_size = 16  # 2 batch tiles of 8 rows -> exercises the parallel batch axis

    key = jax.random.PRNGKey(0)
    k_z, k_p = jax.random.split(key)
    z = jax.random.normal(k_z, (batch_size, latent_dim), dtype=jnp.float32)
    w0, b0, ws, bs = init_params(k_p, latent_dim, D)

    out = generator_logistic_forward(z, w0, b0, ws, bs, img_size)
    out = jax.block_until_ready(out)
    assert out.shape == (batch_size,) + img_size, out.shape

    # Tight check against a reference mirroring the kernel's bf16-weight numerics.
    ref_bf16 = reference_forward_bf16(z, w0, b0, ws, bs, img_size)
    assert jnp.allclose(out, ref_bf16, atol=1e-3, rtol=1e-3)

    # Looser sanity check against the pure-f32 (PyTorch-semantics) forward;
    # the only difference is bf16 weight/activation rounding.
    ref_f32 = reference_forward_f32(z, w0, b0, ws, bs, img_size)
    assert jnp.allclose(out, ref_f32, atol=2e-2, rtol=0.0)

    print("KERNEL_OK")
</pallas_src>

<mosaic_0001>
module attributes {stable_mosaic.version = 11 : i64} {
  func.func @_gen_logistic_kernel(%arg0: i32, %arg1: memref<8x64xf32, #tpu.memory_space<vmem>>, %arg2: memref<64x420xbf16, #tpu.memory_space<vmem>>, %arg3: memref<1x420xf32, #tpu.memory_space<vmem>>, %arg4: memref<4x420x420xbf16, #tpu.memory_space<vmem>>, %arg5: memref<4x1x420xf32, #tpu.memory_space<vmem>>, %arg6: memref<8x420xf32, #tpu.memory_space<vmem>>) attributes {dimension_semantics = [#tpu.dimension_semantics<parallel>], iteration_bounds = array<i64: 2>, scalar_prefetch = 0 : i64, scratch_operands = 0 : i64, tpu.core_type = #tpu.core_type<tc>, window_params = [{transform_indices = @transform_0, window_bounds = array<i64: 8, 64>}, {pipeline_mode = #tpu.pipeline_mode<synchronous>, transform_indices = @transform_1, window_bounds = array<i64: 64, 420>}, {pipeline_mode = #tpu.pipeline_mode<synchronous>, transform_indices = @transform_2, window_bounds = array<i64: 1, 420>}, {pipeline_mode = #tpu.pipeline_mode<synchronous>, transform_indices = @transform_3, window_bounds = array<i64: 4, 420, 420>}, {pipeline_mode = #tpu.pipeline_mode<synchronous>, transform_indices = @transform_4, window_bounds = array<i64: 4, 1, 420>}, {transform_indices = @transform_5, window_bounds = array<i64: 8, 420>}]} {
    %c0 = arith.constant 0 : index
    %c0_0 = arith.constant 0 : index
    %0 = vector.load %arg1[%c0, %c0_0] : memref<8x64xf32, #tpu.memory_space<vmem>>, vector<8x64xf32>
    %1 = arith.truncf %0 : vector<8x64xf32> to vector<8x64xbf16>
    %c0_1 = arith.constant 0 : index
    %c0_2 = arith.constant 0 : index
    %2 = vector.load %arg2[%c0_1, %c0_2] : memref<64x420xbf16, #tpu.memory_space<vmem>>, vector<64x420xbf16>
    %cst = arith.constant dense<0.000000e+00> : vector<8x420xf32>
    %3 = tpu.matmul %1, %2, %cst {dimension_numbers = #tpu.dot_dimension_numbers<[1], [0], [0], [1], [0, 0, 1, 1], [], []>} : vector<8x64xbf16>, vector<64x420xbf16>, vector<8x420xf32> -> vector<8x420xf32>
    %c0_3 = arith.constant 0 : index
    %c0_4 = arith.constant 0 : index
    %4 = vector.load %arg3[%c0_3, %c0_4] : memref<1x420xf32, #tpu.memory_space<vmem>>, vector<1x420xf32>
    %5 = vector.broadcast %4 : vector<1x420xf32> to vector<8x420xf32>
    %6 = arith.addf %3, %5 : vector<8x420xf32>
    %7 = arith.truncf %6 : vector<8x420xf32> to vector<8x420xbf16>
    %c0_5 = arith.constant 0 : index
    %c0_6 = arith.constant 0 : index
    %c0_7 = arith.constant 0 : index
    %8 = vector.load %arg4[%c0_5, %c0_6, %c0_7] : memref<4x420x420xbf16, #tpu.memory_space<vmem>>, vector<1x420x420xbf16>
    %9 = vector.shape_cast %8 : vector<1x420x420xbf16> to vector<420x420xbf16>
    %cst_8 = arith.constant dense<0.000000e+00> : vector<8x420xf32>
    %10 = tpu.matmul %7, %9, %cst_8 {dimension_numbers = #tpu.dot_dimension_numbers<[1], [0], [0], [1], [0, 0, 1, 1], [], []>} : vector<8x420xbf16>, vector<420x420xbf16>, vector<8x420xf32> -> vector<8x420xf32>
    %c0_9 = arith.constant 0 : index
    %c0_10 = arith.constant 0 : index
    %c0_11 = arith.constant 0 : index
    %11 = vector.load %arg5[%c0_9, %c0_10, %c0_11] : memref<4x1x420xf32, #tpu.memory_space<vmem>>, vector<1x1x420xf32>
    %12 = vector.shape_cast %11 : vector<1x1x420xf32> to vector<1x420xf32>
    %13 = vector.broadcast %12 : vector<1x420xf32> to vector<8x420xf32>
    %14 = arith.addf %10, %13 : vector<8x420xf32>
    %cst_12 = arith.constant 0.000000e+00 : f32
    %15 = vector.broadcast %cst_12 : f32 to vector<8x420xf32>
    %16 = arith.subf %15, %14 : vector<8x420xf32>
    %17 = math.exp %16 : vector<8x420xf32>
    %cst_13 = arith.constant 1.000000e+00 : f32
    %18 = vector.broadcast %cst_13 : f32 to vector<8x420xf32>
    %19 = arith.addf %18, %17 : vector<8x420xf32>
    %20 = tpu.reciprocal %19 : vector<8x420xf32> -> vector<8x420xf32>
    %21 = arith.truncf %20 : vector<8x420xf32> to vector<8x420xbf16>
    %c1 = arith.constant 1 : index
    %c0_14 = arith.constant 0 : index
    %c0_15 = arith.constant 0 : index
    %22 = vector.load %arg4[%c1, %c0_14, %c0_15] : memref<4x420x420xbf16, #tpu.memory_space<vmem>>, vector<1x420x420xbf16>
    %23 = vector.shape_cast %22 : vector<1x420x420xbf16> to vector<420x420xbf16>
    %cst_16 = arith.constant dense<0.000000e+00> : vector<8x420xf32>
    %24 = tpu.matmul %21, %23, %cst_16 {dimension_numbers = #tpu.dot_dimension_numbers<[1], [0], [0], [1], [0, 0, 1, 1], [], []>} : vector<8x420xbf16>, vector<420x420xbf16>, vector<8x420xf32> -> vector<8x420xf32>
    %c1_17 = arith.constant 1 : index
    %c0_18 = arith.constant 0 : index
    %c0_19 = arith.constant 0 : index
    %25 = vector.load %arg5[%c1_17, %c0_18, %c0_19] : memref<4x1x420xf32, #tpu.memory_space<vmem>>, vector<1x1x420xf32>
    %26 = vector.shape_cast %25 : vector<1x1x420xf32> to vector<1x420xf32>
    %27 = vector.broadcast %26 : vector<1x420xf32> to vector<8x420xf32>
    %28 = arith.addf %24, %27 : vector<8x420xf32>
    %cst_20 = arith.constant 0.000000e+00 : f32
    %29 = vector.broadcast %cst_20 : f32 to vector<8x420xf32>
    %30 = arith.subf %29, %28 : vector<8x420xf32>
    %31 = math.exp %30 : vector<8x420xf32>
    %cst_21 = arith.constant 1.000000e+00 : f32
    %32 = vector.broadcast %cst_21 : f32 to vector<8x420xf32>
    %33 = arith.addf %32, %31 : vector<8x420xf32>
    %34 = tpu.reciprocal %33 : vector<8x420xf32> -> vector<8x420xf32>
    %35 = arith.truncf %34 : vector<8x420xf32> to vector<8x420xbf16>
    %c2 = arith.constant 2 : index
    %c0_22 = arith.constant 0 : index
    %c0_23 = arith.constant 0 : index
    %36 = vector.load %arg4[%c2, %c0_22, %c0_23] : memref<4x420x420xbf16, #tpu.memory_space<vmem>>, vector<1x420x420xbf16>
    %37 = vector.shape_cast %36 : vector<1x420x420xbf16> to vector<420x420xbf16>
    %cst_24 = arith.constant dense<0.000000e+00> : vector<8x420xf32>
    %38 = tpu.matmul %35, %37, %cst_24 {dimension_numbers = #tpu.dot_dimension_numbers<[1], [0], [0], [1], [0, 0, 1, 1], [], []>} : vector<8x420xbf16>, vector<420x420xbf16>, vector<8x420xf32> -> vector<8x420xf32>
    %c2_25 = arith.constant 2 : index
    %c0_26 = arith.constant 0 : index
    %c0_27 = arith.constant 0 : index
    %39 = vector.load %arg5[%c2_25, %c0_26, %c0_27] : memref<4x1x420xf32, #tpu.memory_space<vmem>>, vector<1x1x420xf32>
    %40 = vector.shape_cast %39 : vector<1x1x420xf32> to vector<1x420xf32>
    %41 = vector.broadcast %40 : vector<1x420xf32> to vector<8x420xf32>
    %42 = arith.addf %38, %41 : vector<8x420xf32>
    %cst_28 = arith.constant 0.000000e+00 : f32
    %43 = vector.broadcast %cst_28 : f32 to vector<8x420xf32>
    %44 = arith.subf %43, %42 : vector<8x420xf32>
    %45 = math.exp %44 : vector<8x420xf32>
    %cst_29 = arith.constant 1.000000e+00 : f32
    %46 = vector.broadcast %cst_29 : f32 to vector<8x420xf32>
    %47 = arith.addf %46, %45 : vector<8x420xf32>
    %48 = tpu.reciprocal %47 : vector<8x420xf32> -> vector<8x420xf32>
    %49 = arith.truncf %48 : vector<8x420xf32> to vector<8x420xbf16>
    %c3 = arith.constant 3 : index
    %c0_30 = arith.constant 0 : index
    %c0_31 = arith.constant 0 : index
    %50 = vector.load %arg4[%c3, %c0_30, %c0_31] : memref<4x420x420xbf16, #tpu.memory_space<vmem>>, vector<1x420x420xbf16>
    %51 = vector.shape_cast %50 : vector<1x420x420xbf16> to vector<420x420xbf16>
    %cst_32 = arith.constant dense<0.000000e+00> : vector<8x420xf32>
    %52 = tpu.matmul %49, %51, %cst_32 {dimension_numbers = #tpu.dot_dimension_numbers<[1], [0], [0], [1], [0, 0, 1, 1], [], []>} : vector<8x420xbf16>, vector<420x420xbf16>, vector<8x420xf32> -> vector<8x420xf32>
    %c3_33 = arith.constant 3 : index
    %c0_34 = arith.constant 0 : index
    %c0_35 = arith.constant 0 : index
    %53 = vector.load %arg5[%c3_33, %c0_34, %c0_35] : memref<4x1x420xf32, #tpu.memory_space<vmem>>, vector<1x1x420xf32>
    %54 = vector.shape_cast %53 : vector<1x1x420xf32> to vector<1x420xf32>
    %55 = vector.broadcast %54 : vector<1x420xf32> to vector<8x420xf32>
    %56 = arith.addf %52, %55 : vector<8x420xf32>
    %cst_36 = arith.constant 0.000000e+00 : f32
    %57 = vector.broadcast %cst_36 : f32 to vector<8x420xf32>
    %58 = arith.subf %57, %56 : vector<8x420xf32>
    %59 = math.exp %58 : vector<8x420xf32>
    %cst_37 = arith.constant 1.000000e+00 : f32
    %60 = vector.broadcast %cst_37 : f32 to vector<8x420xf32>
    %61 = arith.addf %60, %59 : vector<8x420xf32>
    %62 = tpu.reciprocal %61 : vector<8x420xf32> -> vector<8x420xf32>
    %c0_38 = arith.constant 0 : index
    %c0_39 = arith.constant 0 : index
    %63 = vector.load %arg6[%c0_38, %c0_39] : memref<8x420xf32, #tpu.memory_space<vmem>>, vector<8x420xf32>
    tpu.vector_store %arg6[%c0_38, %c0_39], %62 {strides = array<i32>} : memref<8x420xf32, #tpu.memory_space<vmem>>, vector<8x420xf32>,
    return
  }
  func.func @transform_0(%arg0: i32) -> (i32, i32) {
    %c0_i32 = arith.constant 0 : i32
    %c0_i32_0 = arith.constant 0 : i32
    return %arg0, %c0_i32 : i32, i32
  }
  func.func @transform_1(%arg0: i32) -> (i32, i32) {
    %c0_i32 = arith.constant 0 : i32
    %c0_i32_0 = arith.constant 0 : i32
    %c0_i32_1 = arith.constant 0 : i32
    return %c0_i32, %c0_i32_0 : i32, i32
  }
  func.func @transform_2(%arg0: i32) -> (i32, i32) {
    %c0_i32 = arith.constant 0 : i32
    %c0_i32_0 = arith.constant 0 : i32
    %c0_i32_1 = arith.constant 0 : i32
    return %c0_i32, %c0_i32_0 : i32, i32
  }
  func.func @transform_3(%arg0: i32) -> (i32, i32, i32) {
    %c0_i32 = arith.constant 0 : i32
    %c0_i32_0 = arith.constant 0 : i32
    %c0_i32_1 = arith.constant 0 : i32
    %c0_i32_2 = arith.constant 0 : i32
    return %c0_i32, %c0_i32_0, %c0_i32_1 : i32, i32, i32
  }
  func.func @transform_4(%arg0: i32) -> (i32, i32, i32) {
    %c0_i32 = arith.constant 0 : i32
    %c0_i32_0 = arith.constant 0 : i32
    %c0_i32_1 = arith.constant 0 : i32
    %c0_i32_2 = arith.constant 0 : i32
    return %c0_i32, %c0_i32_0, %c0_i32_1 : i32, i32, i32
  }
  func.func @transform_5(%arg0: i32) -> (i32, i32) {
    %c0_i32 = arith.constant 0 : i32
    %c0_i32_0 = arith.constant 0 : i32
    return %arg0, %c0_i32 : i32, i32
  }
}

</mosaic_0001>

<llo_original>
// kernel: tpu_custom_call.1
$region0: #{tpu_custom_call.1}
  #allocation0 [shape = 'u32[]', space=smem, size = 0x4, offset = 0x4, fixed_abs, tag = 'smem constant byte address 0x4 - core index']
  #allocation1 [shape = 'u32[144,128]{1,0:T(1,128)}', space=vmem, size = 0x12000, scoped, tag = 'internal scratch']
  %s0 = inlined_call_operand.vmem [shape: f32[16,64], index: 0, kind: input, shape index: {}]
  %s1 = inlined_call_operand.vmem [shape: bf16[64,420], index: 1, kind: input, shape index: {}]
  %s2 = inlined_call_operand.vmem [shape: f32[1,420], index: 2, kind: input, shape index: {}]
  %s3 = inlined_call_operand.vmem [shape: bf16[4,420,420], index: 3, kind: input, shape index: {}]
  %s4 = inlined_call_operand.vmem [shape: f32[4,1,420], index: 4, kind: input, shape index: {}]
  %s5 = inlined_call_operand.hbm [shape: f32[16,420], index: 5, kind: output, shape index: {}]
  %s6 = sld [smem:[#allocation0]]
  $region53: #{tpu_custom_call.1} parent=0
    _
  %s8 = ssub.s32 1, %s6
  %s9 = scalar_select 0, %s8, %s6
  $region1: #{tpu_custom_call.1} parent=0
    #allocation2 [shape = 'u8[32768]{0}', space=vmem, size = 0x8000, scoped, tag = 'output window, operand 0']
    #allocation3 [shape = 's32[2]{0}', space=sflag, size = 0x8, scoped, tag = 'scoped memory for tpu_custom_call.1']
    %10 = vsyncpa [#allocation3], 0
    %s11 = scalar_lea.sflag [#allocation3], 1
    %12 = vsyncpa %s11, 0
    loop: start=0, step=1, limit=4
    $region2: #{tpu_custom_call.1} parent=1 // loop_pre_header
      _
    $region3: #{tpu_custom_call.1} parent=1 // loop_header
      %s14 = sphi 0, %s18
      %p15 = scmp.ge.s32.totalorder %s14, 4
      %s24 = sphi 0, %s26
      %s27 = sphi 0, %s24
      %s28 = sphi 0, %s27
      %s44 = sphi 0, %s28
      %s48 = sphi 0, %s48
      %s50 = sphi 0, %s48
      %s51 = sphi 0, %s50
      %s65 = sphi 0, %s51
      %s69 = sphi 0, %s69
      %s71 = sphi 0, %s69
      %s72 = sphi 0, %s71
      %s86 = sphi 0, %s72
      %s90 = sphi 0, %s90
      %s92 = sphi 0, %s90
      %s93 = sphi 0, %s92
      %s107 = sphi 0, %s93
      %s111 = sphi 0, %s111
      %s113 = sphi 0, %s111
      %s114 = sphi 0, %s113
      %s128 = sphi 0, %s114
      %s134 = sphi 0, %s136
      %s137 = sphi 0, %s134
      %s138 = sphi 0, %s137
      %s154 = sphi 0, %s138
    $region4: #{tpu_custom_call.1} parent=1 // loop_header_branch
      %17 = sbr.rel (%p15) target = $region8
    $region5: #{tpu_custom_call.1} parent=1 // loop_body
      %s19 = ssub.s32 %s14, 1
      %s20 = ssub.s32 %s14, 2
      %s21 = sadd.s32 %s14, 1
      %s22 = ssub.s32 %s14, %s21
      %p23 = scmp.eq.s32.totalorder %s22, 0
      %s25 = sadd.s32 %s24, 1
      %s26 = scalar_select %p23, %s24, %s25
      %p29 = pneg %p23
      %p30 = scmp.eq.s32.totalorder %s14, 1
      %p31 = por %p29, %p30
      %p32 = scmp.ne.s32.totalorder %s24, %s27
      %p33 = scmp.eq.s32.totalorder %s14, 0
      %p34 = por %p32, %p33
      %p35 = scmp.ne.s32.totalorder %s24, %s27
      %p36 = scmp.eq.s32.totalorder %s19, 1
      %p37 = por %p35, %p36
      %p38 = scmp.ne.s32.totalorder %s27, %s28
      %p39 = scmp.eq.s32.totalorder %s19, 0
      %p40 = por %p38, %p39
      %p41 = scmp.ne.s32.totalorder %s27, %s28
      %p42 = scmp.eq.s32.totalorder %s20, 1
      %p43 = por %p41, %p42
      %p45 = scmp.ne.s32.totalorder %s28, %s44
      %p46 = scmp.eq.s32.totalorder %s20, 0
      %p47 = por %p45, %p46
      %s49 = sadd.s32 %s48, 1
      %p52 = scmp.eq.s32.totalorder %s14, 1
      %p53 = scmp.ne.s32.totalorder %s48, %s50
      %p54 = scmp.eq.s32.totalorder %s14, 0
      %p55 = por %p53, %p54
      %p56 = scmp.ne.s32.totalorder %s48, %s50
      %p57 = scmp.eq.s32.totalorder %s19, 1
      %p58 = por %p56, %p57
      %p59 = scmp.ne.s32.totalorder %s50, %s51
      %p60 = scmp.eq.s32.totalorder %s19, 0
      %p61 = por %p59, %p60
      %p62 = scmp.ne.s32.totalorder %s50, %s51
      %p63 = scmp.eq.s32.totalorder %s20, 1
      %p64 = por %p62, %p63
      %p66 = scmp.ne.s32.totalorder %s51, %s65
      %p67 = scmp.eq.s32.totalorder %s20, 0
      %p68 = por %p66, %p67
      %s70 = sadd.s32 %s69, 1
      %p73 = scmp.eq.s32.totalorder %s14, 1
      %p74 = scmp.ne.s32.totalorder %s69, %s71
      %p75 = scmp.eq.s32.totalorder %s14, 0
      %p76 = por %p74, %p75
      %p77 = scmp.ne.s32.totalorder %s69, %s71
      %p78 = scmp.eq.s32.totalorder %s19, 1
      %p79 = por %p77, %p78
      %p80 = scmp.ne.s32.totalorder %s71, %s72
      %p81 = scmp.eq.s32.totalorder %s19, 0
      %p82 = por %p80, %p81
      %p83 = scmp.ne.s32.totalorder %s71, %s72
      %p84 = scmp.eq.s32.totalorder %s20, 1
      %p85 = por %p83, %p84
      %p87 = scmp.ne.s32.totalorder %s72, %s86
      %p88 = scmp.eq.s32.totalorder %s20, 0
      %p89 = por %p87, %p88
      %s91 = sadd.s32 %s90, 1
      %p94 = scmp.eq.s32.totalorder %s14, 1
      %p95 = scmp.ne.s32.totalorder %s90, %s92
      %p96 = scmp.eq.s32.totalorder %s14, 0
      %p97 = por %p95, %p96
      %p98 = scmp.ne.s32.totalorder %s90, %s92
      %p99 = scmp.eq.s32.totalorder %s19, 1
      %p100 = por %p98, %p99
      %p101 = scmp.ne.s32.totalorder %s92, %s93
      %p102 = scmp.eq.s32.totalorder %s19, 0
      %p103 = por %p101, %p102
      %p104 = scmp.ne.s32.totalorder %s92, %s93
      %p105 = scmp.eq.s32.totalorder %s20, 1
      %p106 = por %p104, %p105
      %p108 = scmp.ne.s32.totalorder %s93, %s107
      %p109 = scmp.eq.s32.totalorder %s20, 0
      %p110 = por %p108, %p109
      %s112 = sadd.s32 %s111, 1
      %p115 = scmp.eq.s32.totalorder %s14, 1
      %p116 = scmp.ne.s32.totalorder %s111, %s113
      %p117 = scmp.eq.s32.totalorder %s14, 0
      %p118 = por %p116, %p117
      %p119 = scmp.ne.s32.totalorder %s111, %s113
      %p120 = scmp.eq.s32.totalorder %s19, 1
      %p121 = por %p119, %p120
      %p122 = scmp.ne.s32.totalorder %s113, %s114
      %p123 = scmp.eq.s32.totalorder %s19, 0
      %p124 = por %p122, %p123
      %p125 = scmp.ne.s32.totalorder %s113, %s114
      %p126 = scmp.eq.s32.totalorder %s20, 1
      %p127 = por %p125, %p126
      %p129 = scmp.ne.s32.totalorder %s114, %s128
      %p130 = scmp.eq.s32.totalorder %s20, 0
      %p131 = por %p129, %p130
      %s132 = ssub.s32 %s14, %s21
      %p133 = scmp.eq.s32.totalorder %s132, 0
      %s135 = sadd.s32 %s134, 1
      %s136 = scalar_select %p133, %s134, %s135
      %p139 = pneg %p133
      %p140 = scmp.eq.s32.totalorder %s14, 1
      %p141 = por %p139, %p140
      %p142 = scmp.ne.s32.totalorder %s134, %s137
      %p143 = scmp.eq.s32.totalorder %s14, 0
      %p144 = por %p142, %p143
      %p145 = scmp.ne.s32.totalorder %s134, %s137
      %p146 = scmp.eq.s32.totalorder %s19, 1
      %p147 = por %p145, %p146
      %p148 = scmp.ne.s32.totalorder %s137, %s138
      %p149 = scmp.eq.s32.totalorder %s19, 0
      %p150 = por %p148, %p149
      %p151 = scmp.ne.s32.totalorder %s137, %s138
      %p152 = scmp.eq.s32.totalorder %s20, 1
      %p153 = por %p151, %p152
      %p155 = scmp.ne.s32.totalorder %s138, %s154
      %p156 = scmp.eq.s32.totalorder %s20, 0
      %p157 = por %p155, %p156
      %p158 = scmp.le.s32.totalorder 1, %s14
      %p159 = scmp.lt.s32.totalorder %s14, 3
      %p160 = pnand %p158, %p159
      %p161 = pneg %p160
      // Predicated region
      $region9: #{tpu_custom_call.1} parent=5 // pred_check
        _
      $region10: #{tpu_custom_call.1} parent=5 // pred_check_branch
        %163 = sbr.rel (%p160) target = $region12
      $region11: #{tpu_custom_call.1} parent=5 // pred_region
        %s164 = ssub.s32 %s14, 1
        // Predicated region
        $region13: #{tpu_custom_call.1} parent=11 // pred_check
          %p165 = pneg %p61
        $region14: #{tpu_custom_call.1} parent=11 // pred_check_branch
          %167 = sbr.rel (%p165) target = $region16
        $region15: #{tpu_custom_call.1} parent=11 // pred_region
          _
        $region16: #{tpu_custom_call.1} parent=11 // pred_fallthru
          _
        // Predicated region
        $region17: #{tpu_custom_call.1} parent=11 // pred_check
          %p168 = pneg %p82
        $region18: #{tpu_custom_call.1} parent=11 // pred_check_branch
          %170 = sbr.rel (%p168) target = $region20
        $region19: #{tpu_custom_call.1} parent=11 // pred_region
          _
        $region20: #{tpu_custom_call.1} parent=11 // pred_fallthru
          _
        // Predicated region
        $region21: #{tpu_custom_call.1} parent=11 // pred_check
          %p171 = pneg %p103
        $region22: #{tpu_custom_call.1} parent=11 // pred_check_branch
          %173 = sbr.rel (%p171) target = $region24
        $region23: #{tpu_custom_call.1} parent=11 // pred_region
          _
        $region24: #{tpu_custom_call.1} parent=11 // pred_fallthru
          _
        // Predicated region
        $region25: #{tpu_custom_call.1} parent=11 // pred_check
          %p174 = pneg %p124
        $region26: #{tpu_custom_call.1} parent=11 // pred_check_branch
          %176 = sbr.rel (%p174) target = $region28
        $region27: #{tpu_custom_call.1} parent=11 // pred_region
          _
        $region28: #{tpu_custom_call.1} parent=11 // pred_fallthru
          _
      $region12: #{tpu_custom_call.1} parent=5 // pred_fallthru
        _
      %p177 = scmp.lt.s32.totalorder %s14, 2
      // Predicated region
      $region29: #{tpu_custom_call.1} parent=5 // pred_check
        %p178 = pneg %p177
      $region30: #{tpu_custom_call.1} parent=5 // pred_check_branch
        %180 = sbr.rel (%p178) target = $region32
      $region31: #{tpu_custom_call.1} parent=5 // pred_region
        // Predicated region
        $region33: #{tpu_custom_call.1} parent=31 // pred_check
          %p181 = pneg %p34
        $region34: #{tpu_custom_call.1} parent=31 // pred_check_branch
          %183 = sbr.rel (%p181) target = $region36
        $region35: #{tpu_custom_call.1} parent=31 // pred_region
          %p184 = scmp.lt.s32.totalorder %s14, 1
          %s185 = scalar_select %p184, %s14, 1
          %s186 = smul.addr %s185, 8
          %s187 = scalar_lea.vmem %s0, %s186
        $region36: #{tpu_custom_call.1} parent=31 // pred_fallthru
          _
      $region32: #{tpu_custom_call.1} parent=5 // pred_fallthru
        _
      %p188 = scmp.le.s32.totalorder 1, %s14
      %p189 = scmp.lt.s32.totalorder %s14, 3
      %p190 = pnand %p188, %p189
      %p191 = pneg %p190
      // Predicated region
      $region37: #{tpu_custom_call.1} parent=5 // pred_check
        _
      $region38: #{tpu_custom_call.1} parent=5 // pred_check_branch
        %193 = sbr.rel (%p190) target = $region40
      $region39: #{tpu_custom_call.1} parent=5 // pred_region
        %s194 = ssub.s32 %s14, 1
        %p195 = scmp.lt.s32.totalorder %s19, 1
        %s196 = scalar_select %p195, %s19, 1
        %s197 = smul.addr %s196, 8
        %s198 = scalar_lea.vmem %s0, %s197
        %p199 = pneg %p40
        %p200 = pneg %p37
        %p201 = pneg %p61
        %p202 = pneg %p58
        %p203 = pneg %p82
        %p204 = pneg %p79
        %p205 = pneg %p103
        %p206 = pneg %p100
        %p207 = pneg %p124
        %p208 = pneg %p121
        %p209 = pneg %p150
        %p210 = pneg %p147
        %s211 = sand.u32 %s137, 1
        %s212 = scalar_lea.sflag [#allocation3], %s211
        %s213 = sand.u32 %s137, 1
        %s214 = smul.addr %s213, 32
        %s215 = scalar_lea.vmem [#allocation2], %s214
        %p216 = scmp.lt.s32.totalorder %s19, 1
        %s217 = scalar_select %p216, %s19, 1
        %s218 = smul.addr %s217, 8
        %s219 = scalar_lea.vmem %s0, %s218
        %v221 = vld [vmem:[%s219] sm:$0xff]
        %v222 = vpack.c.bf16 %v221, %v221
        %v223 = vld [vmem:[%s1] sm:$0xff]
        %v224 = vld [vmem:[%s1 + $0x8] sm:$0xff]
        %v225 = vld [vmem:[%s1 + $0x10] sm:$0xff]
        %v226 = vld [vmem:[%s1 + $0x18] sm:$0xff]
        %v227 = vld [vmem:[%s1 + $0x20] sm:$0xff]
        %v228 = vld [vmem:[%s1 + $0x28] sm:$0xff]
        %v229 = vld [vmem:[%s1 + $0x30] sm:$0xff]
        %v230 = vld [vmem:[%s1 + $0x38] sm:$0xff]
        %v231 = vld [vmem:[%s1 + $0x40] sm:$0xff]
        %v232 = vld [vmem:[%s1 + $0x48] sm:$0xff]
        %v233 = vld [vmem:[%s1 + $0x50] sm:$0xff]
        %v234 = vld [vmem:[%s1 + $0x58] sm:$0xff]
        %v235 = vld [vmem:[%s1 + $0x60] sm:$0xff]
        %v236 = vld [vmem:[%s1 + $0x68] sm:$0xff]
        %v237 = vld [vmem:[%s1 + $0x70] sm:$0xff]
        %v238 = vld [vmem:[%s1 + $0x78] sm:$0xff]
        %v239 = vld [vmem:[%s2] sm:$0xf]
        %v241 = vlaneseq
        %v242 = vshrl.u32 %v241, 7
        %v243 = vsub.s32 0, %v242
        %v244 = vrot.slane %v239, %v243
        %v245 = vlaneseq
        %v246 = vshrl.u32 %v245, 7
        %v247 = vsub.s32 1, %v246
        %v248 = vrot.slane %v239, %v247
        %v249 = vlaneseq
        %v250 = vshrl.u32 %v249, 7
        %v251 = vsub.s32 2, %v250
        %v252 = vrot.slane %v239, %v251
        %v253 = vlaneseq
        %v254 = vshrl.u32 %v253, 7
        %v255 = vsub.s32 3, %v254
        %v256 = vrot.slane %v239, %v255
        %v277 = vunpack.c.l.b16 %v223
        %v278 = vunpack.c.h.b16 %v223
        %v279 = vunpack.c.l.b16 %v224
        %v280 = vunpack.c.h.b16 %v224
        %v281 = vunpack.c.l.b16 %v225
        %v282 = vunpack.c.h.b16 %v225
        %v283 = vunpack.c.l.b16 %v226
        %v284 = vunpack.c.h.b16 %v226
        %v285 = vunpack.c.l.b16 %v227
        %v286 = vunpack.c.h.b16 %v227
        %v287 = vunpack.c.l.b16 %v228
        %v288 = vunpack.c.h.b16 %v228
        %v289 = vunpack.c.l.b16 %v229
        %v290 = vunpack.c.h.b16 %v229
        %v291 = vunpack.c.l.b16 %v230
        %v292 = vunpack.c.h.b16 %v230
        %v293 = vunpack.c.l.b16 %v231
        %v294 = vunpack.c.h.b16 %v231
        %v295 = vunpack.c.l.b16 %v232
        %v296 = vunpack.c.h.b16 %v232
        %v297 = vunpack.c.l.b16 %v233
        %v298 = vunpack.c.h.b16 %v233
        %v299 = vunpack.c.l.b16 %v234
        %v300 = vunpack.c.h.b16 %v234
        %v301 = vunpack.c.l.b16 %v235
        %v302 = vunpack.c.h.b16 %v235
        %v303 = vunpack.c.l.b16 %v236
        %v304 = vunpack.c.h.b16 %v236
        %v305 = vunpack.c.l.b16 %v237
        %v306 = vunpack.c.h.b16 %v237
        %v307 = vunpack.c.l.b16 %v238
        %v308 = vunpack.c.h.b16 %v238
        %v309 = vpack.c.b16 %v281, %v277
        %v310 = vpack.c.b16 %v282, %v278
        %v311 = vpack.c.b16 %v283, %v279
        %v312 = vpack.c.b16 %v284, %v280
        %v313 = vpack.c.b16 %v289, %v285
        %v314 = vpack.c.b16 %v290, %v286
        %v315 = vpack.c.b16 %v291, %v287
        %v316 = vpack.c.b16 %v292, %v288
        %v317 = vpack.c.b16 %v297, %v293
        %v318 = vpack.c.b16 %v298, %v294
        %v319 = vpack.c.b16 %v299, %v295
        %v320 = vpack.c.b16 %v300, %v296
        %v321 = vpack.c.b16 %v305, %v301
        %v322 = vpack.c.b16 %v306, %v302
        %v323 = vpack.c.b16 %v307, %v303
        %v324 = vpack.c.b16 %v308, %v304
        %vm341 = vcmask 523264
        %v343 = vsel %vm341, %v222, 0
        %345 = vmatprep.subr.bf16.mxu0 %v310
        %346 = vmatpush1.bf16.msra.mxu0 %v309
        %347 = vmatprep.subr.bf16.mxu0 %v314
        %348 = vmatpush1.bf16.msra.mxu0 %v313
        %349 = vmatprep.subr.bf16.mxu0 %v318
        %350 = vmatpush1.bf16.msra.mxu0 %v317
        %351 = vmatprep.subr.bf16.mxu0 %v322
        %352 = vmatpush1.bf16.msra.mxu0 %v321
        %353 = vmatprep.subr.bf16.mxu0 0
        %354 = vmatpush1.bf16.msra.mxu0 0
        %355 = vmatprep.subr.bf16.mxu0 0
        %356 = vmatpush1.bf16.msra.mxu0 0
        %357 = vmatprep.subr.bf16.mxu0 0
        %358 = vmatpush1.bf16.msra.mxu0 0
        %359 = vmatprep.subr.bf16.mxu0 0
        %360 = vmatpush1.bf16.msra.mxu0 0
        %361 = vmatprep.subr.bf16.mxu0 0
        %362 = vmatpush1.bf16.msra.mxu0 0
        %363 = vmatprep.subr.bf16.mxu0 0
        %364 = vmatpush1.bf16.msra.mxu0 0
        %365 = vmatprep.subr.bf16.mxu0 0
        %366 = vmatpush1.bf16.msra.mxu0 0
        %367 = vmatprep.subr.bf16.mxu0 0
        %368 = vmatpush1.bf16.msra.mxu0 0
        %369 = vmatprep.subr.bf16.mxu0 0
        %370 = vmatpush1.bf16.msra.mxu0 0
        %371 = vmatprep.subr.bf16.mxu0 0
        %372 = vmatpush1.bf16.msra.mxu0 0
        %373 = vmatprep.subr.bf16.mxu0 0
        %374 = vmatpush1.bf16.msra.mxu0 0
        %375 = vmatprep.subr.bf16.mxu0 0
        %376 = vmatpush1.bf16.msra.mxu0 0
        %377 = vmatprep.mubr.bf16.mxu0 0
        %378 = vmatmul.mubr.bf16.gmra.mrb[0].mxu0 %v343
        %v379 = vpop.f32.mrb[0].mxu0
        %v380 = vadd.f32 %v244, %v379
        %v381 = vpop.f32.mrb[0].mxu0
        %v382 = vadd.f32 %v248, %v381
        %v383 = vpop.f32.mrb[0].mxu0
        %v384 = vpop.f32.mrb[0].mxu0
        %385 = vdwg.mxu0
        %386 = vmatprep.subr.bf16.mxu0 %v312
        %387 = vmatpush1.bf16.msra.mxu0 %v311
        %388 = vmatprep.subr.bf16.mxu0 %v316
        %389 = vmatpush1.bf16.msra.mxu0 %v315
        %390 = vmatprep.subr.bf16.mxu0 %v320
        %391 = vmatpush1.bf16.msra.mxu0 %v319
        %392 = vmatprep.subr.bf16.mxu0 %v324
        %393 = vmatpush1.bf16.msra.mxu0 %v323
        %394 = vmatprep.subr.bf16.mxu0 0
        %395 = vmatpush1.bf16.msra.mxu0 0
        %396 = vmatprep.subr.bf16.mxu0 0
        %397 = vmatpush1.bf16.msra.mxu0 0
        %398 = vmatprep.subr.bf16.mxu0 0
        %399 = vmatpush1.bf16.msra.mxu0 0
        %400 = vmatprep.subr.bf16.mxu0 0
        %401 = vmatpush1.bf16.msra.mxu0 0
        %402 = vmatprep.subr.bf16.mxu0 0
        %403 = vmatpush1.bf16.msra.mxu0 0
        %404 = vmatprep.subr.bf16.mxu0 0
        %405 = vmatpush1.bf16.msra.mxu0 0
        %406 = vmatprep.subr.bf16.mxu0 0
        %407 = vmatpush1.bf16.msra.mxu0 0
        %408 = vmatprep.subr.bf16.mxu0 0
        %409 = vmatpush1.bf16.msra.mxu0 0
        %410 = vmatprep.subr.bf16.mxu0 0
        %411 = vmatpush1.bf16.msra.mxu0 0
        %412 = vmatprep.subr.bf16.mxu0 0
        %413 = vmatpush1.bf16.msra.mxu0 0
        %414 = vmatprep.subr.bf16.mxu0 0
        %415 = vmatpush1.bf16.msra.mxu0 0
        %416 = vmatprep.subr.bf16.mxu0 0
        %417 = vmatpush1.bf16.msra.mxu0 0
        %418 = vmatprep.mubr.bf16.mxu0 0
        %419 = vmatmul.mubr.bf16.gmra.mrb[0].mxu0 %v343
        %v420 = vpop.f32.mrb[0].mxu0
        %v421 = vadd.f32 %v252, %v420
        %v422 = vpop.f32.mrb[0].mxu0
        %v423 = vadd.f32 %v256, %v422
        %v424 = vpop.f32.mrb[0].mxu0
        %v425 = vpop.f32.mrb[0].mxu0
        %426 = vdwg.mxu0
        %v427 = vpack.c.bf16 %v380, %v380
        %v428 = vpack.c.bf16 %v382, %v382
        %v429 = vpack.c.bf16 %v421, %v421
        %v430 = vpack.c.bf16 %v423, %v423
        %v431 = vld [vmem:[%s3] sm:$0xff]
        %v432 = vld [vmem:[%s3 + $0x8] sm:$0xff]
        %v433 = vld [vmem:[%s3 + $0x10] sm:$0xff]
        %v434 = vld [vmem:[%s3 + $0x18] sm:$0xff]
        %v435 = vld [vmem:[%s3 + $0x20] sm:$0xff]
        %v436 = vld [vmem:[%s3 + $0x28] sm:$0xff]
        %v437 = vld [vmem:[%s3 + $0x30] sm:$0xff]
        %v438 = vld [vmem:[%s3 + $0x38] sm:$0xff]
        %v439 = vld [vmem:[%s3 + $0x40] sm:$0xff]
        %v440 = vld [vmem:[%s3 + $0x48] sm:$0xff]
        %v441 = vld [vmem:[%s3 + $0x50] sm:$0xff]
        %v442 = vld [vmem:[%s3 + $0x58] sm:$0xff]
        %v443 = vld [vmem:[%s3 + $0x60] sm:$0xff]
        %v444 = vld [vmem:[%s3 + $0x68] sm:$0xff]
        %v445 = vld [vmem:[%s3 + $0x70] sm:$0xff]
        %v446 = vld [vmem:[%s3 + $0x78] sm:$0xff]
        %v447 = vld [vmem:[%s3 + $0x80] sm:$0xff]
        %v448 = vld [vmem:[%s3 + $0x88] sm:$0xff]
        %v449 = vld [vmem:[%s3 + $0x90] sm:$0xff]
        %v450 = vld [vmem:[%s3 + $0x98] sm:$0xff]
        %v451 = vld [vmem:[%s3 + $0xa0] sm:$0xff]
        %v452 = vld [vmem:[%s3 + $0xa8] sm:$0xff]
        %v453 = vld [vmem:[%s3 + $0xb0] sm:$0xff]
        %v454 = vld [vmem:[%s3 + $0xb8] sm:$0xff]
        %v455 = vld [vmem:[%s3 + $0xc0] sm:$0xff]
        %v456 = vld [vmem:[%s3 + $0xc8] sm:$0xff]
        %v457 = vld [vmem:[%s3 + $0xd0] sm:$0xff]
        %v458 = vld [vmem:[%s3 + $0xd8] sm:$0xff]
        %v459 = vld [vmem:[%s3 + $0xe0] sm:$0xff]
        %v460 = vld [vmem:[%s3 + $0xe8] sm:$0xff]
        %v461 = vld [vmem:[%s3 + $0xf0] sm:$0xff]
        %v462 = vld [vmem:[%s3 + $0xf8] sm:$0xff]
        %v463 = vld [vmem:[%s3 + $0x100] sm:$0xff]
        %v464 = vld [vmem:[%s3 + $0x108] sm:$0xff]
        %v465 = vld [vmem:[%s3 + $0x110] sm:$0xff]
        %v466 = vld [vmem:[%s3 + $0x118] sm:$0xff]
        %v467 = vld [vmem:[%s3 + $0x120] sm:$0xff]
        %v468 = vld [vmem:[%s3 + $0x128] sm:$0xff]
        %v469 = vld [vmem:[%s3 + $0x130] sm:$0xff]
        %v470 = vld [vmem:[%s3 + $0x138] sm:$0xff]
        %v471 = vld [vmem:[%s3 + $0x140] sm:$0xff]
        %v472 = vld [vmem:[%s3 + $0x148] sm:$0xff]
        %v473 = vld [vmem:[%s3 + $0x150] sm:$0xff]
        %v474 = vld [vmem:[%s3 + $0x158] sm:$0xff]
        %v475 = vld [vmem:[%s3 + $0x160] sm:$0xff]
        %v476 = vld [vmem:[%s3 + $0x168] sm:$0xff]
        %v477 = vld [vmem:[%s3 + $0x170] sm:$0xff]
        %v478 = vld [vmem:[%s3 + $0x178] sm:$0xff]
        %v479 = vld [vmem:[%s3 + $0x180] sm:$0xff]
        %v480 = vld [vmem:[%s3 + $0x188] sm:$0xff]
        %v481 = vld [vmem:[%s3 + $0x190] sm:$0xff]
        %v482 = vld [vmem:[%s3 + $0x198] sm:$0xff]
        %v483 = vld [vmem:[%s3 + $0x1a0] sm:$0xff]
        %v484 = vld [vmem:[%s3 + $0x1a8] sm:$0xff]
        %v485 = vld [vmem:[%s3 + $0x1b0] sm:$0xff]
        %v486 = vld [vmem:[%s3 + $0x1b8] sm:$0xff]
        %v487 = vld [vmem:[%s3 + $0x1c0] sm:$0xff]
        %v488 = vld [vmem:[%s3 + $0x1c8] sm:$0xff]
        %v489 = vld [vmem:[%s3 + $0x1d0] sm:$0xff]
        %v490 = vld [vmem:[%s3 + $0x1d8] sm:$0xff]
        %v491 = vld [vmem:[%s3 + $0x1e0] sm:$0xff]
        %v492 = vld [vmem:[%s3 + $0x1e8] sm:$0xff]
        %v493 = vld [vmem:[%s3 + $0x1f0] sm:$0xff]
        %v494 = vld [vmem:[%s3 + $0x1f8] sm:$0xff]
        %v495 = vld [vmem:[%s3 + $0x200] sm:$0xff]
        %v496 = vld [vmem:[%s3 + $0x208] sm:$0xff]
        %v497 = vld [vmem:[%s3 + $0x210] sm:$0xff]
        %v498 = vld [vmem:[%s3 + $0x218] sm:$0xff]
        %v499 = vld [vmem:[%s3 + $0x220] sm:$0xff]
        %v500 = vld [vmem:[%s3 + $0x228] sm:$0xff]
        %v501 = vld [vmem:[%s3 + $0x230] sm:$0xff]
        %v502 = vld [vmem:[%s3 + $0x238] sm:$0xff]
        %v503 = vld [vmem:[%s3 + $0x240] sm:$0xff]
        %v504 = vld [vmem:[%s3 + $0x248] sm:$0xff]
        %v505 = vld [vmem:[%s3 + $0x250] sm:$0xff]
        %v506 = vld [vmem:[%s3 + $0x258] sm:$0xff]
        %v507 = vld [vmem:[%s3 + $0x260] sm:$0xff]
        %v508 = vld [vmem:[%s3 + $0x268] sm:$0xff]
        %v509 = vld [vmem:[%s3 + $0x270] sm:$0xff]
        %v510 = vld [vmem:[%s3 + $0x278] sm:$0xff]
        %v511 = vld [vmem:[%s3 + $0x280] sm:$0xff]
        %v512 = vld [vmem:[%s3 + $0x288] sm:$0xff]
        %v513 = vld [vmem:[%s3 + $0x290] sm:$0xff]
        %v514 = vld [vmem:[%s3 + $0x298] sm:$0xff]
        %v515 = vld [vmem:[%s3 + $0x2a0] sm:$0xff]
        %v516 = vld [vmem:[%s3 + $0x2a8] sm:$0xff]
        %v517 = vld [vmem:[%s3 + $0x2b0] sm:$0xff]
        %v518 = vld [vmem:[%s3 + $0x2b8] sm:$0xff]
        %v519 = vld [vmem:[%s3 + $0x2c0] sm:$0xff]
        %v520 = vld [vmem:[%s3 + $0x2c8] sm:$0xff]
        %v521 = vld [vmem:[%s3 + $0x2d0] sm:$0xff]
        %v522 = vld [vmem:[%s3 + $0x2d8] sm:$0xff]
        %v523 = vld [vmem:[%s3 + $0x2e0] sm:$0xff]
        %v524 = vld [vmem:[%s3 + $0x2e8] sm:$0xff]
        %v525 = vld [vmem:[%s3 + $0x2f0] sm:$0xff]
        %v526 = vld [vmem:[%s3 + $0x2f8] sm:$0xff]
        %v527 = vld [vmem:[%s3 + $0x300] sm:$0xff]
        %v528 = vld [vmem:[%s3 + $0x308] sm:$0xff]
        %v529 = vld [vmem:[%s3 + $0x310] sm:$0xff]
        %v530 = vld [vmem:[%s3 + $0x318] sm:$0xff]
        %v531 = vld [vmem:[%s3 + $0x320] sm:$0xff]
        %v532 = vld [vmem:[%s3 + $0x328] sm:$0xff]
        %v533 = vld [vmem:[%s3 + $0x330] sm:$0xff]
        %v534 = vld [vmem:[%s3 + $0x338] sm:$0xff]
        %v535 = vld [vmem:[%s3 + $0x340] sm:$0x33]
        %v536 = vld [vmem:[%s3 + $0x348] sm:$0x33]
        %v537 = vld [vmem:[%s4] sm:$0xf]
        %v539 = vlaneseq
        %v540 = vshrl.u32 %v539, 7
        %v541 = vsub.s32 0, %v540
        %v542 = vrot.slane %v537, %v541
        %v543 = vlaneseq
        %v544 = vshrl.u32 %v543, 7
        %v545 = vsub.s32 1, %v544
        %v546 = vrot.slane %v537, %v545
        %v547 = vlaneseq
        %v548 = vshrl.u32 %v547, 7
        %v549 = vsub.s32 2, %v548
        %v550 = vrot.slane %v537, %v549
        %v551 = vlaneseq
        %v552 = vshrl.u32 %v551, 7
        %v553 = vsub.s32 3, %v552
        %v554 = vrot.slane %v537, %v553
        %v665 = vunpack.c.l.b16 %v431
        %v666 = vunpack.c.h.b16 %v431
        %v667 = vunpack.c.l.b16 %v432
        %v668 = vunpack.c.h.b16 %v432
        %v669 = vunpack.c.l.b16 %v433
        %v670 = vunpack.c.h.b16 %v433
        %v671 = vunpack.c.l.b16 %v434
        %v672 = vunpack.c.h.b16 %v434
        %v673 = vunpack.c.l.b16 %v435
        %v674 = vunpack.c.h.b16 %v435
        %v675 = vunpack.c.l.b16 %v436
        %v676 = vunpack.c.h.b16 %v436
        %v677 = vunpack.c.l.b16 %v437
        %v678 = vunpack.c.h.b16 %v437
        %v679 = vunpack.c.l.b16 %v438
        %v680 = vunpack.c.h.b16 %v438
        %v681 = vunpack.c.l.b16 %v439
        %v682 = vunpack.c.h.b16 %v439
        %v683 = vunpack.c.l.b16 %v440
        %v684 = vunpack.c.h.b16 %v440
        %v685 = vunpack.c.l.b16 %v441
        %v686 = vunpack.c.h.b16 %v441
        %v687 = vunpack.c.l.b16 %v442
        %v688 = vunpack.c.h.b16 %v442
        %v689 = vunpack.c.l.b16 %v443
        %v690 = vunpack.c.h.b16 %v443
        %v691 = vunpack.c.l.b16 %v444
        %v692 = vunpack.c.h.b16 %v444
        %v693 = vunpack.c.l.b16 %v445
        %v694 = vunpack.c.h.b16 %v445
        %v695 = vunpack.c.l.b16 %v446
        %v696 = vunpack.c.h.b16 %v446
        %v697 = vunpack.c.l.b16 %v447
        %v698 = vunpack.c.h.b16 %v447
        %v699 = vunpack.c.l.b16 %v448
        %v700 = vunpack.c.h.b16 %v448
        %v701 = vunpack.c.l.b16 %v449
        %v702 = vunpack.c.h.b16 %v449
        %v703 = vunpack.c.l.b16 %v450
        %v704 = vunpack.c.h.b16 %v450
        %v705 = vunpack.c.l.b16 %v451
        %v706 = vunpack.c.h.b16 %v451
        %v707 = vunpack.c.l.b16 %v452
        %v708 = vunpack.c.h.b16 %v452
        %v709 = vunpack.c.l.b16 %v453
        %v710 = vunpack.c.h.b16 %v453
        %v711 = vunpack.c.l.b16 %v454
        %v712 = vunpack.c.h.b16 %v454
        %v713 = vunpack.c.l.b16 %v455
        %v714 = vunpack.c.h.b16 %v455
        %v715 = vunpack.c.l.b16 %v456
        %v716 = vunpack.c.h.b16 %v456
        %v717 = vunpack.c.l.b16 %v457
        %v718 = vunpack.c.h.b16 %v457
        %v719 = vunpack.c.l.b16 %v458
        %v720 = vunpack.c.h.b16 %v458
        %v721 = vunpack.c.l.b16 %v459
        %v722 = vunpack.c.h.b16 %v459
        %v723 = vunpack.c.l.b16 %v460
        %v724 = vunpack.c.h.b16 %v460
        %v725 = vunpack.c.l.b16 %v461
        %v726 = vunpack.c.h.b16 %v461
        %v727 = vunpack.c.l.b16 %v462
        %v728 = vunpack.c.h.b16 %v462
        %v729 = vunpack.c.l.b16 %v463
        %v730 = vunpack.c.h.b16 %v463
        %v731 = vunpack.c.l.b16 %v464
        %v732 = vunpack.c.h.b16 %v464
        %v733 = vunpack.c.l.b16 %v465
        %v734 = vunpack.c.h.b16 %v465
        %v735 = vunpack.c.l.b16 %v466
        %v736 = vunpack.c.h.b16 %v466
        %v737 = vunpack.c.l.b16 %v467
        %v738 = vunpack.c.h.b16 %v467
        %v739 = vunpack.c.l.b16 %v468
        %v740 = vunpack.c.h.b16 %v468
        %v741 = vunpack.c.l.b16 %v469
        %v742 = vunpack.c.h.b16 %v469
        %v743 = vunpack.c.l.b16 %v470
        %v744 = vunpack.c.h.b16 %v470
        %v745 = vunpack.c.l.b16 %v471
        %v746 = vunpack.c.h.b16 %v471
        %v747 = vunpack.c.l.b16 %v472
        %v748 = vunpack.c.h.b16 %v472
        %v749 = vunpack.c.l.b16 %v473
        %v750 = vunpack.c.h.b16 %v473
        %v751 = vunpack.c.l.b16 %v474
        %v752 = vunpack.c.h.b16 %v474
        %v753 = vunpack.c.l.b16 %v475
        %v754 = vunpack.c.h.b16 %v475
        %v755 = vunpack.c.l.b16 %v476
        %v756 = vunpack.c.h.b16 %v476
        %v757 = vunpack.c.l.b16 %v477
        %v758 = vunpack.c.h.b16 %v477
        %v759 = vunpack.c.l.b16 %v478
        %v760 = vunpack.c.h.b16 %v478
        %v761 = vunpack.c.l.b16 %v479
        %v762 = vunpack.c.h.b16 %v479
        %v763 = vunpack.c.l.b16 %v480
        %v764 = vunpack.c.h.b16 %v480
        %v765 = vunpack.c.l.b16 %v481
        %v766 = vunpack.c.h.b16 %v481
        %v767 = vunpack.c.l.b16 %v482
        %v768 = vunpack.c.h.b16 %v482
        %v769 = vunpack.c.l.b16 %v483
        %v770 = vunpack.c.h.b16 %v483
        %v771 = vunpack.c.l.b16 %v484
        %v772 = vunpack.c.h.b16 %v484
        %v773 = vunpack.c.l.b16 %v485
        %v774 = vunpack.c.h.b16 %v485
        %v775 = vunpack.c.l.b16 %v486
        %v776 = vunpack.c.h.b16 %v486
        %v777 = vunpack.c.l.b16 %v487
        %v778 = vunpack.c.h.b16 %v487
        %v779 = vunpack.c.l.b16 %v488
        %v780 = vunpack.c.h.b16 %v488
        %v781 = vunpack.c.l.b16 %v489
        %v782 = vunpack.c.h.b16 %v489
        %v783 = vunpack.c.l.b16 %v490
        %v784 = vunpack.c.h.b16 %v490
        %v785 = vunpack.c.l.b16 %v491
        %v786 = vunpack.c.h.b16 %v491
        %v787 = vunpack.c.l.b16 %v492
        %v788 = vunpack.c.h.b16 %v492
        %v789 = vunpack.c.l.b16 %v493
        %v790 = vunpack.c.h.b16 %v493
        %v791 = vunpack.c.l.b16 %v494
        %v792 = vunpack.c.h.b16 %v494
        %v793 = vunpack.c.l.b16 %v495
        %v794 = vunpack.c.h.b16 %v495
        %v795 = vunpack.c.l.b16 %v496
        %v796 = vunpack.c.h.b16 %v496
        %v797 = vunpack.c.l.b16 %v497
        %v798 = vunpack.c.h.b16 %v497
        %v799 = vunpack.c.l.b16 %v498
        %v800 = vunpack.c.h.b16 %v498
        %v801 = vunpack.c.l.b16 %v499
        %v802 = vunpack.c.h.b16 %v499
        %v803 = vunpack.c.l.b16 %v500
        %v804 = vunpack.c.h.b16 %v500
        %v805 = vunpack.c.l.b16 %v501
        %v806 = vunpack.c.h.b16 %v501
        %v807 = vunpack.c.l.b16 %v502
        %v808 = vunpack.c.h.b16 %v502
        %v809 = vunpack.c.l.b16 %v503
        %v810 = vunpack.c.h.b16 %v503
        %v811 = vunpack.c.l.b16 %v504
        %v812 = vunpack.c.h.b16 %v504
        %v813 = vunpack.c.l.b16 %v505
        %v814 = vunpack.c.h.b16 %v505
        %v815 = vunpack.c.l.b16 %v506
        %v816 = vunpack.c.h.b16 %v506
        %v817 = vunpack.c.l.b16 %v507
        %v818 = vunpack.c.h.b16 %v507
        %v819 = vunpack.c.l.b16 %v508
        %v820 = vunpack.c.h.b16 %v508
        %v821 = vunpack.c.l.b16 %v509
        %v822 = vunpack.c.h.b16 %v509
        %v823 = vunpack.c.l.b16 %v510
        %v824 = vunpack.c.h.b16 %v510
        %v825 = vunpack.c.l.b16 %v511
        %v826 = vunpack.c.h.b16 %v511
        %v827 = vunpack.c.l.b16 %v512
        %v828 = vunpack.c.h.b16 %v512
        %v829 = vunpack.c.l.b16 %v513
        %v830 = vunpack.c.h.b16 %v513
        %v831 = vunpack.c.l.b16 %v514
        %v832 = vunpack.c.h.b16 %v514
        %v833 = vunpack.c.l.b16 %v515
        %v834 = vunpack.c.h.b16 %v515
        %v835 = vunpack.c.l.b16 %v516
        %v836 = vunpack.c.h.b16 %v516
        %v837 = vunpack.c.l.b16 %v517
        %v838 = vunpack.c.h.b16 %v517
        %v839 = vunpack.c.l.b16 %v518
        %v840 = vunpack.c.h.b16 %v518
        %v841 = vunpack.c.l.b16 %v519
        %v842 = vunpack.c.h.b16 %v519
        %v843 = vunpack.c.l.b16 %v520
        %v844 = vunpack.c.h.b16 %v520
        %v845 = vunpack.c.l.b16 %v521
        %v846 = vunpack.c.h.b16 %v521
        %v847 = vunpack.c.l.b16 %v522
        %v848 = vunpack.c.h.b16 %v522
        %v849 = vunpack.c.l.b16 %v523
        %v850 = vunpack.c.h.b16 %v523
        %v851 = vunpack.c.l.b16 %v524
        %v852 = vunpack.c.h.b16 %v524
        %v853 = vunpack.c.l.b16 %v525
        %v854 = vunpack.c.h.b16 %v525
        %v855 = vunpack.c.l.b16 %v526
        %v856 = vunpack.c.h.b16 %v526
        %v857 = vunpack.c.l.b16 %v527
        %v858 = vunpack.c.h.b16 %v527
        %v859 = vunpack.c.l.b16 %v528
        %v860 = vunpack.c.h.b16 %v528
        %v861 = vunpack.c.l.b16 %v529
        %v862 = vunpack.c.h.b16 %v529
        %v863 = vunpack.c.l.b16 %v530
        %v864 = vunpack.c.h.b16 %v530
        %v865 = vunpack.c.l.b16 %v531
        %v866 = vunpack.c.h.b16 %v531
        %v867 = vunpack.c.l.b16 %v532
        %v868 = vunpack.c.h.b16 %v532
        %v869 = vunpack.c.l.b16 %v533
        %v870 = vunpack.c.h.b16 %v533
        %v871 = vunpack.c.l.b16 %v534
        %v872 = vunpack.c.h.b16 %v534
        %v873 = vunpack.c.l.b16 %v535
        %v874 = vunpack.c.h.b16 %v535
        %v875 = vunpack.c.l.b16 %v536
        %v876 = vunpack.c.h.b16 %v536
        %v877 = vpack.c.b16 %v669, %v665
        %v878 = vpack.c.b16 %v670, %v666
        %v879 = vpack.c.b16 %v671, %v667
        %v880 = vpack.c.b16 %v672, %v668
        %v881 = vpack.c.b16 %v677, %v673
        %v882 = vpack.c.b16 %v678, %v674
        %v883 = vpack.c.b16 %v679, %v675
        %v884 = vpack.c.b16 %v680, %v676
        %v885 = vpack.c.b16 %v685, %v681
        %v886 = vpack.c.b16 %v686, %v682
        %v887 = vpack.c.b16 %v687, %v683
        %v888 = vpack.c.b16 %v688, %v684
        %v889 = vpack.c.b16 %v693, %v689
        %v890 = vpack.c.b16 %v694, %v690
        %v891 = vpack.c.b16 %v695, %v691
        %v892 = vpack.c.b16 %v696, %v692
        %v893 = vpack.c.b16 %v701, %v697
        %v894 = vpack.c.b16 %v702, %v698
        %v895 = vpack.c.b16 %v703, %v699
        %v896 = vpack.c.b16 %v704, %v700
        %v897 = vpack.c.b16 %v709, %v705
        %v898 = vpack.c.b16 %v710, %v706
        %v899 = vpack.c.b16 %v711, %v707
        %v900 = vpack.c.b16 %v712, %v708
        %v901 = vpack.c.b16 %v717, %v713
        %v902 = vpack.c.b16 %v718, %v714
        %v903 = vpack.c.b16 %v719, %v715
        %v904 = vpack.c.b16 %v720, %v716
        %v905 = vpack.c.b16 %v725, %v721
        %v906 = vpack.c.b16 %v726, %v722
        %v907 = vpack.c.b16 %v727, %v723
        %v908 = vpack.c.b16 %v728, %v724
        %v909 = vpack.c.b16 %v733, %v729
        %v910 = vpack.c.b16 %v734, %v730
        %v911 = vpack.c.b16 %v735, %v731
        %v912 = vpack.c.b16 %v736, %v732
        %v913 = vpack.c.b16 %v741, %v737
        %v914 = vpack.c.b16 %v742, %v738
        %v915 = vpack.c.b16 %v743, %v739
        %v916 = vpack.c.b16 %v744, %v740
        %v917 = vpack.c.b16 %v749, %v745
        %v918 = vpack.c.b16 %v750, %v746
        %v919 = vpack.c.b16 %v751, %v747
        %v920 = vpack.c.b16 %v752, %v748
        %v921 = vpack.c.b16 %v757, %v753
        %v922 = vpack.c.b16 %v758, %v754
        %v923 = vpack.c.b16 %v759, %v755
        %v924 = vpack.c.b16 %v760, %v756
        %v925 = vpack.c.b16 %v765, %v761
        %v926 = vpack.c.b16 %v766, %v762
        %v927 = vpack.c.b16 %v767, %v763
        %v928 = vpack.c.b16 %v768, %v764
        %v929 = vpack.c.b16 %v773, %v769
        %v930 = vpack.c.b16 %v774, %v770
        %v931 = vpack.c.b16 %v775, %v771
        %v932 = vpack.c.b16 %v776, %v772
        %v933 = vpack.c.b16 %v781, %v777
        %v934 = vpack.c.b16 %v782, %v778
        %v935 = vpack.c.b16 %v783, %v779
        %v936 = vpack.c.b16 %v784, %v780
        %v937 = vpack.c.b16 %v789, %v785
        %v938 = vpack.c.b16 %v790, %v786
        %v939 = vpack.c.b16 %v791, %v787
        %v940 = vpack.c.b16 %v792, %v788
        %v941 = vpack.c.b16 %v797, %v793
        %v942 = vpack.c.b16 %v798, %v794
        %v943 = vpack.c.b16 %v799, %v795
        %v944 = vpack.c.b16 %v800, %v796
        %v945 = vpack.c.b16 %v805, %v801
        %v946 = vpack.c.b16 %v806, %v802
        %v947 = vpack.c.b16 %v807, %v803
        %v948 = vpack.c.b16 %v808, %v804
        %v949 = vpack.c.b16 %v813, %v809
        %v950 = vpack.c.b16 %v814, %v810
        %v951 = vpack.c.b16 %v815, %v811
        %v952 = vpack.c.b16 %v816, %v812
        %v953 = vpack.c.b16 %v821, %v817
        %v954 = vpack.c.b16 %v822, %v818
        %v955 = vpack.c.b16 %v823, %v819
        %v956 = vpack.c.b16 %v824, %v820
        %v957 = vpack.c.b16 %v829, %v825
        %v958 = vpack.c.b16 %v830, %v826
        %v959 = vpack.c.b16 %v831, %v827
        %v960 = vpack.c.b16 %v832, %v828
        %v961 = vpack.c.b16 %v837, %v833
        %v962 = vpack.c.b16 %v838, %v834
        %v963 = vpack.c.b16 %v839, %v835
        %v964 = vpack.c.b16 %v840, %v836
        %v965 = vpack.c.b16 %v845, %v841
        %v966 = vpack.c.b16 %v846, %v842
        %v967 = vpack.c.b16 %v847, %v843
        %v968 = vpack.c.b16 %v848, %v844
        %v969 = vpack.c.b16 %v853, %v849
        %v970 = vpack.c.b16 %v854, %v850
        %v971 = vpack.c.b16 %v855, %v851
        %v972 = vpack.c.b16 %v856, %v852
        %v973 = vpack.c.b16 %v861, %v857
        %v974 = vpack.c.b16 %v862, %v858
        %v975 = vpack.c.b16 %v863, %v859
        %v976 = vpack.c.b16 %v864, %v860
        %v977 = vpack.c.b16 %v869, %v865
        %v978 = vpack.c.b16 %v870, %v866
        %v979 = vpack.c.b16 %v871, %v867
        %v980 = vpack.c.b16 %v872, %v868
        %v981 = vpack.c.b16 %v873, %v873
        %v982 = vpack.c.b16 %v874, %v874
        %v983 = vpack.c.b16 %v875, %v875
        %v984 = vpack.c.b16 %v876, %v876
        %vm1089 = vcmask 293888
        %v1091 = vsel %vm1089, %v430, 0
        %vm1093 = vcmask 1041408
        %v1095 = vsel %vm1093, %v981, 0
        %v1098 = vsel %vm1093, %v982, 0
        %v1101 = vsel %vm1093, %v983, 0
        %v1104 = vsel %vm1093, %v984, 0
        %1106 = vmatprep.subr.bf16.mxu0 %v878
        %1107 = vmatpush1.bf16.msra.mxu0 %v877
        %1108 = vmatprep.subr.bf16.mxu0 %v882
        %1109 = vmatpush1.bf16.msra.mxu0 %v881
        %1110 = vmatprep.subr.bf16.mxu0 %v886
        %1111 = vmatpush1.bf16.msra.mxu0 %v885
        %1112 = vmatprep.subr.bf16.mxu0 %v890
        %1113 = vmatpush1.bf16.msra.mxu0 %v889
        %1114 = vmatprep.subr.bf16.mxu0 %v894
        %1115 = vmatpush1.bf16.msra.mxu0 %v893
        %1116 = vmatprep.subr.bf16.mxu0 %v898
        %1117 = vmatpush1.bf16.msra.mxu0 %v897
        %1118 = vmatprep.subr.bf16.mxu0 %v902
        %1119 = vmatpush1.bf16.msra.mxu0 %v901
        %1120 = vmatprep.subr.bf16.mxu0 %v906
        %1121 = vmatpush1.bf16.msra.mxu0 %v905
        %1122 = vmatprep.subr.bf16.mxu0 %v910
        %1123 = vmatpush1.bf16.msra.mxu0 %v909
        %1124 = vmatprep.subr.bf16.mxu0 %v914
        %1125 = vmatpush1.bf16.msra.mxu0 %v913
        %1126 = vmatprep.subr.bf16.mxu0 %v918
        %1127 = vmatpush1.bf16.msra.mxu0 %v917
        %1128 = vmatprep.subr.bf16.mxu0 %v922
        %1129 = vmatpush1.bf16.msra.mxu0 %v921
        %1130 = vmatprep.subr.bf16.mxu0 %v926
        %1131 = vmatpush1.bf16.msra.mxu0 %v925
        %1132 = vmatprep.subr.bf16.mxu0 %v930
        %1133 = vmatpush1.bf16.msra.mxu0 %v929
        %1134 = vmatprep.subr.bf16.mxu0 %v934
        %1135 = vmatpush1.bf16.msra.mxu0 %v933
        %1136 = vmatprep.subr.bf16.mxu0 %v938
        %1137 = vmatpush1.bf16.msra.mxu0 %v937
        %1138 = vmatprep.mubr.bf16.mxu0 %v428
        %1139 = vmatmul.mubr.bf16.gmra.mrb[0].mxu0 %v427
        %v1140 = vpop.f32.mrb[0].mxu0
        %v1141 = vadd.f32 %v542, %v1140
        %v1142 = vpop.f32.mrb[0].mxu0
        %v1143 = vadd.f32 %v546, %v1142
        %v1144 = vpop.f32.mrb[0].mxu0
        %v1145 = vpop.f32.mrb[0].mxu0
        %1146 = vdwg.mxu0
        %1147 = vmatprep.subr.bf16.mxu0 %v942
        %1148 = vmatpush1.bf16.msra.mxu0 %v941
        %1149 = vmatprep.subr.bf16.mxu0 %v946
        %1150 = vmatpush1.bf16.msra.mxu0 %v945
        %1151 = vmatprep.subr.bf16.mxu0 %v950
        %1152 = vmatpush1.bf16.msra.mxu0 %v949
        %1153 = vmatprep.subr.bf16.mxu0 %v954
        %1154 = vmatpush1.bf16.msra.mxu0 %v953
        %1155 = vmatprep.subr.bf16.mxu0 %v958
        %1156 = vmatpush1.bf16.msra.mxu0 %v957
        %1157 = vmatprep.subr.bf16.mxu0 %v962
        %1158 = vmatpush1.bf16.msra.mxu0 %v961
        %1159 = vmatprep.subr.bf16.mxu0 %v966
        %1160 = vmatpush1.bf16.msra.mxu0 %v965
        %1161 = vmatprep.subr.bf16.mxu0 %v970
        %1162 = vmatpush1.bf16.msra.mxu0 %v969
        %1163 = vmatprep.subr.bf16.mxu0 %v974
        %1164 = vmatpush1.bf16.msra.mxu0 %v973
        %1165 = vmatprep.subr.bf16.mxu0 %v978
        %1166 = vmatpush1.bf16.msra.mxu0 %v977
        %1167 = vmatprep.subr.bf16.mxu0 %v1098
        %1168 = vmatpush1.bf16.msra.mxu0 %v1095
        %1169 = vmatprep.subr.bf16.mxu0 0
        %1170 = vmatpush1.bf16.msra.mxu0 0
        %1171 = vmatprep.subr.bf16.mxu0 0
        %1172 = vmatpush1.bf16.msra.mxu0 0
        %1173 = vmatprep.subr.bf16.mxu0 0
        %1174 = vmatpush1.bf16.msra.mxu0 0
        %1175 = vmatprep.subr.bf16.mxu0 0
        %1176 = vmatpush1.bf16.msra.mxu0 0
        %1177 = vmatprep.subr.bf16.mxu0 0
        %1178 = vmatpush1.bf16.msra.mxu0 0
        %1179 = vmatprep.mubr.bf16.mxu0 %v1091
        %1180 = vmatmul.mubr.bf16.gmra.mrb[0].mxu0 %v429
        %v1181 = vpop.f32.mrb[0].mxu0
        %v1182 = vadd.f32 %v1141, %v1181
        %v1183 = vpop.f32.mrb[0].mxu0
        %v1184 = vadd.f32 %v1143, %v1183
        %v1185 = vpop.f32.mrb[0].mxu0
        %v1186 = vpop.f32.mrb[0].mxu0
        %1187 = vdwg.mxu0
        %1188 = vmatprep.subr.bf16.mxu0 %v880
        %1189 = vmatpush1.bf16.msra.mxu0 %v879
        %1190 = vmatprep.subr.bf16.mxu0 %v884
        %1191 = vmatpush1.bf16.msra.mxu0 %v883
        %1192 = vmatprep.subr.bf16.mxu0 %v888
        %1193 = vmatpush1.bf16.msra.mxu0 %v887
        %1194 = vmatprep.subr.bf16.mxu0 %v892
        %1195 = vmatpush1.bf16.msra.mxu0 %v891
        %1196 = vmatprep.subr.bf16.mxu0 %v896
        %1197 = vmatpush1.bf16.msra.mxu0 %v895
        %1198 = vmatprep.subr.bf16.mxu0 %v900
        %1199 = vmatpush1.bf16.msra.mxu0 %v899
        %1200 = vmatprep.subr.bf16.mxu0 %v904
        %1201 = vmatpush1.bf16.msra.mxu0 %v903
        %1202 = vmatprep.subr.bf16.mxu0 %v908
        %1203 = vmatpush1.bf16.msra.mxu0 %v907
        %1204 = vmatprep.subr.bf16.mxu0 %v912
        %1205 = vmatpush1.bf16.msra.mxu0 %v911
        %1206 = vmatprep.subr.bf16.mxu0 %v916
        %1207 = vmatpush1.bf16.msra.mxu0 %v915
        %1208 = vmatprep.subr.bf16.mxu0 %v920
        %1209 = vmatpush1.bf16.msra.mxu0 %v919
        %1210 = vmatprep.subr.bf16.mxu0 %v924
        %1211 = vmatpush1.bf16.msra.mxu0 %v923
        %1212 = vmatprep.subr.bf16.mxu0 %v928
        %1213 = vmatpush1.bf16.msra.mxu0 %v927
        %1214 = vmatprep.subr.bf16.mxu0 %v932
        %1215 = vmatpush1.bf16.msra.mxu0 %v931
        %1216 = vmatprep.subr.bf16.mxu0 %v936
        %1217 = vmatpush1.bf16.msra.mxu0 %v935
        %1218 = vmatprep.subr.bf16.mxu0 %v940
        %1219 = vmatpush1.bf16.msra.mxu0 %v939
        %1220 = vmatprep.mubr.bf16.mxu0 %v428
        %1221 = vmatmul.mubr.bf16.gmra.mrb[0].mxu0 %v427
        %v1222 = vpop.f32.mrb[0].mxu0
        %v1223 = vadd.f32 %v550, %v1222
        %v1224 = vpop.f32.mrb[0].mxu0
        %v1225 = vadd.f32 %v554, %v1224
        %v1226 = vpop.f32.mrb[0].mxu0
        %v1227 = vpop.f32.mrb[0].mxu0
        %1228 = vdwg.mxu0
        %1229 = vmatprep.subr.bf16.mxu0 %v944
        %1230 = vmatpush1.bf16.msra.mxu0 %v943
        %1231 = vmatprep.subr.bf16.mxu0 %v948
        %1232 = vmatpush1.bf16.msra.mxu0 %v947
        %1233 = vmatprep.subr.bf16.mxu0 %v952
        %1234 = vmatpush1.bf16.msra.mxu0 %v951
        %1235 = vmatprep.subr.bf16.mxu0 %v956
        %1236 = vmatpush1.bf16.msra.mxu0 %v955
        %1237 = vmatprep.subr.bf16.mxu0 %v960
        %1238 = vmatpush1.bf16.msra.mxu0 %v959
        %1239 = vmatprep.subr.bf16.mxu0 %v964
        %1240 = vmatpush1.bf16.msra.mxu0 %v963
        %1241 = vmatprep.subr.bf16.mxu0 %v968
        %1242 = vmatpush1.bf16.msra.mxu0 %v967
        %1243 = vmatprep.subr.bf16.mxu0 %v972
        %1244 = vmatpush1.bf16.msra.mxu0 %v971
        %1245 = vmatprep.subr.bf16.mxu0 %v976
        %1246 = vmatpush1.bf16.msra.mxu0 %v975
        %1247 = vmatprep.subr.bf16.mxu0 %v980
        %1248 = vmatpush1.bf16.msra.mxu0 %v979
        %1249 = vmatprep.subr.bf16.mxu0 %v1104
        %1250 = vmatpush1.bf16.msra.mxu0 %v1101
        %1251 = vmatprep.subr.bf16.mxu0 0
        %1252 = vmatpush1.bf16.msra.mxu0 0
        %1253 = vmatprep.subr.bf16.mxu0 0
        %1254 = vmatpush1.bf16.msra.mxu0 0
        %1255 = vmatprep.subr.bf16.mxu0 0
        %1256 = vmatpush1.bf16.msra.mxu0 0
        %1257 = vmatprep.subr.bf16.mxu0 0
        %1258 = vmatpush1.bf16.msra.mxu0 0
        %1259 = vmatprep.subr.bf16.mxu0 0
        %1260 = vmatpush1.bf16.msra.mxu0 0
        %1261 = vmatprep.mubr.bf16.mxu0 %v1091
        %1262 = vmatmul.mubr.bf16.gmra.mrb[0].mxu0 %v429
        %v1263 = vpop.f32.mrb[0].mxu0
        %v1264 = vadd.f32 %v1223, %v1263
        %v1265 = vpop.f32.mrb[0].mxu0
        %v1266 = vadd.f32 %v1225, %v1265
        %v1267 = vpop.f32.mrb[0].mxu0
        %v1268 = vpop.f32.mrb[0].mxu0
        %1269 = vdwg.mxu0
        %v1270 = vsub.f32 0.0, %v1182
        %v1271 = vsub.f32 0.0, %v1184
        %v1272 = vsub.f32 0.0, %v1264
        %v1273 = vsub.f32 0.0, %v1266
        %v1274 = vmul.f32 %v1270, 1.442695
        %v1275 = vpow.pop %v1274
        %v1276 = vmul.f32 %v1271, 1.442695
        %v1277 = vpow.pop %v1276
        %v1278 = vmul.f32 %v1272, 1.442695
        %v1279 = vpow.pop %v1278
        %v1280 = vmul.f32 %v1273, 1.442695
        %v1281 = vpow.pop %v1280
        %v1282 = vadd.f32 %v1275, 1.0
        %v1283 = vadd.f32 %v1277, 1.0
        %v1284 = vadd.f32 %v1279, 1.0
        %v1285 = vadd.f32 %v1281, 1.0
        %v1286 = vrcp.pop %v1282
        %v1287 = vrcp.pop %v1283
        %v1288 = vrcp.pop %v1284
        %v1289 = vrcp.pop %v1285
        %v1290 = vpack.c.bf16 %v1286, %v1286
        %v1291 = vpack.c.bf16 %v1287, %v1287
        %v1292 = vpack.c.bf16 %v1288, %v1288
        %v1293 = vpack.c.bf16 %v1289, %v1289
        %s1294 = scalar_lea.vmem %s3, 848
        %v1295 = vld [vmem:[%s1294] sm:$0xff]
        %v1296 = vld [vmem:[%s1294 + $0x8] sm:$0xff]
        %v1297 = vld [vmem:[%s1294 + $0x10] sm:$0xff]
        %v1298 = vld [vmem:[%s1294 + $0x18] sm:$0xff]
        %v1299 = vld [vmem:[%s1294 + $0x20] sm:$0xff]
        %v1300 = vld [vmem:[%s1294 + $0x28] sm:$0xff]
        %v1301 = vld [vmem:[%s1294 + $0x30] sm:$0xff]
        %v1302 = vld [vmem:[%s1294 + $0x38] sm:$0xff]
        %v1303 = vld [vmem:[%s1294 + $0x40] sm:$0xff]
        %v1304 = vld [vmem:[%s1294 + $0x48] sm:$0xff]
        %v1305 = vld [vmem:[%s1294 + $0x50] sm:$0xff]
        %v1306 = vld [vmem:[%s1294 + $0x58] sm:$0xff]
        %v1307 = vld [vmem:[%s1294 + $0x60] sm:$0xff]
        %v1308 = vld [vmem:[%s1294 + $0x68] sm:$0xff]
        %v1309 = vld [vmem:[%s1294 + $0x70] sm:$0xff]
        %v1310 = vld [vmem:[%s1294 + $0x78] sm:$0xff]
        %v1311 = vld [vmem:[%s1294 + $0x80] sm:$0xff]
        %v1312 = vld [vmem:[%s1294 + $0x88] sm:$0xff]
        %v1313 = vld [vmem:[%s1294 + $0x90] sm:$0xff]
        %v1314 = vld [vmem:[%s1294 + $0x98] sm:$0xff]
        %v1315 = vld [vmem:[%s1294 + $0xa0] sm:$0xff]
        %v1316 = vld [vmem:[%s1294 + $0xa8] sm:$0xff]
        %v1317 = vld [vmem:[%s1294 + $0xb0] sm:$0xff]
        %v1318 = vld [vmem:[%s1294 + $0xb8] sm:$0xff]
        %v1319 = vld [vmem:[%s1294 + $0xc0] sm:$0xff]
        %v1320 = vld [vmem:[%s1294 + $0xc8] sm:$0xff]
        %v1321 = vld [vmem:[%s1294 + $0xd0] sm:$0xff]
        %v1322 = vld [vmem:[%s1294 + $0xd8] sm:$0xff]
        %v1323 = vld [vmem:[%s1294 + $0xe0] sm:$0xff]
        %v1324 = vld [vmem:[%s1294 + $0xe8] sm:$0xff]
        %v1325 = vld [vmem:[%s1294 + $0xf0] sm:$0xff]
        %v1326 = vld [vmem:[%s1294 + $0xf8] sm:$0xff]
        %v1327 = vld [vmem:[%s1294 + $0x100] sm:$0xff]
        %v1328 = vld [vmem:[%s1294 + $0x108] sm:$0xff]
        %v1329 = vld [vmem:[%s1294 + $0x110] sm:$0xff]
        %v1330 = vld [vmem:[%s1294 + $0x118] sm:$0xff]
        %v1331 = vld [vmem:[%s1294 + $0x120] sm:$0xff]
        %v1332 = vld [vmem:[%s1294 + $0x128] sm:$0xff]
        %v1333 = vld [vmem:[%s1294 + $0x130] sm:$0xff]
        %v1334 = vld [vmem:[%s1294 + $0x138] sm:$0xff]
        %v1335 = vld [vmem:[%s1294 + $0x140] sm:$0xff]
        %v1336 = vld [vmem:[%s1294 + $0x148] sm:$0xff]
        %v1337 = vld [vmem:[%s1294 + $0x150] sm:$0xff]
        %v1338 = vld [vmem:[%s1294 + $0x158] sm:$0xff]
        %v1339 = vld [vmem:[%s1294 + $0x160] sm:$0xff]
        %v1340 = vld [vmem:[%s1294 + $0x168] sm:$0xff]
        %v1341 = vld [vmem:[%s1294 + $0x170] sm:$0xff]
        %v1342 = vld [vmem:[%s1294 + $0x178] sm:$0xff]
        %v1343 = vld [vmem:[%s1294 + $0x180] sm:$0xff]
        %v1344 = vld [vmem:[%s1294 + $0x188] sm:$0xff]
        %v1345 = vld [vmem:[%s1294 + $0x190] sm:$0xff]
        %v1346 = vld [vmem:[%s1294 + $0x198] sm:$0xff]
        %v1347 = vld [vmem:[%s1294 + $0x1a0] sm:$0xff]
        %v1348 = vld [vmem:[%s1294 + $0x1a8] sm:$0xff]
        %v1349 = vld [vmem:[%s1294 + $0x1b0] sm:$0xff]
        %v1350 = vld [vmem:[%s1294 + $0x1b8] sm:$0xff]
        %v1351 = vld [vmem:[%s1294 + $0x1c0] sm:$0xff]
        %v1352 = vld [vmem:[%s1294 + $0x1c8] sm:$0xff]
        %v1353 = vld [vmem:[%s1294 + $0x1d0] sm:$0xff]
        %v1354 = vld [vmem:[%s1294 + $0x1d8] sm:$0xff]
        %v1355 = vld [vmem:[%s1294 + $0x1e0] sm:$0xff]
        %v1356 = vld [vmem:[%s1294 + $0x1e8] sm:$0xff]
        %v1357 = vld [vmem:[%s1294 + $0x1f0] sm:$0xff]
        %v1358 = vld [vmem:[%s1294 + $0x1f8] sm:$0xff]
        %v1359 = vld [vmem:[%s1294 + $0x200] sm:$0xff]
        %v1360 = vld [vmem:[%s1294 + $0x208] sm:$0xff]
        %v1361 = vld [vmem:[%s1294 + $0x210] sm:$0xff]
        %v1362 = vld [vmem:[%s1294 + $0x218] sm:$0xff]
        %v1363 = vld [vmem:[%s1294 + $0x220] sm:$0xff]
        %v1364 = vld [vmem:[%s1294 + $0x228] sm:$0xff]
        %v1365 = vld [vmem:[%s1294 + $0x230] sm:$0xff]
        %v1366 = vld [vmem:[%s1294 + $0x238] sm:$0xff]
        %v1367 = vld [vmem:[%s1294 + $0x240] sm:$0xff]
        %v1368 = vld [vmem:[%s1294 + $0x248] sm:$0xff]
        %v1369 = vld [vmem:[%s1294 + $0x250] sm:$0xff]
        %v1370 = vld [vmem:[%s1294 + $0x258] sm:$0xff]
        %v1371 = vld [vmem:[%s1294 + $0x260] sm:$0xff]
        %v1372 = vld [vmem:[%s1294 + $0x268] sm:$0xff]
        %v1373 = vld [vmem:[%s1294 + $0x270] sm:$0xff]
        %v1374 = vld [vmem:[%s1294 + $0x278] sm:$0xff]
        %v1375 = vld [vmem:[%s1294 + $0x280] sm:$0xff]
        %v1376 = vld [vmem:[%s1294 + $0x288] sm:$0xff]
        %v1377 = vld [vmem:[%s1294 + $0x290] sm:$0xff]
        %v1378 = vld [vmem:[%s1294 + $0x298] sm:$0xff]
        %v1379 = vld [vmem:[%s1294 + $0x2a0] sm:$0xff]
        %v1380 = vld [vmem:[%s1294 + $0x2a8] sm:$0xff]
        %v1381 = vld [vmem:[%s1294 + $0x2b0] sm:$0xff]
        %v1382 = vld [vmem:[%s1294 + $0x2b8] sm:$0xff]
        %v1383 = vld [vmem:[%s1294 + $0x2c0] sm:$0xff]
        %v1384 = vld [vmem:[%s1294 + $0x2c8] sm:$0xff]
        %v1385 = vld [vmem:[%s1294 + $0x2d0] sm:$0xff]
        %v1386 = vld [vmem:[%s1294 + $0x2d8] sm:$0xff]
        %v1387 = vld [vmem:[%s1294 + $0x2e0] sm:$0xff]
        %v1388 = vld [vmem:[%s1294 + $0x2e8] sm:$0xff]
        %v1389 = vld [vmem:[%s1294 + $0x2f0] sm:$0xff]
        %v1390 = vld [vmem:[%s1294 + $0x2f8] sm:$0xff]
        %v1391 = vld [vmem:[%s1294 + $0x300] sm:$0xff]
        %v1392 = vld [vmem:[%s1294 + $0x308] sm:$0xff]
        %v1393 = vld [vmem:[%s1294 + $0x310] sm:$0xff]
        %v1394 = vld [vmem:[%s1294 + $0x318] sm:$0xff]
        %v1395 = vld [vmem:[%s1294 + $0x320] sm:$0xff]
        %v1396 = vld [vmem:[%s1294 + $0x328] sm:$0xff]
        %v1397 = vld [vmem:[%s1294 + $0x330] sm:$0xff]
        %v1398 = vld [vmem:[%s1294 + $0x338] sm:$0xff]
        %v1399 = vld [vmem:[%s1294 + $0x340] sm:$0x33]
        %v1400 = vld [vmem:[%s1294 + $0x348] sm:$0x33]
        %s1401 = scalar_lea.vmem %s4, 4
        %v1402 = vld [vmem:[%s1401] sm:$0xf]
        %v1404 = vlaneseq
        %v1405 = vshrl.u32 %v1404, 7
        %v1406 = vsub.s32 0, %v1405
        %v1407 = vrot.slane %v1402, %v1406
        %v1408 = vlaneseq
        %v1409 = vshrl.u32 %v1408, 7
        %v1410 = vsub.s32 1, %v1409
        %v1411 = vrot.slane %v1402, %v1410
        %v1412 = vlaneseq
        %v1413 = vshrl.u32 %v1412, 7
        %v1414 = vsub.s32 2, %v1413
        %v1415 = vrot.slane %v1402, %v1414
        %v1416 = vlaneseq
        %v1417 = vshrl.u32 %v1416, 7
        %v1418 = vsub.s32 3, %v1417
        %v1419 = vrot.slane %v1402, %v1418
        %v1530 = vunpack.c.l.b16 %v1295
        %v1531 = vunpack.c.h.b16 %v1295
        %v1532 = vunpack.c.l.b16 %v1296
        %v1533 = vunpack.c.h.b16 %v1296
        %v1534 = vunpack.c.l.b16 %v1297
        %v1535 = vunpack.c.h.b16 %v1297
        %v1536 = vunpack.c.l.b16 %v1298
        %v1537 = vunpack.c.h.b16 %v1298
        %v1538 = vunpack.c.l.b16 %v1299
        %v1539 = vunpack.c.h.b16 %v1299
        %v1540 = vunpack.c.l.b16 %v1300
        %v1541 = vunpack.c.h.b16 %v1300
        %v1542 = vunpack.c.l.b16 %v1301
        %v1543 = vunpack.c.h.b16 %v1301
        %v1544 = vunpack.c.l.b16 %v1302
        %v1545 = vunpack.c.h.b16 %v1302
        %v1546 = vunpack.c.l.b16 %v1303
        %v1547 = vunpack.c.h.b16 %v1303
        %v1548 = vunpack.c.l.b16 %v1304
        %v1549 = vunpack.c.h.b16 %v1304
        %v1550 = vunpack.c.l.b16 %v1305
        %v1551 = vunpack.c.h.b16 %v1305
        %v1552 = vunpack.c.l.b16 %v1306
        %v1553 = vunpack.c.h.b16 %v1306
        %v1554 = vunpack.c.l.b16 %v1307
        %v1555 = vunpack.c.h.b16 %v1307
        %v1556 = vunpack.c.l.b16 %v1308
        %v1557 = vunpack.c.h.b16 %v1308
        %v1558 = vunpack.c.l.b16 %v1309
        %v1559 = vunpack.c.h.b16 %v1309
        %v1560 = vunpack.c.l.b16 %v1310
        %v1561 = vunpack.c.h.b16 %v1310
        %v1562 = vunpack.c.l.b16 %v1311
        %v1563 = vunpack.c.h.b16 %v1311
        %v1564 = vunpack.c.l.b16 %v1312
        %v1565 = vunpack.c.h.b16 %v1312
        %v1566 = vunpack.c.l.b16 %v1313
        %v1567 = vunpack.c.h.b16 %v1313
        %v1568 = vunpack.c.l.b16 %v1314
        %v1569 = vunpack.c.h.b16 %v1314
        %v1570 = vunpack.c.l.b16 %v1315
        %v1571 = vunpack.c.h.b16 %v1315
        %v1572 = vunpack.c.l.b16 %v1316
        %v1573 = vunpack.c.h.b16 %v1316
        %v1574 = vunpack.c.l.b16 %v1317
        %v1575 = vunpack.c.h.b16 %v1317
        %v1576 = vunpack.c.l.b16 %v1318
        %v1577 = vunpack.c.h.b16 %v1318
        %v1578 = vunpack.c.l.b16 %v1319
        %v1579 = vunpack.c.h.b16 %v1319
        %v1580 = vunpack.c.l.b16 %v1320
        %v1581 = vunpack.c.h.b16 %v1320
        %v1582 = vunpack.c.l.b16 %v1321
        %v1583 = vunpack.c.h.b16 %v1321
        %v1584 = vunpack.c.l.b16 %v1322
        %v1585 = vunpack.c.h.b16 %v1322
        %v1586 = vunpack.c.l.b16 %v1323
        %v1587 = vunpack.c.h.b16 %v1323
        %v1588 = vunpack.c.l.b16 %v1324
        %v1589 = vunpack.c.h.b16 %v1324
        %v1590 = vunpack.c.l.b16 %v1325
        %v1591 = vunpack.c.h.b16 %v1325
        %v1592 = vunpack.c.l.b16 %v1326
        %v1593 = vunpack.c.h.b16 %v1326
        %v1594 = vunpack.c.l.b16 %v1327
        %v1595 = vunpack.c.h.b16 %v1327
        %v1596 = vunpack.c.l.b16 %v1328
        %v1597 = vunpack.c.h.b16 %v1328
        %v1598 = vunpack.c.l.b16 %v1329
        %v1599 = vunpack.c.h.b16 %v1329
        %v1600 = vunpack.c.l.b16 %v1330
        %v1601 = vunpack.c.h.b16 %v1330
        %v1602 = vunpack.c.l.b16 %v1331
        %v1603 = vunpack.c.h.b16 %v1331
        %v1604 = vunpack.c.l.b16 %v1332
        %v1605 = vunpack.c.h.b16 %v1332
        %v1606 = vunpack.c.l.b16 %v1333
        %v1607 = vunpack.c.h.b16 %v1333
        %v1608 = vunpack.c.l.b16 %v1334
        %v1609 = vunpack.c.h.b16 %v1334
        %v1610 = vunpack.c.l.b16 %v1335
        %v1611 = vunpack.c.h.b16 %v1335
        %v1612 = vunpack.c.l.b16 %v1336
        %v1613 = vunpack.c.h.b16 %v1336
        %v1614 = vunpack.c.l.b16 %v1337
        %v1615 = vunpack.c.h.b16 %v1337
        %v1616 = vunpack.c.l.b16 %v1338
        %v1617 = vunpack.c.h.b16 %v1338
        %v1618 = vunpack.c.l.b16 %v1339
        %v1619 = vunpack.c.h.b16 %v1339
        %v1620 = vunpack.c.l.b16 %v1340
        %v1621 = vunpack.c.h.b16 %v1340
        %v1622 = vunpack.c.l.b16 %v1341
        %v1623 = vunpack.c.h.b16 %v1341
        %v1624 = vunpack.c.l.b16 %v1342
        %v1625 = vunpack.c.h.b16 %v1342
        %v1626 = vunpack.c.l.b16 %v1343
        %v1627 = vunpack.c.h.b16 %v1343
        %v1628 = vunpack.c.l.b16 %v1344
        %v1629 = vunpack.c.h.b16 %v1344
        %v1630 = vunpack.c.l.b16 %v1345
        %v1631 = vunpack.c.h.b16 %v1345
        %v1632 = vunpack.c.l.b16 %v1346
        %v1633 = vunpack.c.h.b16 %v1346
        %v1634 = vunpack.c.l.b16 %v1347
        %v1635 = vunpack.c.h.b16 %v1347
        %v1636 = vunpack.c.l.b16 %v1348
        %v1637 = vunpack.c.h.b16 %v1348
        %v1638 = vunpack.c.l.b16 %v1349
        %v1639 = vunpack.c.h.b16 %v1349
        %v1640 = vunpack.c.l.b16 %v1350
        %v1641 = vunpack.c.h.b16 %v1350
        %v1642 = vunpack.c.l.b16 %v1351
        %v1643 = vunpack.c.h.b16 %v1351
        %v1644 = vunpack.c.l.b16 %v1352
        %v1645 = vunpack.c.h.b16 %v1352
        %v1646 = vunpack.c.l.b16 %v1353
        %v1647 = vunpack.c.h.b16 %v1353
        %v1648 = vunpack.c.l.b16 %v1354
        %v1649 = vunpack.c.h.b16 %v1354
        %v1650 = vunpack.c.l.b16 %v1355
        %v1651 = vunpack.c.h.b16 %v1355
        %v1652 = vunpack.c.l.b16 %v1356
        %v1653 = vunpack.c.h.b16 %v1356
        %v1654 = vunpack.c.l.b16 %v1357
        %v1655 = vunpack.c.h.b16 %v1357
        %v1656 = vunpack.c.l.b16 %v1358
        %v1657 = vunpack.c.h.b16 %v1358
        %v1658 = vunpack.c.l.b16 %v1359
        %v1659 = vunpack.c.h.b16 %v1359
        %v1660 = vunpack.c.l.b16 %v1360
        %v1661 = vunpack.c.h.b16 %v1360
        %v1662 = vunpack.c.l.b16 %v1361
        %v1663 = vunpack.c.h.b16 %v1361
        %v1664 = vunpack.c.l.b16 %v1362
        %v1665 = vunpack.c.h.b16 %v1362
        %v1666 = vunpack.c.l.b16 %v1363
        %v1667 = vunpack.c.h.b16 %v1363
        %v1668 = vunpack.c.l.b16 %v1364
        %v1669 = vunpack.c.h.b16 %v1364
        %v1670 = vunpack.c.l.b16 %v1365
        %v1671 = vunpack.c.h.b16 %v1365
        %v1672 = vunpack.c.l.b16 %v1366
        %v1673 = vunpack.c.h.b16 %v1366
        %v1674 = vunpack.c.l.b16 %v1367
        %v1675 = vunpack.c.h.b16 %v1367
        %v1676 = vunpack.c.l.b16 %v1368
        %v1677 = vunpack.c.h.b16 %v1368
        %v1678 = vunpack.c.l.b16 %v1369
        %v1679 = vunpack.c.h.b16 %v1369
        %v1680 = vunpack.c.l.b16 %v1370
        %v1681 = vunpack.c.h.b16 %v1370
        %v1682 = vunpack.c.l.b16 %v1371
        %v1683 = vunpack.c.h.b16 %v1371
        %v1684 = vunpack.c.l.b16 %v1372
        %v1685 = vunpack.c.h.b16 %v1372
        %v1686 = vunpack.c.l.b16 %v1373
        %v1687 = vunpack.c.h.b16 %v1373
        %v1688 = vunpack.c.l.b16 %v1374
        %v1689 = vunpack.c.h.b16 %v1374
        %v1690 = vunpack.c.l.b16 %v1375
        %v1691 = vunpack.c.h.b16 %v1375
        %v1692 = vunpack.c.l.b16 %v1376
        %v1693 = vunpack.c.h.b16 %v1376
        %v1694 = vunpack.c.l.b16 %v1377
        %v1695 = vunpack.c.h.b16 %v1377
        %v1696 = vunpack.c.l.b16 %v1378
        %v1697 = vunpack.c.h.b16 %v1378
        %v1698 = vunpack.c.l.b16 %v1379
        %v1699 = vunpack.c.h.b16 %v1379
        %v1700 = vunpack.c.l.b16 %v1380
        %v1701 = vunpack.c.h.b16 %v1380
        %v1702 = vunpack.c.l.b16 %v1381
        %v1703 = vunpack.c.h.b16 %v1381
        %v1704 = vunpack.c.l.b16 %v1382
        %v1705 = vunpack.c.h.b16 %v1382
        %v1706 = vunpack.c.l.b16 %v1383
        %v1707 = vunpack.c.h.b16 %v1383
        %v1708 = vunpack.c.l.b16 %v1384
        %v1709 = vunpack.c.h.b16 %v1384
        %v1710 = vunpack.c.l.b16 %v1385
        %v1711 = vunpack.c.h.b16 %v1385
        %v1712 = vunpack.c.l.b16 %v1386
        %v1713 = vunpack.c.h.b16 %v1386
        %v1714 = vunpack.c.l.b16 %v1387
        %v1715 = vunpack.c.h.b16 %v1387
        %v1716 = vunpack.c.l.b16 %v1388
        %v1717 = vunpack.c.h.b16 %v1388
        %v1718 = vunpack.c.l.b16 %v1389
        %v1719 = vunpack.c.h.b16 %v1389
        %v1720 = vunpack.c.l.b16 %v1390
        %v1721 = vunpack.c.h.b16 %v1390
        %v1722 = vunpack.c.l.b16 %v1391
        %v1723 = vunpack.c.h.b16 %v1391
        %v1724 = vunpack.c.l.b16 %v1392
        %v1725 = vunpack.c.h.b16 %v1392
        %v1726 = vunpack.c.l.b16 %v1393
        %v1727 = vunpack.c.h.b16 %v1393
        %v1728 = vunpack.c.l.b16 %v1394
        %v1729 = vunpack.c.h.b16 %v1394
        %v1730 = vunpack.c.l.b16 %v1395
        %v1731 = vunpack.c.h.b16 %v1395
        %v1732 = vunpack.c.l.b16 %v1396
        %v1733 = vunpack.c.h.b16 %v1396
        %v1734 = vunpack.c.l.b16 %v1397
        %v1735 = vunpack.c.h.b16 %v1397
        %v1736 = vunpack.c.l.b16 %v1398
        %v1737 = vunpack.c.h.b16 %v1398
        %v1738 = vunpack.c.l.b16 %v1399
        %v1739 = vunpack.c.h.b16 %v1399
        %v1740 = vunpack.c.l.b16 %v1400
        %v1741 = vunpack.c.h.b16 %v1400
        %v1742 = vpack.c.b16 %v1534, %v1530
        %v1743 = vpack.c.b16 %v1535, %v1531
        %v1744 = vpack.c.b16 %v1536, %v1532
        %v1745 = vpack.c.b16 %v1537, %v1533
        %v1746 = vpack.c.b16 %v1542, %v1538
        %v1747 = vpack.c.b16 %v1543, %v1539
        %v1748 = vpack.c.b16 %v1544, %v1540
        %v1749 = vpack.c.b16 %v1545, %v1541
        %v1750 = vpack.c.b16 %v1550, %v1546
        %v1751 = vpack.c.b16 %v1551, %v1547
        %v1752 = vpack.c.b16 %v1552, %v1548
        %v1753 = vpack.c.b16 %v1553, %v1549
        %v1754 = vpack.c.b16 %v1558, %v1554
        %v1755 = vpack.c.b16 %v1559, %v1555
        %v1756 = vpack.c.b16 %v1560, %v1556
        %v1757 = vpack.c.b16 %v1561, %v1557
        %v1758 = vpack.c.b16 %v1566, %v1562
        %v1759 = vpack.c.b16 %v1567, %v1563
        %v1760 = vpack.c.b16 %v1568, %v1564
        %v1761 = vpack.c.b16 %v1569, %v1565
        %v1762 = vpack.c.b16 %v1574, %v1570
        %v1763 = vpack.c.b16 %v1575, %v1571
        %v1764 = vpack.c.b16 %v1576, %v1572
        %v1765 = vpack.c.b16 %v1577, %v1573
        %v1766 = vpack.c.b16 %v1582, %v1578
        %v1767 = vpack.c.b16 %v1583, %v1579
        %v1768 = vpack.c.b16 %v1584, %v1580
        %v1769 = vpack.c.b16 %v1585, %v1581
        %v1770 = vpack.c.b16 %v1590, %v1586
        %v1771 = vpack.c.b16 %v1591, %v1587
        %v1772 = vpack.c.b16 %v1592, %v1588
        %v1773 = vpack.c.b16 %v1593, %v1589
        %v1774 = vpack.c.b16 %v1598, %v1594
        %v1775 = vpack.c.b16 %v1599, %v1595
        %v1776 = vpack.c.b16 %v1600, %v1596
        %v1777 = vpack.c.b16 %v1601, %v1597
        %v1778 = vpack.c.b16 %v1606, %v1602
        %v1779 = vpack.c.b16 %v1607, %v1603
        %v1780 = vpack.c.b16 %v1608, %v1604
        %v1781 = vpack.c.b16 %v1609, %v1605
        %v1782 = vpack.c.b16 %v1614, %v1610
        %v1783 = vpack.c.b16 %v1615, %v1611
        %v1784 = vpack.c.b16 %v1616, %v1612
        %v1785 = vpack.c.b16 %v1617, %v1613
        %v1786 = vpack.c.b16 %v1622, %v1618
        %v1787 = vpack.c.b16 %v1623, %v1619
        %v1788 = vpack.c.b16 %v1624, %v1620
        %v1789 = vpack.c.b16 %v1625, %v1621
        %v1790 = vpack.c.b16 %v1630, %v1626
        %v1791 = vpack.c.b16 %v1631, %v1627
        %v1792 = vpack.c.b16 %v1632, %v1628
        %v1793 = vpack.c.b16 %v1633, %v1629
        %v1794 = vpack.c.b16 %v1638, %v1634
        %v1795 = vpack.c.b16 %v1639, %v1635
        %v1796 = vpack.c.b16 %v1640, %v1636
        %v1797 = vpack.c.b16 %v1641, %v1637
        %v1798 = vpack.c.b16 %v1646, %v1642
        %v1799 = vpack.c.b16 %v1647, %v1643
        %v1800 = vpack.c.b16 %v1648, %v1644
        %v1801 = vpack.c.b16 %v1649, %v1645
        %v1802 = vpack.c.b16 %v1654, %v1650
        %v1803 = vpack.c.b16 %v1655, %v1651
        %v1804 = vpack.c.b16 %v1656, %v1652
        %v1805 = vpack.c.b16 %v1657, %v1653
        %v1806 = vpack.c.b16 %v1662, %v1658
        %v1807 = vpack.c.b16 %v1663, %v1659
        %v1808 = vpack.c.b16 %v1664, %v1660
        %v1809 = vpack.c.b16 %v1665, %v1661
        %v1810 = vpack.c.b16 %v1670, %v1666
        %v1811 = vpack.c.b16 %v1671, %v1667
        %v1812 = vpack.c.b16 %v1672, %v1668
        %v1813 = vpack.c.b16 %v1673, %v1669
        %v1814 = vpack.c.b16 %v1678, %v1674
        %v1815 = vpack.c.b16 %v1679, %v1675
        %v1816 = vpack.c.b16 %v1680, %v1676
        %v1817 = vpack.c.b16 %v1681, %v1677
        %v1818 = vpack.c.b16 %v1686, %v1682
        %v1819 = vpack.c.b16 %v1687, %v1683
        %v1820 = vpack.c.b16 %v1688, %v1684
        %v1821 = vpack.c.b16 %v1689, %v1685
        %v1822 = vpack.c.b16 %v1694, %v1690
        %v1823 = vpack.c.b16 %v1695, %v1691
        %v1824 = vpack.c.b16 %v1696, %v1692
        %v1825 = vpack.c.b16 %v1697, %v1693
        %v1826 = vpack.c.b16 %v1702, %v1698
        %v1827 = vpack.c.b16 %v1703, %v1699
        %v1828 = vpack.c.b16 %v1704, %v1700
        %v1829 = vpack.c.b16 %v1705, %v1701
        %v1830 = vpack.c.b16 %v1710, %v1706
        %v1831 = vpack.c.b16 %v1711, %v1707
        %v1832 = vpack.c.b16 %v1712, %v1708
        %v1833 = vpack.c.b16 %v1713, %v1709
        %v1834 = vpack.c.b16 %v1718, %v1714
        %v1835 = vpack.c.b16 %v1719, %v1715
        %v1836 = vpack.c.b16 %v1720, %v1716
        %v1837 = vpack.c.b16 %v1721, %v1717
        %v1838 = vpack.c.b16 %v1726, %v1722
        %v1839 = vpack.c.b16 %v1727, %v1723
        %v1840 = vpack.c.b16 %v1728, %v1724
        %v1841 = vpack.c.b16 %v1729, %v1725
        %v1842 = vpack.c.b16 %v1734, %v1730
        %v1843 = vpack.c.b16 %v1735, %v1731
        %v1844 = vpack.c.b16 %v1736, %v1732
        %v1845 = vpack.c.b16 %v1737, %v1733
        %v1846 = vpack.c.b16 %v1738, %v1738
        %v1847 = vpack.c.b16 %v1739, %v1739
        %v1848 = vpack.c.b16 %v1740, %v1740
        %v1849 = vpack.c.b16 %v1741, %v1741
        %v1955 = vsel %vm1089, %v1293, 0
        %v1958 = vsel %vm1093, %v1846, 0
        %v1961 = vsel %vm1093, %v1847, 0
        %v1964 = vsel %vm1093, %v1848, 0
        %v1967 = vsel %vm1093, %v1849, 0
        %1969 = vmatprep.subr.bf16.mxu0 %v1743
        %1970 = vmatpush1.bf16.msra.mxu0 %v1742
        %1971 = vmatprep.subr.bf16.mxu0 %v1747
        %1972 = vmatpush1.bf16.msra.mxu0 %v1746
        %1973 = vmatprep.subr.bf16.mxu0 %v1751
        %1974 = vmatpush1.bf16.msra.mxu0 %v1750
        %1975 = vmatprep.subr.bf16.mxu0 %v1755
        %1976 = vmatpush1.bf16.msra.mxu0 %v1754
        %1977 = vmatprep.subr.bf16.mxu0 %v1759
        %1978 = vmatpush1.bf16.msra.mxu0 %v1758
        %1979 = vmatprep.subr.bf16.mxu0 %v1763
        %1980 = vmatpush1.bf16.msra.mxu0 %v1762
        %1981 = vmatprep.subr.bf16.mxu0 %v1767
        %1982 = vmatpush1.bf16.msra.mxu0 %v1766
        %1983 = vmatprep.subr.bf16.mxu0 %v1771
        %1984 = vmatpush1.bf16.msra.mxu0 %v1770
        %1985 = vmatprep.subr.bf16.mxu0 %v1775
        %1986 = vmatpush1.bf16.msra.mxu0 %v1774
        %1987 = vmatprep.subr.bf16.mxu0 %v1779
        %1988 = vmatpush1.bf16.msra.mxu0 %v1778
        %1989 = vmatprep.subr.bf16.mxu0 %v1783
        %1990 = vmatpush1.bf16.msra.mxu0 %v1782
        %1991 = vmatprep.subr.bf16.mxu0 %v1787
        %1992 = vmatpush1.bf16.msra.mxu0 %v1786
        %1993 = vmatprep.subr.bf16.mxu0 %v1791
        %1994 = vmatpush1.bf16.msra.mxu0 %v1790
        %1995 = vmatprep.subr.bf16.mxu0 %v1795
        %1996 = vmatpush1.bf16.msra.mxu0 %v1794
        %1997 = vmatprep.subr.bf16.mxu0 %v1799
        %1998 = vmatpush1.bf16.msra.mxu0 %v1798
        %1999 = vmatprep.subr.bf16.mxu0 %v1803
        %2000 = vmatpush1.bf16.msra.mxu0 %v1802
        %2001 = vmatprep.mubr.bf16.mxu0 %v1291
        %2002 = vmatmul.mubr.bf16.gmra.mrb[0].mxu0 %v1290
        %v2003 = vpop.f32.mrb[0].mxu0
        %v2004 = vadd.f32 %v1407, %v2003
        %v2005 = vpop.f32.mrb[0].mxu0
        %v2006 = vadd.f32 %v1411, %v2005
        %v2007 = vpop.f32.mrb[0].mxu0
        %v2008 = vpop.f32.mrb[0].mxu0
        %2009 = vdwg.mxu0
        %2010 = vmatprep.subr.bf16.mxu0 %v1807
        %2011 = vmatpush1.bf16.msra.mxu0 %v1806
        %2012 = vmatprep.subr.bf16.mxu0 %v1811
        %2013 = vmatpush1.bf16.msra.mxu0 %v1810
        %2014 = vmatprep.subr.bf16.mxu0 %v1815
        %2015 = vmatpush1.bf16.msra.mxu0 %v1814
        %2016 = vmatprep.subr.bf16.mxu0 %v1819
        %2017 = vmatpush1.bf16.msra.mxu0 %v1818
        %2018 = vmatprep.subr.bf16.mxu0 %v1823
        %2019 = vmatpush1.bf16.msra.mxu0 %v1822
        %2020 = vmatprep.subr.bf16.mxu0 %v1827
        %2021 = vmatpush1.bf16.msra.mxu0 %v1826
        %2022 = vmatprep.subr.bf16.mxu0 %v1831
        %2023 = vmatpush1.bf16.msra.mxu0 %v1830
        %2024 = vmatprep.subr.bf16.mxu0 %v1835
        %2025 = vmatpush1.bf16.msra.mxu0 %v1834
        %2026 = vmatprep.subr.bf16.mxu0 %v1839
        %2027 = vmatpush1.bf16.msra.mxu0 %v1838
        %2028 = vmatprep.subr.bf16.mxu0 %v1843
        %2029 = vmatpush1.bf16.msra.mxu0 %v1842
        %2030 = vmatprep.subr.bf16.mxu0 %v1961
        %2031 = vmatpush1.bf16.msra.mxu0 %v1958
        %2032 = vmatprep.subr.bf16.mxu0 0
        %2033 = vmatpush1.bf16.msra.mxu0 0
        %2034 = vmatprep.subr.bf16.mxu0 0
        %2035 = vmatpush1.bf16.msra.mxu0 0
        %2036 = vmatprep.subr.bf16.mxu0 0
        %2037 = vmatpush1.bf16.msra.mxu0 0
        %2038 = vmatprep.subr.bf16.mxu0 0
        %2039 = vmatpush1.bf16.msra.mxu0 0
        %2040 = vmatprep.subr.bf16.mxu0 0
        %2041 = vmatpush1.bf16.msra.mxu0 0
        %2042 = vmatprep.mubr.bf16.mxu0 %v1955
        %2043 = vmatmul.mubr.bf16.gmra.mrb[0].mxu0 %v1292
        %v2044 = vpop.f32.mrb[0].mxu0
        %v2045 = vadd.f32 %v2004, %v2044
        %v2046 = vpop.f32.mrb[0].mxu0
        %v2047 = vadd.f32 %v2006, %v2046
        %v2048 = vpop.f32.mrb[0].mxu0
        %v2049 = vpop.f32.mrb[0].mxu0
        %2050 = vdwg.mxu0
        %2051 = vmatprep.subr.bf16.mxu0 %v1745
        %2052 = vmatpush1.bf16.msra.mxu0 %v1744
        %2053 = vmatprep.subr.bf16.mxu0 %v1749
        %2054 = vmatpush1.bf16.msra.mxu0 %v1748
        %2055 = vmatprep.subr.bf16.mxu0 %v1753
        %2056 = vmatpush1.bf16.msra.mxu0 %v1752
        %2057 = vmatprep.subr.bf16.mxu0 %v1757
        %2058 = vmatpush1.bf16.msra.mxu0 %v1756
        %2059 = vmatprep.subr.bf16.mxu0 %v1761
        %2060 = vmatpush1.bf16.msra.mxu0 %v1760
        %2061 = vmatprep.subr.bf16.mxu0 %v1765
        %2062 = vmatpush1.bf16.msra.mxu0 %v1764
        %2063 = vmatprep.subr.bf16.mxu0 %v1769
        %2064 = vmatpush1.bf16.msra.mxu0 %v1768
        %2065 = vmatprep.subr.bf16.mxu0 %v1773
        %2066 = vmatpush1.bf16.msra.mxu0 %v1772
        %2067 = vmatprep.subr.bf16.mxu0 %v1777
        %2068 = vmatpush1.bf16.msra.mxu0 %v1776
        %2069 = vmatprep.subr.bf16.mxu0 %v1781
        %2070 = vmatpush1.bf16.msra.mxu0 %v1780
        %2071 = vmatprep.subr.bf16.mxu0 %v1785
        %2072 = vmatpush1.bf16.msra.mxu0 %v1784
        %2073 = vmatprep.subr.bf16.mxu0 %v1789
        %2074 = vmatpush1.bf16.msra.mxu0 %v1788
        %2075 = vmatprep.subr.bf16.mxu0 %v1793
        %2076 = vmatpush1.bf16.msra.mxu0 %v1792
        %2077 = vmatprep.subr.bf16.mxu0 %v1797
        %2078 = vmatpush1.bf16.msra.mxu0 %v1796
        %2079 = vmatprep.subr.bf16.mxu0 %v1801
        %2080 = vmatpush1.bf16.msra.mxu0 %v1800
        %2081 = vmatprep.subr.bf16.mxu0 %v1805
        %2082 = vmatpush1.bf16.msra.mxu0 %v1804
        %2083 = vmatprep.mubr.bf16.mxu0 %v1291
        %2084 = vmatmul.mubr.bf16.gmra.mrb[0].mxu0 %v1290
        %v2085 = vpop.f32.mrb[0].mxu0
        %v2086 = vadd.f32 %v1415, %v2085
        %v2087 = vpop.f32.mrb[0].mxu0
        %v2088 = vadd.f32 %v1419, %v2087
        %v2089 = vpop.f32.mrb[0].mxu0
        %v2090 = vpop.f32.mrb[0].mxu0
        %2091 = vdwg.mxu0
        %2092 = vmatprep.subr.bf16.mxu0 %v1809
        %2093 = vmatpush1.bf16.msra.mxu0 %v1808
        %2094 = vmatprep.subr.bf16.mxu0 %v1813
        %2095 = vmatpush1.bf16.msra.mxu0 %v1812
        %2096 = vmatprep.subr.bf16.mxu0 %v1817
        %2097 = vmatpush1.bf16.msra.mxu0 %v1816
        %2098 = vmatprep.subr.bf16.mxu0 %v1821
        %2099 = vmatpush1.bf16.msra.mxu0 %v1820
        %2100 = vmatprep.subr.bf16.mxu0 %v1825
        %2101 = vmatpush1.bf16.msra.mxu0 %v1824
        %2102 = vmatprep.subr.bf16.mxu0 %v1829
        %2103 = vmatpush1.bf16.msra.mxu0 %v1828
        %2104 = vmatprep.subr.bf16.mxu0 %v1833
        %2105 = vmatpush1.bf16.msra.mxu0 %v1832
        %2106 = vmatprep.subr.bf16.mxu0 %v1837
        %2107 = vmatpush1.bf16.msra.mxu0 %v1836
        %2108 = vmatprep.subr.bf16.mxu0 %v1841
        %2109 = vmatpush1.bf16.msra.mxu0 %v1840
        %2110 = vmatprep.subr.bf16.mxu0 %v1845
        %2111 = vmatpush1.bf16.msra.mxu0 %v1844
        %2112 = vmatprep.subr.bf16.mxu0 %v1967
        %2113 = vmatpush1.bf16.msra.mxu0 %v1964
        %2114 = vmatprep.subr.bf16.mxu0 0
        %2115 = vmatpush1.bf16.msra.mxu0 0
        %2116 = vmatprep.subr.bf16.mxu0 0
        %2117 = vmatpush1.bf16.msra.mxu0 0
        %2118 = vmatprep.subr.bf16.mxu0 0
        %2119 = vmatpush1.bf16.msra.mxu0 0
        %2120 = vmatprep.subr.bf16.mxu0 0
        %2121 = vmatpush1.bf16.msra.mxu0 0
        %2122 = vmatprep.subr.bf16.mxu0 0
        %2123 = vmatpush1.bf16.msra.mxu0 0
        %2124 = vmatprep.mubr.bf16.mxu0 %v1955
        %2125 = vmatmul.mubr.bf16.gmra.mrb[0].mxu0 %v1292
        %v2126 = vpop.f32.mrb[0].mxu0
        %v2127 = vadd.f32 %v2086, %v2126
        %v2128 = vpop.f32.mrb[0].mxu0
        %v2129 = vadd.f32 %v2088, %v2128
        %v2130 = vpop.f32.mrb[0].mxu0
        %v2131 = vpop.f32.mrb[0].mxu0
        %2132 = vdwg.mxu0
        %v2133 = vsub.f32 0.0, %v2045
        %v2134 = vsub.f32 0.0, %v2047
        %v2135 = vsub.f32 0.0, %v2127
        %v2136 = vsub.f32 0.0, %v2129
        %v2137 = vmul.f32 %v2133, 1.442695
        %v2138 = vpow.pop %v2137
        %v2139 = vmul.f32 %v2134, 1.442695
        %v2140 = vpow.pop %v2139
        %v2141 = vmul.f32 %v2135, 1.442695
        %v2142 = vpow.pop %v2141
        %v2143 = vmul.f32 %v2136, 1.442695
        %v2144 = vpow.pop %v2143
        %v2145 = vadd.f32 %v2138, 1.0
        %v2146 = vadd.f32 %v2140, 1.0
        %v2147 = vadd.f32 %v2142, 1.0
        %v2148 = vadd.f32 %v2144, 1.0
        %v2149 = vrcp.pop %v2145
        %v2150 = vrcp.pop %v2146
        %v2151 = vrcp.pop %v2147
        %v2152 = vrcp.pop %v2148
        %v2153 = vpack.c.bf16 %v2149, %v2149
        %v2154 = vpack.c.bf16 %v2150, %v2150
        %v2155 = vpack.c.bf16 %v2151, %v2151
        %v2156 = vpack.c.bf16 %v2152, %v2152
        %s2157 = scalar_lea.vmem %s3, 1696
        %v2158 = vld [vmem:[%s2157] sm:$0xff]
        %v2159 = vld [vmem:[%s2157 + $0x8] sm:$0xff]
        %v2160 = vld [vmem:[%s2157 + $0x10] sm:$0xff]
        %v2161 = vld [vmem:[%s2157 + $0x18] sm:$0xff]
        %v2162 = vld [vmem:[%s2157 + $0x20] sm:$0xff]
        %v2163 = vld [vmem:[%s2157 + $0x28] sm:$0xff]
        %v2164 = vld [vmem:[%s2157 + $0x30] sm:$0xff]
        %v2165 = vld [vmem:[%s2157 + $0x38] sm:$0xff]
        %v2166 = vld [vmem:[%s2157 + $0x40] sm:$0xff]
        %v2167 = vld [vmem:[%s2157 + $0x48] sm:$0xff]
        %v2168 = vld [vmem:[%s2157 + $0x50] sm:$0xff]
        %v2169 = vld [vmem:[%s2157 + $0x58] sm:$0xff]
        %v2170 = vld [vmem:[%s2157 + $0x60] sm:$0xff]
        %v2171 = vld [vmem:[%s2157 + $0x68] sm:$0xff]
        %v2172 = vld [vmem:[%s2157 + $0x70] sm:$0xff]
        %v2173 = vld [vmem:[%s2157 + $0x78] sm:$0xff]
        %v2174 = vld [vmem:[%s2157 + $0x80] sm:$0xff]
        %v2175 = vld [vmem:[%s2157 + $0x88] sm:$0xff]
        %v2176 = vld [vmem:[%s2157 + $0x90] sm:$0xff]
        %v2177 = vld [vmem:[%s2157 + $0x98] sm:$0xff]
        %v2178 = vld [vmem:[%s2157 + $0xa0] sm:$0xff]
        %v2179 = vld [vmem:[%s2157 + $0xa8] sm:$0xff]
        %v2180 = vld [vmem:[%s2157 + $0xb0] sm:$0xff]
        %v2181 = vld [vmem:[%s2157 + $0xb8] sm:$0xff]
        %v2182 = vld [vmem:[%s2157 + $0xc0] sm:$0xff]
        %v2183 = vld [vmem:[%s2157 + $0xc8] sm:$0xff]
        %v2184 = vld [vmem:[%s2157 + $0xd0] sm:$0xff]
        %v2185 = vld [vmem:[%s2157 + $0xd8] sm:$0xff]
        %v2186 = vld [vmem:[%s2157 + $0xe0] sm:$0xff]
        %v2187 = vld [vmem:[%s2157 + $0xe8] sm:$0xff]
        %v2188 = vld [vmem:[%s2157 + $0xf0] sm:$0xff]
        %v2189 = vld [vmem:[%s2157 + $0xf8] sm:$0xff]
        %v2190 = vld [vmem:[%s2157 + $0x100] sm:$0xff]
        %v2191 = vld [vmem:[%s2157 + $0x108] sm:$0xff]
        %v2192 = vld [vmem:[%s2157 + $0x110] sm:$0xff]
        %v2193 = vld [vmem:[%s2157 + $0x118] sm:$0xff]
        %v2194 = vld [vmem:[%s2157 + $0x120] sm:$0xff]
        %v2195 = vld [vmem:[%s2157 + $0x128] sm:$0xff]
        %v2196 = vld [vmem:[%s2157 + $0x130] sm:$0xff]
        %v2197 = vld [vmem:[%s2157 + $0x138] sm:$0xff]
        %v2198 = vld [vmem:[%s2157 + $0x140] sm:$0xff]
        %v2199 = vld [vmem:[%s2157 + $0x148] sm:$0xff]
        %v2200 = vld [vmem:[%s2157 + $0x150] sm:$0xff]
        %v2201 = vld [vmem:[%s2157 + $0x158] sm:$0xff]
        %v2202 = vld [vmem:[%s2157 + $0x160] sm:$0xff]
        %v2203 = vld [vmem:[%s2157 + $0x168] sm:$0xff]
        %v2204 = vld [vmem:[%s2157 + $0x170] sm:$0xff]
        %v2205 = vld [vmem:[%s2157 + $0x178] sm:$0xff]
        %v2206 = vld [vmem:[%s2157 + $0x180] sm:$0xff]
        %v2207 = vld [vmem:[%s2157 + $0x188] sm:$0xff]
        %v2208 = vld [vmem:[%s2157 + $0x190] sm:$0xff]
        %v2209 = vld [vmem:[%s2157 + $0x198] sm:$0xff]
        %v2210 = vld [vmem:[%s2157 + $0x1a0] sm:$0xff]
        %v2211 = vld [vmem:[%s2157 + $0x1a8] sm:$0xff]
        %v2212 = vld [vmem:[%s2157 + $0x1b0] sm:$0xff]
        %v2213 = vld [vmem:[%s2157 + $0x1b8] sm:$0xff]
        %v2214 = vld [vmem:[%s2157 + $0x1c0] sm:$0xff]
        %v2215 = vld [vmem:[%s2157 + $0x1c8] sm:$0xff]
        %v2216 = vld [vmem:[%s2157 + $0x1d0] sm:$0xff]
        %v2217 = vld [vmem:[%s2157 + $0x1d8] sm:$0xff]
        %v2218 = vld [vmem:[%s2157 + $0x1e0] sm:$0xff]
        %v2219 = vld [vmem:[%s2157 + $0x1e8] sm:$0xff]
        %v2220 = vld [vmem:[%s2157 + $0x1f0] sm:$0xff]
        %v2221 = vld [vmem:[%s2157 + $0x1f8] sm:$0xff]
        %v2222 = vld [vmem:[%s2157 + $0x200] sm:$0xff]
        %v2223 = vld [vmem:[%s2157 + $0x208] sm:$0xff]
        %v2224 = vld [vmem:[%s2157 + $0x210] sm:$0xff]
        %v2225 = vld [vmem:[%s2157 + $0x218] sm:$0xff]
        %v2226 = vld [vmem:[%s2157 + $0x220] sm:$0xff]
        %v2227 = vld [vmem:[%s2157 + $0x228] sm:$0xff]
        %v2228 = vld [vmem:[%s2157 + $0x230] sm:$0xff]
        %v2229 = vld [vmem:[%s2157 + $0x238] sm:$0xff]
        %v2230 = vld [vmem:[%s2157 + $0x240] sm:$0xff]
        %v2231 = vld [vmem:[%s2157 + $0x248] sm:$0xff]
        %v2232 = vld [vmem:[%s2157 + $0x250] sm:$0xff]
        %v2233 = vld [vmem:[%s2157 + $0x258] sm:$0xff]
        %v2234 = vld [vmem:[%s2157 + $0x260] sm:$0xff]
        %v2235 = vld [vmem:[%s2157 + $0x268] sm:$0xff]
        %v2236 = vld [vmem:[%s2157 + $0x270] sm:$0xff]
        %v2237 = vld [vmem:[%s2157 + $0x278] sm:$0xff]
        %v2238 = vld [vmem:[%s2157 + $0x280] sm:$0xff]
        %v2239 = vld [vmem:[%s2157 + $0x288] sm:$0xff]
        %v2240 = vld [vmem:[%s2157 + $0x290] sm:$0xff]
        %v2241 = vld [vmem:[%s2157 + $0x298] sm:$0xff]
        %v2242 = vld [vmem:[%s2157 + $0x2a0] sm:$0xff]
        %v2243 = vld [vmem:[%s2157 + $0x2a8] sm:$0xff]
        %v2244 = vld [vmem:[%s2157 + $0x2b0] sm:$0xff]
        %v2245 = vld [vmem:[%s2157 + $0x2b8] sm:$0xff]
        %v2246 = vld [vmem:[%s2157 + $0x2c0] sm:$0xff]
        %v2247 = vld [vmem:[%s2157 + $0x2c8] sm:$0xff]
        %v2248 = vld [vmem:[%s2157 + $0x2d0] sm:$0xff]
        %v2249 = vld [vmem:[%s2157 + $0x2d8] sm:$0xff]
        %v2250 = vld [vmem:[%s2157 + $0x2e0] sm:$0xff]
        %v2251 = vld [vmem:[%s2157 + $0x2e8] sm:$0xff]
        %v2252 = vld [vmem:[%s2157 + $0x2f0] sm:$0xff]
        %v2253 = vld [vmem:[%s2157 + $0x2f8] sm:$0xff]
        %v2254 = vld [vmem:[%s2157 + $0x300] sm:$0xff]
        %v2255 = vld [vmem:[%s2157 + $0x308] sm:$0xff]
        %v2256 = vld [vmem:[%s2157 + $0x310] sm:$0xff]
        %v2257 = vld [vmem:[%s2157 + $0x318] sm:$0xff]
        %v2258 = vld [vmem:[%s2157 + $0x320] sm:$0xff]
        %v2259 = vld [vmem:[%s2157 + $0x328] sm:$0xff]
        %v2260 = vld [vmem:[%s2157 + $0x330] sm:$0xff]
        %v2261 = vld [vmem:[%s2157 + $0x338] sm:$0xff]
        %v2262 = vld [vmem:[%s2157 + $0x340] sm:$0x33]
        %v2263 = vld [vmem:[%s2157 + $0x348] sm:$0x33]
        %s2264 = scalar_lea.vmem %s4, 8
        %v2265 = vld [vmem:[%s2264] sm:$0xf]
        %v2267 = vlaneseq
        %v2268 = vshrl.u32 %v2267, 7
        %v2269 = vsub.s32 0, %v2268
        %v2270 = vrot.slane %v2265, %v2269
        %v2271 = vlaneseq
        %v2272 = vshrl.u32 %v2271, 7
        %v2273 = vsub.s32 1, %v2272
        %v2274 = vrot.slane %v2265, %v2273
        %v2275 = vlaneseq
        %v2276 = vshrl.u32 %v2275, 7
        %v2277 = vsub.s32 2, %v2276
        %v2278 = vrot.slane %v2265, %v2277
        %v2279 = vlaneseq
        %v2280 = vshrl.u32 %v2279, 7
        %v2281 = vsub.s32 3, %v2280
        %v2282 = vrot.slane %v2265, %v2281
        %v2393 = vunpack.c.l.b16 %v2158
        %v2394 = vunpack.c.h.b16 %v2158
        %v2395 = vunpack.c.l.b16 %v2159
        %v2396 = vunpack.c.h.b16 %v2159
        %v2397 = vunpack.c.l.b16 %v2160
        %v2398 = vunpack.c.h.b16 %v2160
        %v2399 = vunpack.c.l.b16 %v2161
        %v2400 = vunpack.c.h.b16 %v2161
        %v2401 = vunpack.c.l.b16 %v2162
        %v2402 = vunpack.c.h.b16 %v2162
        %v2403 = vunpack.c.l.b16 %v2163
        %v2404 = vunpack.c.h.b16 %v2163
        %v2405 = vunpack.c.l.b16 %v2164
        %v2406 = vunpack.c.h.b16 %v2164
        %v2407 = vunpack.c.l.b16 %v2165
        %v2408 = vunpack.c.h.b16 %v2165
        %v2409 = vunpack.c.l.b16 %v2166
        %v2410 = vunpack.c.h.b16 %v2166
        %v2411 = vunpack.c.l.b16 %v2167
        %v2412 = vunpack.c.h.b16 %v2167
        %v2413 = vunpack.c.l.b16 %v2168
        %v2414 = vunpack.c.h.b16 %v2168
        %v2415 = vunpack.c.l.b16 %v2169
        %v2416 = vunpack.c.h.b16 %v2169
        %v2417 = vunpack.c.l.b16 %v2170
        %v2418 = vunpack.c.h.b16 %v2170
        %v2419 = vunpack.c.l.b16 %v2171
        %v2420 = vunpack.c.h.b16 %v2171
        %v2421 = vunpack.c.l.b16 %v2172
        %v2422 = vunpack.c.h.b16 %v2172
        %v2423 = vunpack.c.l.b16 %v2173
        %v2424 = vunpack.c.h.b16 %v2173
        %v2425 = vunpack.c.l.b16 %v2174
        %v2426 = vunpack.c.h.b16 %v2174
        %v2427 = vunpack.c.l.b16 %v2175
        %v2428 = vunpack.c.h.b16 %v2175
        %v2429 = vunpack.c.l.b16 %v2176
        %v2430 = vunpack.c.h.b16 %v2176
        %v2431 = vunpack.c.l.b16 %v2177
        %v2432 = vunpack.c.h.b16 %v2177
        %v2433 = vunpack.c.l.b16 %v2178
        %v2434 = vunpack.c.h.b16 %v2178
        %v2435 = vunpack.c.l.b16 %v2179
        %v2436 = vunpack.c.h.b16 %v2179
        %v2437 = vunpack.c.l.b16 %v2180
        %v2438 = vunpack.c.h.b16 %v2180
        %v2439 = vunpack.c.l.b16 %v2181
        %v2440 = vunpack.c.h.b16 %v2181
        %v2441 = vunpack.c.l.b16 %v2182
        %v2442 = vunpack.c.h.b16 %v2182
        %v2443 = vunpack.c.l.b16 %v2183
        %v2444 = vunpack.c.h.b16 %v2183
        %v2445 = vunpack.c.l.b16 %v2184
        %v2446 = vunpack.c.h.b16 %v2184
        %v2447 = vunpack.c.l.b16 %v2185
        %v2448 = vunpack.c.h.b16 %v2185
        %v2449 = vunpack.c.l.b16 %v2186
        %v2450 = vunpack.c.h.b16 %v2186
        %v2451 = vunpack.c.l.b16 %v2187
        %v2452 = vunpack.c.h.b16 %v2187
        %v2453 = vunpack.c.l.b16 %v2188
        %v2454 = vunpack.c.h.b16 %v2188
        %v2455 = vunpack.c.l.b16 %v2189
        %v2456 = vunpack.c.h.b16 %v2189
        %v2457 = vunpack.c.l.b16 %v2190
        %v2458 = vunpack.c.h.b16 %v2190
        %v2459 = vunpack.c.l.b16 %v2191
        %v2460 = vunpack.c.h.b16 %v2191
        %v2461 = vunpack.c.l.b16 %v2192
        %v2462 = vunpack.c.h.b16 %v2192
        %v2463 = vunpack.c.l.b16 %v2193
        %v2464 = vunpack.c.h.b16 %v2193
        %v2465 = vunpack.c.l.b16 %v2194
        %v2466 = vunpack.c.h.b16 %v2194
        %v2467 = vunpack.c.l.b16 %v2195
        %v2468 = vunpack.c.h.b16 %v2195
        %v2469 = vunpack.c.l.b16 %v2196
        %v2470 = vunpack.c.h.b16 %v2196
        %v2471 = vunpack.c.l.b16 %v2197
        %v2472 = vunpack.c.h.b16 %v2197
        %v2473 = vunpack.c.l.b16 %v2198
        %v2474 = vunpack.c.h.b16 %v2198
        %v2475 = vunpack.c.l.b16 %v2199
        %v2476 = vunpack.c.h.b16 %v2199
        %v2477 = vunpack.c.l.b16 %v2200
        %v2478 = vunpack.c.h.b16 %v2200
        %v2479 = vunpack.c.l.b16 %v2201
        %v2480 = vunpack.c.h.b16 %v2201
        %v2481 = vunpack.c.l.b16 %v2202
        %v2482 = vunpack.c.h.b16 %v2202
        %v2483 = vunpack.c.l.b16 %v2203
        %v2484 = vunpack.c.h.b16 %v2203
        %v2485 = vunpack.c.l.b16 %v2204
        %v2486 = vunpack.c.h.b16 %v2204
        %v2487 = vunpack.c.l.b16 %v2205
        %v2488 = vunpack.c.h.b16 %v2205
        %v2489 = vunpack.c.l.b16 %v2206
        %v2490 = vunpack.c.h.b16 %v2206
        %v2491 = vunpack.c.l.b16 %v2207
        %v2492 = vunpack.c.h.b16 %v2207
        %v2493 = vunpack.c.l.b16 %v2208
        %v2494 = vunpack.c.h.b16 %v2208
        %v2495 = vunpack.c.l.b16 %v2209
        %v2496 = vunpack.c.h.b16 %v2209
        %v2497 = vunpack.c.l.b16 %v2210
        %v2498 = vunpack.c.h.b16 %v2210
        %v2499 = vunpack.c.l.b16 %v2211
        %v2500 = vunpack.c.h.b16 %v2211
        %v2501 = vunpack.c.l.b16 %v2212
        %v2502 = vunpack.c.h.b16 %v2212
        %v2503 = vunpack.c.l.b16 %v2213
        %v2504 = vunpack.c.h.b16 %v2213
        %v2505 = vunpack.c.l.b16 %v2214
        %v2506 = vunpack.c.h.b16 %v2214
        %v2507 = vunpack.c.l.b16 %v2215
        %v2508 = vunpack.c.h.b16 %v2215
        %v2509 = vunpack.c.l.b16 %v2216
        %v2510 = vunpack.c.h.b16 %v2216
        %v2511 = vunpack.c.l.b16 %v2217
        %v2512 = vunpack.c.h.b16 %v2217
        %v2513 = vunpack.c.l.b16 %v2218
        %v2514 = vunpack.c.h.b16 %v2218
        %v2515 = vunpack.c.l.b16 %v2219
        %v2516 = vunpack.c.h.b16 %v2219
        %v2517 = vunpack.c.l.b16 %v2220
        %v2518 = vunpack.c.h.b16 %v2220
        %v2519 = vunpack.c.l.b16 %v2221
        %v2520 = vunpack.c.h.b16 %v2221
        %v2521 = vunpack.c.l.b16 %v2222
        %v2522 = vunpack.c.h.b16 %v2222
        %v2523 = vunpack.c.l.b16 %v2223
        %v2524 = vunpack.c.h.b16 %v2223
        %v2525 = vunpack.c.l.b16 %v2224
        %v2526 = vunpack.c.h.b16 %v2224
        %v2527 = vunpack.c.l.b16 %v2225
        %v2528 = vunpack.c.h.b16 %v2225
        %v2529 = vunpack.c.l.b16 %v2226
        %v2530 = vunpack.c.h.b16 %v2226
        %v2531 = vunpack.c.l.b16 %v2227
        %v2532 = vunpack.c.h.b16 %v2227
        %v2533 = vunpack.c.l.b16 %v2228
        %v2534 = vunpack.c.h.b16 %v2228
        %v2535 = vunpack.c.l.b16 %v2229
        %v2536 = vunpack.c.h.b16 %v2229
        %v2537 = vunpack.c.l.b16 %v2230
        %v2538 = vunpack.c.h.b16 %v2230
        %v2539 = vunpack.c.l.b16 %v2231
        %v2540 = vunpack.c.h.b16 %v2231
        %v2541 = vunpack.c.l.b16 %v2232
        %v2542 = vunpack.c.h.b16 %v2232
        %v2543 = vunpack.c.l.b16 %v2233
        %v2544 = vunpack.c.h.b16 %v2233
        %v2545 = vunpack.c.l.b16 %v2234
        %v2546 = vunpack.c.h.b16 %v2234
        %v2547 = vunpack.c.l.b16 %v2235
        %v2548 = vunpack.c.h.b16 %v2235
        %v2549 = vunpack.c.l.b16 %v2236
        %v2550 = vunpack.c.h.b16 %v2236
        %v2551 = vunpack.c.l.b16 %v2237
        %v2552 = vunpack.c.h.b16 %v2237
        %v2553 = vunpack.c.l.b16 %v2238
        %v2554 = vunpack.c.h.b16 %v2238
        %v2555 = vunpack.c.l.b16 %v2239
        %v2556 = vunpack.c.h.b16 %v2239
        %v2557 = vunpack.c.l.b16 %v2240
        %v2558 = vunpack.c.h.b16 %v2240
        %v2559 = vunpack.c.l.b16 %v2241
        %v2560 = vunpack.c.h.b16 %v2241
        %v2561 = vunpack.c.l.b16 %v2242
        %v2562 = vunpack.c.h.b16 %v2242
        %v2563 = vunpack.c.l.b16 %v2243
        %v2564 = vunpack.c.h.b16 %v2243
        %v2565 = vunpack.c.l.b16 %v2244
        %v2566 = vunpack.c.h.b16 %v2244
        %v2567 = vunpack.c.l.b16 %v2245
        %v2568 = vunpack.c.h.b16 %v2245
        %v2569 = vunpack.c.l.b16 %v2246
        %v2570 = vunpack.c.h.b16 %v2246
        %v2571 = vunpack.c.l.b16 %v2247
        %v2572 = vunpack.c.h.b16 %v2247
        %v2573 = vunpack.c.l.b16 %v2248
        %v2574 = vunpack.c.h.b16 %v2248
        %v2575 = vunpack.c.l.b16 %v2249
        %v2576 = vunpack.c.h.b16 %v2249
        %v2577 = vunpack.c.l.b16 %v2250
        %v2578 = vunpack.c.h.b16 %v2250
        %v2579 = vunpack.c.l.b16 %v2251
        %v2580 = vunpack.c.h.b16 %v2251
        %v2581 = vunpack.c.l.b16 %v2252
        %v2582 = vunpack.c.h.b16 %v2252
        %v2583 = vunpack.c.l.b16 %v2253
        %v2584 = vunpack.c.h.b16 %v2253
        %v2585 = vunpack.c.l.b16 %v2254
        %v2586 = vunpack.c.h.b16 %v2254
        %v2587 = vunpack.c.l.b16 %v2255
        %v2588 = vunpack.c.h.b16 %v2255
        %v2589 = vunpack.c.l.b16 %v2256
        %v2590 = vunpack.c.h.b16 %v2256
        %v2591 = vunpack.c.l.b16 %v2257
        %v2592 = vunpack.c.h.b16 %v2257
        %v2593 = vunpack.c.l.b16 %v2258
        %v2594 = vunpack.c.h.b16 %v2258
        %v2595 = vunpack.c.l.b16 %v2259
        %v2596 = vunpack.c.h.b16 %v2259
        %v2597 = vunpack.c.l.b16 %v2260
        %v2598 = vunpack.c.h.b16 %v2260
        %v2599 = vunpack.c.l.b16 %v2261
        %v2600 = vunpack.c.h.b16 %v2261
        %v2601 = vunpack.c.l.b16 %v2262
        %v2602 = vunpack.c.h.b16 %v2262
        %v2603 = vunpack.c.l.b16 %v2263
        %v2604 = vunpack.c.h.b16 %v2263
        %v2605 = vpack.c.b16 %v2397, %v2393
        %v2606 = vpack.c.b16 %v2398, %v2394
        %v2607 = vpack.c.b16 %v2399, %v2395
        %v2608 = vpack.c.b16 %v2400, %v2396
        %v2609 = vpack.c.b16 %v2405, %v2401
        %v2610 = vpack.c.b16 %v2406, %v2402
        %v2611 = vpack.c.b16 %v2407, %v2403
        %v2612 = vpack.c.b16 %v2408, %v2404
        %v2613 = vpack.c.b16 %v2413, %v2409
        %v2614 = vpack.c.b16 %v2414, %v2410
        %v2615 = vpack.c.b16 %v2415, %v2411
        %v2616 = vpack.c.b16 %v2416, %v2412
        %v2617 = vpack.c.b16 %v2421, %v2417
        %v2618 = vpack.c.b16 %v2422, %v2418
        %v2619 = vpack.c.b16 %v2423, %v2419
        %v2620 = vpack.c.b16 %v2424, %v2420
        %v2621 = vpack.c.b16 %v2429, %v2425
        %v2622 = vpack.c.b16 %v2430, %v2426
        %v2623 = vpack.c.b16 %v2431, %v2427
        %v2624 = vpack.c.b16 %v2432, %v2428
        %v2625 = vpack.c.b16 %v2437, %v2433
        %v2626 = vpack.c.b16 %v2438, %v2434
        %v2627 = vpack.c.b16 %v2439, %v2435
        %v2628 = vpack.c.b16 %v2440, %v2436
        %v2629 = vpack.c.b16 %v2445, %v2441
        %v2630 = vpack.c.b16 %v2446, %v2442
        %v2631 = vpack.c.b16 %v2447, %v2443
        %v2632 = vpack.c.b16 %v2448, %v2444
        %v2633 = vpack.c.b16 %v2453, %v2449
        %v2634 = vpack.c.b16 %v2454, %v2450
        %v2635 = vpack.c.b16 %v2455, %v2451
        %v2636 = vpack.c.b16 %v2456, %v2452
        %v2637 = vpack.c.b16 %v2461, %v2457
        %v2638 = vpack.c.b16 %v2462, %v2458
        %v2639 = vpack.c.b16 %v2463, %v2459
        %v2640 = vpack.c.b16 %v2464, %v2460
        %v2641 = vpack.c.b16 %v2469, %v2465
        %v2642 = vpack.c.b16 %v2470, %v2466
        %v2643 = vpack.c.b16 %v2471, %v2467
        %v2644 = vpack.c.b16 %v2472, %v2468
        %v2645 = vpack.c.b16 %v2477, %v2473
        %v2646 = vpack.c.b16 %v2478, %v2474
        %v2647 = vpack.c.b16 %v2479, %v2475
        %v2648 = vpack.c.b16 %v2480, %v2476
        %v2649 = vpack.c.b16 %v2485, %v2481
        %v2650 = vpack.c.b16 %v2486, %v2482
        %v2651 = vpack.c.b16 %v2487, %v2483
        %v2652 = vpack.c.b16 %v2488, %v2484
        %v2653 = vpack.c.b16 %v2493, %v2489
        %v2654 = vpack.c.b16 %v2494, %v2490
        %v2655 = vpack.c.b16 %v2495, %v2491
        %v2656 = vpack.c.b16 %v2496, %v2492
        %v2657 = vpack.c.b16 %v2501, %v2497
        %v2658 = vpack.c.b16 %v2502, %v2498
        %v2659 = vpack.c.b16 %v2503, %v2499
        %v2660 = vpack.c.b16 %v2504, %v2500
        %v2661 = vpack.c.b16 %v2509, %v2505
        %v2662 = vpack.c.b16 %v2510, %v2506
        %v2663 = vpack.c.b16 %v2511, %v2507
        %v2664 = vpack.c.b16 %v2512, %v2508
        %v2665 = vpack.c.b16 %v2517, %v2513
        %v2666 = vpack.c.b16 %v2518, %v2514
        %v2667 = vpack.c.b16 %v2519, %v2515
        %v2668 = vpack.c.b16 %v2520, %v2516
        %v2669 = vpack.c.b16 %v2525, %v2521
        %v2670 = vpack.c.b16 %v2526, %v2522
        %v2671 = vpack.c.b16 %v2527, %v2523
        %v2672 = vpack.c.b16 %v2528, %v2524
        %v2673 = vpack.c.b16 %v2533, %v2529
        %v2674 = vpack.c.b16 %v2534, %v2530
        %v2675 = vpack.c.b16 %v2535, %v2531
        %v2676 = vpack.c.b16 %v2536, %v2532
        %v2677 = vpack.c.b16 %v2541, %v2537
        %v2678 = vpack.c.b16 %v2542, %v2538
        %v2679 = vpack.c.b16 %v2543, %v2539
        %v2680 = vpack.c.b16 %v2544, %v2540
        %v2681 = vpack.c.b16 %v2549, %v2545
        %v2682 = vpack.c.b16 %v2550, %v2546
        %v2683 = vpack.c.b16 %v2551, %v2547
        %v2684 = vpack.c.b16 %v2552, %v2548
        %v2685 = vpack.c.b16 %v2557, %v2553
        %v2686 = vpack.c.b16 %v2558, %v2554
        %v2687 = vpack.c.b16 %v2559, %v2555
        %v2688 = vpack.c.b16 %v2560, %v2556
        %v2689 = vpack.c.b16 %v2565, %v2561
        %v2690 = vpack.c.b16 %v2566, %v2562
        %v2691 = vpack.c.b16 %v2567, %v2563
        %v2692 = vpack.c.b16 %v2568, %v2564
        %v2693 = vpack.c.b16 %v2573, %v2569
        %v2694 = vpack.c.b16 %v2574, %v2570
        %v2695 = vpack.c.b16 %v2575, %v2571
        %v2696 = vpack.c.b16 %v2576, %v2572
        %v2697 = vpack.c.b16 %v2581, %v2577
        %v2698 = vpack.c.b16 %v2582, %v2578
        %v2699 = vpack.c.b16 %v2583, %v2579
        %v2700 = vpack.c.b16 %v2584, %v2580
        %v2701 = vpack.c.b16 %v2589, %v2585
        %v2702 = vpack.c.b16 %v2590, %v2586
        %v2703 = vpack.c.b16 %v2591, %v2587
        %v2704 = vpack.c.b16 %v2592, %v2588
        %v2705 = vpack.c.b16 %v2597, %v2593
        %v2706 = vpack.c.b16 %v2598, %v2594
        %v2707 = vpack.c.b16 %v2599, %v2595
        %v2708 = vpack.c.b16 %v2600, %v2596
        %v2709 = vpack.c.b16 %v2601, %v2601
        %v2710 = vpack.c.b16 %v2602, %v2602
        %v2711 = vpack.c.b16 %v2603, %v2603
        %v2712 = vpack.c.b16 %v2604, %v2604
        %v2818 = vsel %vm1089, %v2156, 0
        %v2821 = vsel %vm1093, %v2709, 0
        %v2824 = vsel %vm1093, %v2710, 0
        %v2827 = vsel %vm1093, %v2711, 0
        %v2830 = vsel %vm1093, %v2712, 0
        %2832 = vmatprep.subr.bf16.mxu0 %v2606
        %2833 = vmatpush1.bf16.msra.mxu0 %v2605
        %2834 = vmatprep.subr.bf16.mxu0 %v2610
        %2835 = vmatpush1.bf16.msra.mxu0 %v2609
        %2836 = vmatprep.subr.bf16.mxu0 %v2614
        %2837 = vmatpush1.bf16.msra.mxu0 %v2613
        %2838 = vmatprep.subr.bf16.mxu0 %v2618
        %2839 = vmatpush1.bf16.msra.mxu0 %v2617
        %2840 = vmatprep.subr.bf16.mxu0 %v2622
        %2841 = vmatpush1.bf16.msra.mxu0 %v2621
        %2842 = vmatprep.subr.bf16.mxu0 %v2626
        %2843 = vmatpush1.bf16.msra.mxu0 %v2625
        %2844 = vmatprep.subr.bf16.mxu0 %v2630
        %2845 = vmatpush1.bf16.msra.mxu0 %v2629
        %2846 = vmatprep.subr.bf16.mxu0 %v2634
        %2847 = vmatpush1.bf16.msra.mxu0 %v2633
        %2848 = vmatprep.subr.bf16.mxu0 %v2638
        %2849 = vmatpush1.bf16.msra.mxu0 %v2637
        %2850 = vmatprep.subr.bf16.mxu0 %v2642
        %2851 = vmatpush1.bf16.msra.mxu0 %v2641
        %2852 = vmatprep.subr.bf16.mxu0 %v2646
        %2853 = vmatpush1.bf16.msra.mxu0 %v2645
        %2854 = vmatprep.subr.bf16.mxu0 %v2650
        %2855 = vmatpush1.bf16.msra.mxu0 %v2649
        %2856 = vmatprep.subr.bf16.mxu0 %v2654
        %2857 = vmatpush1.bf16.msra.mxu0 %v2653
        %2858 = vmatprep.subr.bf16.mxu0 %v2658
        %2859 = vmatpush1.bf16.msra.mxu0 %v2657
        %2860 = vmatprep.subr.bf16.mxu0 %v2662
        %2861 = vmatpush1.bf16.msra.mxu0 %v2661
        %2862 = vmatprep.subr.bf16.mxu0 %v2666
        %2863 = vmatpush1.bf16.msra.mxu0 %v2665
        %2864 = vmatprep.mubr.bf16.mxu0 %v2154
        %2865 = vmatmul.mubr.bf16.gmra.mrb[0].mxu0 %v2153
        %v2866 = vpop.f32.mrb[0].mxu0
        %v2867 = vadd.f32 %v2270, %v2866
        %v2868 = vpop.f32.mrb[0].mxu0
        %v2869 = vadd.f32 %v2274, %v2868
        %v2870 = vpop.f32.mrb[0].mxu0
        %v2871 = vpop.f32.mrb[0].mxu0
        %2872 = vdwg.mxu0
        %2873 = vmatprep.subr.bf16.mxu0 %v2670
        %2874 = vmatpush1.bf16.msra.mxu0 %v2669
        %2875 = vmatprep.subr.bf16.mxu0 %v2674
        %2876 = vmatpush1.bf16.msra.mxu0 %v2673
        %2877 = vmatprep.subr.bf16.mxu0 %v2678
        %2878 = vmatpush1.bf16.msra.mxu0 %v2677
        %2879 = vmatprep.subr.bf16.mxu0 %v2682
        %2880 = vmatpush1.bf16.msra.mxu0 %v2681
        %2881 = vmatprep.subr.bf16.mxu0 %v2686
        %2882 = vmatpush1.bf16.msra.mxu0 %v2685
        %2883 = vmatprep.subr.bf16.mxu0 %v2690
        %2884 = vmatpush1.bf16.msra.mxu0 %v2689
        %2885 = vmatprep.subr.bf16.mxu0 %v2694
        %2886 = vmatpush1.bf16.msra.mxu0 %v2693
        %2887 = vmatprep.subr.bf16.mxu0 %v2698
        %2888 = vmatpush1.bf16.msra.mxu0 %v2697
        %2889 = vmatprep.subr.bf16.mxu0 %v2702
        %2890 = vmatpush1.bf16.msra.mxu0 %v2701
        %2891 = vmatprep.subr.bf16.mxu0 %v2706
        %2892 = vmatpush1.bf16.msra.mxu0 %v2705
        %2893 = vmatprep.subr.bf16.mxu0 %v2824
        %2894 = vmatpush1.bf16.msra.mxu0 %v2821
        %2895 = vmatprep.subr.bf16.mxu0 0
        %2896 = vmatpush1.bf16.msra.mxu0 0
        %2897 = vmatprep.subr.bf16.mxu0 0
        %2898 = vmatpush1.bf16.msra.mxu0 0
        %2899 = vmatprep.subr.bf16.mxu0 0
        %2900 = vmatpush1.bf16.msra.mxu0 0
        %2901 = vmatprep.subr.bf16.mxu0 0
        %2902 = vmatpush1.bf16.msra.mxu0 0
        %2903 = vmatprep.subr.bf16.mxu0 0
        %2904 = vmatpush1.bf16.msra.mxu0 0
        %2905 = vmatprep.mubr.bf16.mxu0 %v2818
        %2906 = vmatmul.mubr.bf16.gmra.mrb[0].mxu0 %v2155
        %v2907 = vpop.f32.mrb[0].mxu0
        %v2908 = vadd.f32 %v2867, %v2907
        %v2909 = vpop.f32.mrb[0].mxu0
        %v2910 = vadd.f32 %v2869, %v2909
        %v2911 = vpop.f32.mrb[0].mxu0
        %v2912 = vpop.f32.mrb[0].mxu0
        %2913 = vdwg.mxu0
        %2914 = vmatprep.subr.bf16.mxu0 %v2608
        %2915 = vmatpush1.bf16.msra.mxu0 %v2607
        %2916 = vmatprep.subr.bf16.mxu0 %v2612
        %2917 = vmatpush1.bf16.msra.mxu0 %v2611
        %2918 = vmatprep.subr.bf16.mxu0 %v2616
        %2919 = vmatpush1.bf16.msra.mxu0 %v2615
        %2920 = vmatprep.subr.bf16.mxu0 %v2620
        %2921 = vmatpush1.bf16.msra.mxu0 %v2619
        %2922 = vmatprep.subr.bf16.mxu0 %v2624
        %2923 = vmatpush1.bf16.msra.mxu0 %v2623
        %2924 = vmatprep.subr.bf16.mxu0 %v2628
        %2925 = vmatpush1.bf16.msra.mxu0 %v2627
        %2926 = vmatprep.subr.bf16.mxu0 %v2632
        %2927 = vmatpush1.bf16.msra.mxu0 %v2631
        %2928 = vmatprep.subr.bf16.mxu0 %v2636
        %2929 = vmatpush1.bf16.msra.mxu0 %v2635
        %2930 = vmatprep.subr.bf16.mxu0 %v2640
        %2931 = vmatpush1.bf16.msra.mxu0 %v2639
        %2932 = vmatprep.subr.bf16.mxu0 %v2644
        %2933 = vmatpush1.bf16.msra.mxu0 %v2643
        %2934 = vmatprep.subr.bf16.mxu0 %v2648
        %2935 = vmatpush1.bf16.msra.mxu0 %v2647
        %2936 = vmatprep.subr.bf16.mxu0 %v2652
        %2937 = vmatpush1.bf16.msra.mxu0 %v2651
        %2938 = vmatprep.subr.bf16.mxu0 %v2656
        %2939 = vmatpush1.bf16.msra.mxu0 %v2655
        %2940 = vmatprep.subr.bf16.mxu0 %v2660
        %2941 = vmatpush1.bf16.msra.mxu0 %v2659
        %2942 = vmatprep.subr.bf16.mxu0 %v2664
        %2943 = vmatpush1.bf16.msra.mxu0 %v2663
        %2944 = vmatprep.subr.bf16.mxu0 %v2668
        %2945 = vmatpush1.bf16.msra.mxu0 %v2667
        %2946 = vmatprep.mubr.bf16.mxu0 %v2154
        %2947 = vmatmul.mubr.bf16.gmra.mrb[0].mxu0 %v2153
        %v2948 = vpop.f32.mrb[0].mxu0
        %v2949 = vadd.f32 %v2278, %v2948
        %v2950 = vpop.f32.mrb[0].mxu0
        %v2951 = vadd.f32 %v2282, %v2950
        %v2952 = vpop.f32.mrb[0].mxu0
        %v2953 = vpop.f32.mrb[0].mxu0
        %2954 = vdwg.mxu0
        %2955 = vmatprep.subr.bf16.mxu0 %v2672
        %2956 = vmatpush1.bf16.msra.mxu0 %v2671
        %2957 = vmatprep.subr.bf16.mxu0 %v2676
        %2958 = vmatpush1.bf16.msra.mxu0 %v2675
        %2959 = vmatprep.subr.bf16.mxu0 %v2680
        %2960 = vmatpush1.bf16.msra.mxu0 %v2679
        %2961 = vmatprep.subr.bf16.mxu0 %v2684
        %2962 = vmatpush1.bf16.msra.mxu0 %v2683
        %2963 = vmatprep.subr.bf16.mxu0 %v2688
        %2964 = vmatpush1.bf16.msra.mxu0 %v2687
        %2965 = vmatprep.subr.bf16.mxu0 %v2692
        %2966 = vmatpush1.bf16.msra.mxu0 %v2691
        %2967 = vmatprep.subr.bf16.mxu0 %v2696
        %2968 = vmatpush1.bf16.msra.mxu0 %v2695
        %2969 = vmatprep.subr.bf16.mxu0 %v2700
        %2970 = vmatpush1.bf16.msra.mxu0 %v2699
        %2971 = vmatprep.subr.bf16.mxu0 %v2704
        %2972 = vmatpush1.bf16.msra.mxu0 %v2703
        %2973 = vmatprep.subr.bf16.mxu0 %v2708
        %2974 = vmatpush1.bf16.msra.mxu0 %v2707
        %2975 = vmatprep.subr.bf16.mxu0 %v2830
        %2976 = vmatpush1.bf16.msra.mxu0 %v2827
        %2977 = vmatprep.subr.bf16.mxu0 0
        %2978 = vmatpush1.bf16.msra.mxu0 0
        %2979 = vmatprep.subr.bf16.mxu0 0
        %2980 = vmatpush1.bf16.msra.mxu0 0
        %2981 = vmatprep.subr.bf16.mxu0 0
        %2982 = vmatpush1.bf16.msra.mxu0 0
        %2983 = vmatprep.subr.bf16.mxu0 0
        %2984 = vmatpush1.bf16.msra.mxu0 0
        %2985 = vmatprep.subr.bf16.mxu0 0
        %2986 = vmatpush1.bf16.msra.mxu0 0
        %2987 = vmatprep.mubr.bf16.mxu0 %v2818
        %2988 = vmatmul.mubr.bf16.gmra.mrb[0].mxu0 %v2155
        %v2989 = vpop.f32.mrb[0].mxu0
        %v2990 = vadd.f32 %v2949, %v2989
        %v2991 = vpop.f32.mrb[0].mxu0
        %v2992 = vadd.f32 %v2951, %v2991
        %v2993 = vpop.f32.mrb[0].mxu0
        %v2994 = vpop.f32.mrb[0].mxu0
        %2995 = vdwg.mxu0
        %v2996 = vsub.f32 0.0, %v2908
        %v2997 = vsub.f32 0.0, %v2910
        %v2998 = vsub.f32 0.0, %v2990
        %v2999 = vsub.f32 0.0, %v2992
        %v3000 = vmul.f32 %v2996, 1.442695
        %v3001 = vpow.pop %v3000
        %v3002 = vmul.f32 %v2997, 1.442695
        %v3003 = vpow.pop %v3002
        %v3004 = vmul.f32 %v2998, 1.442695
        %v3005 = vpow.pop %v3004
        %v3006 = vmul.f32 %v2999, 1.442695
        %v3007 = vpow.pop %v3006
        %v3008 = vadd.f32 %v3001, 1.0
        %v3009 = vadd.f32 %v3003, 1.0
        %v3010 = vadd.f32 %v3005, 1.0
        %v3011 = vadd.f32 %v3007, 1.0
        %v3012 = vrcp.pop %v3008
        %v3013 = vrcp.pop %v3009
        %v3014 = vrcp.pop %v3010
        %v3015 = vrcp.pop %v3011
        %v3016 = vpack.c.bf16 %v3012, %v3012
        %v3017 = vpack.c.bf16 %v3013, %v3013
        %v3018 = vpack.c.bf16 %v3014, %v3014
        %v3019 = vpack.c.bf16 %v3015, %v3015
        %s3020 = scalar_lea.vmem %s3, 2544
        %v3021 = vld [vmem:[%s3020] sm:$0xff]
        %v3022 = vld [vmem:[%s3020 + $0x8] sm:$0xff]
        %v3023 = vld [vmem:[%s3020 + $0x10] sm:$0xff]
        %v3024 = vld [vmem:[%s3020 + $0x18] sm:$0xff]
        %v3025 = vld [vmem:[%s3020 + $0x20] sm:$0xff]
        %v3026 = vld [vmem:[%s3020 + $0x28] sm:$0xff]
        %v3027 = vld [vmem:[%s3020 + $0x30] sm:$0xff]
        %v3028 = vld [vmem:[%s3020 + $0x38] sm:$0xff]
        %v3029 = vld [vmem:[%s3020 + $0x40] sm:$0xff]
        %v3030 = vld [vmem:[%s3020 + $0x48] sm:$0xff]
        %v3031 = vld [vmem:[%s3020 + $0x50] sm:$0xff]
        %v3032 = vld [vmem:[%s3020 + $0x58] sm:$0xff]
        %v3033 = vld [vmem:[%s3020 + $0x60] sm:$0xff]
        %v3034 = vld [vmem:[%s3020 + $0x68] sm:$0xff]
        %v3035 = vld [vmem:[%s3020 + $0x70] sm:$0xff]
        %v3036 = vld [vmem:[%s3020 + $0x78] sm:$0xff]
        %v3037 = vld [vmem:[%s3020 + $0x80] sm:$0xff]
        %v3038 = vld [vmem:[%s3020 + $0x88] sm:$0xff]
        %v3039 = vld [vmem:[%s3020 + $0x90] sm:$0xff]
        %v3040 = vld [vmem:[%s3020 + $0x98] sm:$0xff]
        %v3041 = vld [vmem:[%s3020 + $0xa0] sm:$0xff]
        %v3042 = vld [vmem:[%s3020 + $0xa8] sm:$0xff]
        %v3043 = vld [vmem:[%s3020 + $0xb0] sm:$0xff]
        %v3044 = vld [vmem:[%s3020 + $0xb8] sm:$0xff]
        %v3045 = vld [vmem:[%s3020 + $0xc0] sm:$0xff]
        %v3046 = vld [vmem:[%s3020 + $0xc8] sm:$0xff]
        %v3047 = vld [vmem:[%s3020 + $0xd0] sm:$0xff]
        %v3048 = vld [vmem:[%s3020 + $0xd8] sm:$0xff]
        %v3049 = vld [vmem:[%s3020 + $0xe0] sm:$0xff]
        %v3050 = vld [vmem:[%s3020 + $0xe8] sm:$0xff]
        %v3051 = vld [vmem:[%s3020 + $0xf0] sm:$0xff]
        %v3052 = vld [vmem:[%s3020 + $0xf8] sm:$0xff]
        %v3053 = vld [vmem:[%s3020 + $0x100] sm:$0xff]
        %v3054 = vld [vmem:[%s3020 + $0x108] sm:$0xff]
        %v3055 = vld [vmem:[%s3020 + $0x110] sm:$0xff]
        %v3056 = vld [vmem:[%s3020 + $0x118] sm:$0xff]
        %v3057 = vld [vmem:[%s3020 + $0x120] sm:$0xff]
        %v3058 = vld [vmem:[%s3020 + $0x128] sm:$0xff]
        %v3059 = vld [vmem:[%s3020 + $0x130] sm:$0xff]
        %v3060 = vld [vmem:[%s3020 + $0x138] sm:$0xff]
        %v3061 = vld [vmem:[%s3020 + $0x140] sm:$0xff]
        %v3062 = vld [vmem:[%s3020 + $0x148] sm:$0xff]
        %v3063 = vld [vmem:[%s3020 + $0x150] sm:$0xff]
        %v3064 = vld [vmem:[%s3020 + $0x158] sm:$0xff]
        %v3065 = vld [vmem:[%s3020 + $0x160] sm:$0xff]
        %v3066 = vld [vmem:[%s3020 + $0x168] sm:$0xff]
        %v3067 = vld [vmem:[%s3020 + $0x170] sm:$0xff]
        %v3068 = vld [vmem:[%s3020 + $0x178] sm:$0xff]
        %v3069 = vld [vmem:[%s3020 + $0x180] sm:$0xff]
        %v3070 = vld [vmem:[%s3020 + $0x188] sm:$0xff]
        %v3071 = vld [vmem:[%s3020 + $0x190] sm:$0xff]
        %v3072 = vld [vmem:[%s3020 + $0x198] sm:$0xff]
        %v3073 = vld [vmem:[%s3020 + $0x1a0] sm:$0xff]
        %v3074 = vld [vmem:[%s3020 + $0x1a8] sm:$0xff]
        %v3075 = vld [vmem:[%s3020 + $0x1b0] sm:$0xff]
        %v3076 = vld [vmem:[%s3020 + $0x1b8] sm:$0xff]
        %v3077 = vld [vmem:[%s3020 + $0x1c0] sm:$0xff]
        %v3078 = vld [vmem:[%s3020 + $0x1c8] sm:$0xff]
        %v3079 = vld [vmem:[%s3020 + $0x1d0] sm:$0xff]
        %v3080 = vld [vmem:[%s3020 + $0x1d8] sm:$0xff]
        %v3081 = vld [vmem:[%s3020 + $0x1e0] sm:$0xff]
        %v3082 = vld [vmem:[%s3020 + $0x1e8] sm:$0xff]
        %v3083 = vld [vmem:[%s3020 + $0x1f0] sm:$0xff]
        %v3084 = vld [vmem:[%s3020 + $0x1f8] sm:$0xff]
        %v3085 = vld [vmem:[%s3020 + $0x200] sm:$0xff]
        %v3086 = vld [vmem:[%s3020 + $0x208] sm:$0xff]
        %v3087 = vld [vmem:[%s3020 + $0x210] sm:$0xff]
        %v3088 = vld [vmem:[%s3020 + $0x218] sm:$0xff]
        %v3089 = vld [vmem:[%s3020 + $0x220] sm:$0xff]
        %v3090 = vld [vmem:[%s3020 + $0x228] sm:$0xff]
        %v3091 = vld [vmem:[%s3020 + $0x230] sm:$0xff]
        %v3092 = vld [vmem:[%s3020 + $0x238] sm:$0xff]
        %v3093 = vld [vmem:[%s3020 + $0x240] sm:$0xff]
        %v3094 = vld [vmem:[%s3020 + $0x248] sm:$0xff]
        %v3095 = vld [vmem:[%s3020 + $0x250] sm:$0xff]
        %v3096 = vld [vmem:[%s3020 + $0x258] sm:$0xff]
        %v3097 = vld [vmem:[%s3020 + $0x260] sm:$0xff]
        %v3098 = vld [vmem:[%s3020 + $0x268] sm:$0xff]
        %v3099 = vld [vmem:[%s3020 + $0x270] sm:$0xff]
        %v3100 = vld [vmem:[%s3020 + $0x278] sm:$0xff]
        %v3101 = vld [vmem:[%s3020 + $0x280] sm:$0xff]
        %v3102 = vld [vmem:[%s3020 + $0x288] sm:$0xff]
        %v3103 = vld [vmem:[%s3020 + $0x290] sm:$0xff]
        %v3104 = vld [vmem:[%s3020 + $0x298] sm:$0xff]
        %v3105 = vld [vmem:[%s3020 + $0x2a0] sm:$0xff]
        %v3106 = vld [vmem:[%s3020 + $0x2a8] sm:$0xff]
        %v3107 = vld [vmem:[%s3020 + $0x2b0] sm:$0xff]
        %v3108 = vld [vmem:[%s3020 + $0x2b8] sm:$0xff]
        %v3109 = vld [vmem:[%s3020 + $0x2c0] sm:$0xff]
        %v3110 = vld [vmem:[%s3020 + $0x2c8] sm:$0xff]
        %v3111 = vld [vmem:[%s3020 + $0x2d0] sm:$0xff]
        %v3112 = vld [vmem:[%s3020 + $0x2d8] sm:$0xff]
        %v3113 = vld [vmem:[%s3020 + $0x2e0] sm:$0xff]
        %v3114 = vld [vmem:[%s3020 + $0x2e8] sm:$0xff]
        %v3115 = vld [vmem:[%s3020 + $0x2f0] sm:$0xff]
        %v3116 = vld [vmem:[%s3020 + $0x2f8] sm:$0xff]
        %v3117 = vld [vmem:[%s3020 + $0x300] sm:$0xff]
        %v3118 = vld [vmem:[%s3020 + $0x308] sm:$0xff]
        %v3119 = vld [vmem:[%s3020 + $0x310] sm:$0xff]
        %v3120 = vld [vmem:[%s3020 + $0x318] sm:$0xff]
        %v3121 = vld [vmem:[%s3020 + $0x320] sm:$0xff]
        %v3122 = vld [vmem:[%s3020 + $0x328] sm:$0xff]
        %v3123 = vld [vmem:[%s3020 + $0x330] sm:$0xff]
        %v3124 = vld [vmem:[%s3020 + $0x338] sm:$0xff]
        %v3125 = vld [vmem:[%s3020 + $0x340] sm:$0x33]
        %v3126 = vld [vmem:[%s3020 + $0x348] sm:$0x33]
        %s3127 = scalar_lea.vmem %s4, 12
        %v3128 = vld [vmem:[%s3127] sm:$0xf]
        %v3130 = vlaneseq
        %v3131 = vshrl.u32 %v3130, 7
        %v3132 = vsub.s32 0, %v3131
        %v3133 = vrot.slane %v3128, %v3132
        %v3134 = vlaneseq
        %v3135 = vshrl.u32 %v3134, 7
        %v3136 = vsub.s32 1, %v3135
        %v3137 = vrot.slane %v3128, %v3136
        %v3138 = vlaneseq
        %v3139 = vshrl.u32 %v3138, 7
        %v3140 = vsub.s32 2, %v3139
        %v3141 = vrot.slane %v3128, %v3140
        %v3142 = vlaneseq
        %v3143 = vshrl.u32 %v3142, 7
        %v3144 = vsub.s32 3, %v3143
        %v3145 = vrot.slane %v3128, %v3144
        %v3256 = vunpack.c.l.b16 %v3021
        %v3257 = vunpack.c.h.b16 %v3021
        %v3258 = vunpack.c.l.b16 %v3022
        %v3259 = vunpack.c.h.b16 %v3022
        %v3260 = vunpack.c.l.b16 %v3023
        %v3261 = vunpack.c.h.b16 %v3023
        %v3262 = vunpack.c.l.b16 %v3024
        %v3263 = vunpack.c.h.b16 %v3024
        %v3264 = vunpack.c.l.b16 %v3025
        %v3265 = vunpack.c.h.b16 %v3025
        %v3266 = vunpack.c.l.b16 %v3026
        %v3267 = vunpack.c.h.b16 %v3026
        %v3268 = vunpack.c.l.b16 %v3027
        %v3269 = vunpack.c.h.b16 %v3027
        %v3270 = vunpack.c.l.b16 %v3028
        %v3271 = vunpack.c.h.b16 %v3028
        %v3272 = vunpack.c.l.b16 %v3029
        %v3273 = vunpack.c.h.b16 %v3029
        %v3274 = vunpack.c.l.b16 %v3030
        %v3275 = vunpack.c.h.b16 %v3030
        %v3276 = vunpack.c.l.b16 %v3031
        %v3277 = vunpack.c.h.b16 %v3031
        %v3278 = vunpack.c.l.b16 %v3032
        %v3279 = vunpack.c.h.b16 %v3032
        %v3280 = vunpack.c.l.b16 %v3033
        %v3281 = vunpack.c.h.b16 %v3033
        %v3282 = vunpack.c.l.b16 %v3034
        %v3283 = vunpack.c.h.b16 %v3034
        %v3284 = vunpack.c.l.b16 %v3035
        %v3285 = vunpack.c.h.b16 %v3035
        %v3286 = vunpack.c.l.b16 %v3036
        %v3287 = vunpack.c.h.b16 %v3036
        %v3288 = vunpack.c.l.b16 %v3037
        %v3289 = vunpack.c.h.b16 %v3037
        %v3290 = vunpack.c.l.b16 %v3038
        %v3291 = vunpack.c.h.b16 %v3038
        %v3292 = vunpack.c.l.b16 %v3039
        %v3293 = vunpack.c.h.b16 %v3039
        %v3294 = vunpack.c.l.b16 %v3040
        %v3295 = vunpack.c.h.b16 %v3040
        %v3296 = vunpack.c.l.b16 %v3041
        %v3297 = vunpack.c.h.b16 %v3041
        %v3298 = vunpack.c.l.b16 %v3042
        %v3299 = vunpack.c.h.b16 %v3042
        %v3300 = vunpack.c.l.b16 %v3043
        %v3301 = vunpack.c.h.b16 %v3043
        %v3302 = vunpack.c.l.b16 %v3044
        %v3303 = vunpack.c.h.b16 %v3044
        %v3304 = vunpack.c.l.b16 %v3045
        %v3305 = vunpack.c.h.b16 %v3045
        %v3306 = vunpack.c.l.b16 %v3046
        %v3307 = vunpack.c.h.b16 %v3046
        %v3308 = vunpack.c.l.b16 %v3047
        %v3309 = vunpack.c.h.b16 %v3047
        %v3310 = vunpack.c.l.b16 %v3048
        %v3311 = vunpack.c.h.b16 %v3048
        %v3312 = vunpack.c.l.b16 %v3049
        %v3313 = vunpack.c.h.b16 %v3049
        %v3314 = vunpack.c.l.b16 %v3050
        %v3315 = vunpack.c.h.b16 %v3050
        %v3316 = vunpack.c.l.b16 %v3051
        %v3317 = vunpack.c.h.b16 %v3051
        %v3318 = vunpack.c.l.b16 %v3052
        %v3319 = vunpack.c.h.b16 %v3052
        %v3320 = vunpack.c.l.b16 %v3053
        %v3321 = vunpack.c.h.b16 %v3053
        %v3322 = vunpack.c.l.b16 %v3054
        %v3323 = vunpack.c.h.b16 %v3054
        %v3324 = vunpack.c.l.b16 %v3055
        %v3325 = vunpack.c.h.b16 %v3055
        %v3326 = vunpack.c.l.b16 %v3056
        %v3327 = vunpack.c.h.b16 %v3056
        %v3328 = vunpack.c.l.b16 %v3057
        %v3329 = vunpack.c.h.b16 %v3057
        %v3330 = vunpack.c.l.b16 %v3058
        %v3331 = vunpack.c.h.b16 %v3058
        %v3332 = vunpack.c.l.b16 %v3059
        %v3333 = vunpack.c.h.b16 %v3059
        %v3334 = vunpack.c.l.b16 %v3060
        %v3335 = vunpack.c.h.b16 %v3060
        %v3336 = vunpack.c.l.b16 %v3061
        %v3337 = vunpack.c.h.b16 %v3061
        %v3338 = vunpack.c.l.b16 %v3062
        %v3339 = vunpack.c.h.b16 %v3062
        %v3340 = vunpack.c.l.b16 %v3063
        %v3341 = vunpack.c.h.b16 %v3063
        %v3342 = vunpack.c.l.b16 %v3064
        %v3343 = vunpack.c.h.b16 %v3064
        %v3344 = vunpack.c.l.b16 %v3065
        %v3345 = vunpack.c.h.b16 %v3065
        %v3346 = vunpack.c.l.b16 %v3066
        %v3347 = vunpack.c.h.b16 %v3066
        %v3348 = vunpack.c.l.b16 %v3067
        %v3349 = vunpack.c.h.b16 %v3067
        %v3350 = vunpack.c.l.b16 %v3068
        %v3351 = vunpack.c.h.b16 %v3068
        %v3352 = vunpack.c.l.b16 %v3069
        %v3353 = vunpack.c.h.b16 %v3069
        %v3354 = vunpack.c.l.b16 %v3070
        %v3355 = vunpack.c.h.b16 %v3070
        %v3356 = vunpack.c.l.b16 %v3071
        %v3357 = vunpack.c.h.b16 %v3071
        %v3358 = vunpack.c.l.b16 %v3072
        %v3359 = vunpack.c.h.b16 %v3072
        %v3360 = vunpack.c.l.b16 %v3073
        %v3361 = vunpack.c.h.b16 %v3073
        %v3362 = vunpack.c.l.b16 %v3074
        %v3363 = vunpack.c.h.b16 %v3074
        %v3364 = vunpack.c.l.b16 %v3075
        %v3365 = vunpack.c.h.b16 %v3075
        %v3366 = vunpack.c.l.b16 %v3076
        %v3367 = vunpack.c.h.b16 %v3076
        %v3368 = vunpack.c.l.b16 %v3077
        %v3369 = vunpack.c.h.b16 %v3077
        %v3370 = vunpack.c.l.b16 %v3078
        %v3371 = vunpack.c.h.b16 %v3078
        %v3372 = vunpack.c.l.b16 %v3079
        %v3373 = vunpack.c.h.b16 %v3079
        %v3374 = vunpack.c.l.b16 %v3080
        %v3375 = vunpack.c.h.b16 %v3080
        %v3376 = vunpack.c.l.b16 %v3081
        %v3377 = vunpack.c.h.b16 %v3081
        %v3378 = vunpack.c.l.b16 %v3082
        %v3379 = vunpack.c.h.b16 %v3082
        %v3380 = vunpack.c.l.b16 %v3083
        %v3381 = vunpack.c.h.b16 %v3083
        %v3382 = vunpack.c.l.b16 %v3084
        %v3383 = vunpack.c.h.b16 %v3084
        %v3384 = vunpack.c.l.b16 %v3085
        %v3385 = vunpack.c.h.b16 %v3085
        %v3386 = vunpack.c.l.b16 %v3086
        %v3387 = vunpack.c.h.b16 %v3086
        %v3388 = vunpack.c.l.b16 %v3087
        %v3389 = vunpack.c.h.b16 %v3087
        %v3390 = vunpack.c.l.b16 %v3088
        %v3391 = vunpack.c.h.b16 %v3088
        %v3392 = vunpack.c.l.b16 %v3089
        %v3393 = vunpack.c.h.b16 %v3089
        %v3394 = vunpack.c.l.b16 %v3090
        %v3395 = vunpack.c.h.b16 %v3090
        %v3396 = vunpack.c.l.b16 %v3091
        %v3397 = vunpack.c.h.b16 %v3091
        %v3398 = vunpack.c.l.b16 %v3092
        %v3399 = vunpack.c.h.b16 %v3092
        %v3400 = vunpack.c.l.b16 %v3093
        %v3401 = vunpack.c.h.b16 %v3093
        %v3402 = vunpack.c.l.b16 %v3094
        %v3403 = vunpack.c.h.b16 %v3094
        %v3404 = vunpack.c.l.b16 %v3095
        %v3405 = vunpack.c.h.b16 %v3095
        %v3406 = vunpack.c.l.b16 %v3096
        %v3407 = vunpack.c.h.b16 %v3096
        %v3408 = vunpack.c.l.b16 %v3097
        %v3409 = vunpack.c.h.b16 %v3097
        %v3410 = vunpack.c.l.b16 %v3098
        %v3411 = vunpack.c.h.b16 %v3098
        %v3412 = vunpack.c.l.b16 %v3099
        %v3413 = vunpack.c.h.b16 %v3099
        %v3414 = vunpack.c.l.b16 %v3100
        %v3415 = vunpack.c.h.b16 %v3100
        %v3416 = vunpack.c.l.b16 %v3101
        %v3417 = vunpack.c.h.b16 %v3101
        %v3418 = vunpack.c.l.b16 %v3102
        %v3419 = vunpack.c.h.b16 %v3102
        %v3420 = vunpack.c.l.b16 %v3103
        %v3421 = vunpack.c.h.b16 %v3103
        %v3422 = vunpack.c.l.b16 %v3104
        %v3423 = vunpack.c.h.b16 %v3104
        %v3424 = vunpack.c.l.b16 %v3105
        %v3425 = vunpack.c.h.b16 %v3105
        %v3426 = vunpack.c.l.b16 %v3106
        %v3427 = vunpack.c.h.b16 %v3106
        %v3428 = vunpack.c.l.b16 %v3107
        %v3429 = vunpack.c.h.b16 %v3107
        %v3430 = vunpack.c.l.b16 %v3108
        %v3431 = vunpack.c.h.b16 %v3108
        %v3432 = vunpack.c.l.b16 %v3109
        %v3433 = vunpack.c.h.b16 %v3109
        %v3434 = vunpack.c.l.b16 %v3110
        %v3435 = vunpack.c.h.b16 %v3110
        %v3436 = vunpack.c.l.b16 %v3111
        %v3437 = vunpack.c.h.b16 %v3111
        %v3438 = vunpack.c.l.b16 %v3112
        %v3439 = vunpack.c.h.b16 %v3112
        %v3440 = vunpack.c.l.b16 %v3113
        %v3441 = vunpack.c.h.b16 %v3113
        %v3442 = vunpack.c.l.b16 %v3114
        %v3443 = vunpack.c.h.b16 %v3114
        %v3444 = vunpack.c.l.b16 %v3115
        %v3445 = vunpack.c.h.b16 %v3115
        %v3446 = vunpack.c.l.b16 %v3116
        %v3447 = vunpack.c.h.b16 %v3116
        %v3448 = vunpack.c.l.b16 %v3117
        %v3449 = vunpack.c.h.b16 %v3117
        %v3450 = vunpack.c.l.b16 %v3118
        %v3451 = vunpack.c.h.b16 %v3118
        %v3452 = vunpack.c.l.b16 %v3119
        %v3453 = vunpack.c.h.b16 %v3119
        %v3454 = vunpack.c.l.b16 %v3120
        %v3455 = vunpack.c.h.b16 %v3120
        %v3456 = vunpack.c.l.b16 %v3121
        %v3457 = vunpack.c.h.b16 %v3121
        %v3458 = vunpack.c.l.b16 %v3122
        %v3459 = vunpack.c.h.b16 %v3122
        %v3460 = vunpack.c.l.b16 %v3123
        %v3461 = vunpack.c.h.b16 %v3123
        %v3462 = vunpack.c.l.b16 %v3124
        %v3463 = vunpack.c.h.b16 %v3124
        %v3464 = vunpack.c.l.b16 %v3125
        %v3465 = vunpack.c.h.b16 %v3125
        %v3466 = vunpack.c.l.b16 %v3126
        %v3467 = vunpack.c.h.b16 %v3126
        %v3468 = vpack.c.b16 %v3260, %v3256
        %v3469 = vpack.c.b16 %v3261, %v3257
        %v3470 = vpack.c.b16 %v3262, %v3258
        %v3471 = vpack.c.b16 %v3263, %v3259
        %v3472 = vpack.c.b16 %v3268, %v3264
        %v3473 = vpack.c.b16 %v3269, %v3265
        %v3474 = vpack.c.b16 %v3270, %v3266
        %v3475 = vpack.c.b16 %v3271, %v3267
        %v3476 = vpack.c.b16 %v3276, %v3272
        %v3477 = vpack.c.b16 %v3277, %v3273
        %v3478 = vpack.c.b16 %v3278, %v3274
        %v3479 = vpack.c.b16 %v3279, %v3275
        %v3480 = vpack.c.b16 %v3284, %v3280
        %v3481 = vpack.c.b16 %v3285, %v3281
        %v3482 = vpack.c.b16 %v3286, %v3282
        %v3483 = vpack.c.b16 %v3287, %v3283
        %v3484 = vpack.c.b16 %v3292, %v3288
        %v3485 = vpack.c.b16 %v3293, %v3289
        %v3486 = vpack.c.b16 %v3294, %v3290
        %v3487 = vpack.c.b16 %v3295, %v3291
        %v3488 = vpack.c.b16 %v3300, %v3296
        %v3489 = vpack.c.b16 %v3301, %v3297
        %v3490 = vpack.c.b16 %v3302, %v3298
        %v3491 = vpack.c.b16 %v3303, %v3299
        %v3492 = vpack.c.b16 %v3308, %v3304
        %v3493 = vpack.c.b16 %v3309, %v3305
        %v3494 = vpack.c.b16 %v3310, %v3306
        %v3495 = vpack.c.b16 %v3311, %v3307
        %v3496 = vpack.c.b16 %v3316, %v3312
        %v3497 = vpack.c.b16 %v3317, %v3313
        %v3498 = vpack.c.b16 %v3318, %v3314
        %v3499 = vpack.c.b16 %v3319, %v3315
        %v3500 = vpack.c.b16 %v3324, %v3320
        %v3501 = vpack.c.b16 %v3325, %v3321
        %v3502 = vpack.c.b16 %v3326, %v3322
        %v3503 = vpack.c.b16 %v3327, %v3323
        %v3504 = vpack.c.b16 %v3332, %v3328
        %v3505 = vpack.c.b16 %v3333, %v3329
        %v3506 = vpack.c.b16 %v3334, %v3330
        %v3507 = vpack.c.b16 %v3335, %v3331
        %v3508 = vpack.c.b16 %v3340, %v3336
        %v3509 = vpack.c.b16 %v3341, %v3337
        %v3510 = vpack.c.b16 %v3342, %v3338
        %v3511 = vpack.c.b16 %v3343, %v3339
        %v3512 = vpack.c.b16 %v3348, %v3344
        %v3513 = vpack.c.b16 %v3349, %v3345
        %v3514 = vpack.c.b16 %v3350, %v3346
        %v3515 = vpack.c.b16 %v3351, %v3347
        %v3516 = vpack.c.b16 %v3356, %v3352
        %v3517 = vpack.c.b16 %v3357, %v3353
        %v3518 = vpack.c.b16 %v3358, %v3354
        %v3519 = vpack.c.b16 %v3359, %v3355
        %v3520 = vpack.c.b16 %v3364, %v3360
        %v3521 = vpack.c.b16 %v3365, %v3361
        %v3522 = vpack.c.b16 %v3366, %v3362
        %v3523 = vpack.c.b16 %v3367, %v3363
        %v3524 = vpack.c.b16 %v3372, %v3368
        %v3525 = vpack.c.b16 %v3373, %v3369
        %v3526 = vpack.c.b16 %v3374, %v3370
        %v3527 = vpack.c.b16 %v3375, %v3371
        %v3528 = vpack.c.b16 %v3380, %v3376
        %v3529 = vpack.c.b16 %v3381, %v3377
        %v3530 = vpack.c.b16 %v3382, %v3378
        %v3531 = vpack.c.b16 %v3383, %v3379
        %v3532 = vpack.c.b16 %v3388, %v3384
        %v3533 = vpack.c.b16 %v3389, %v3385
        %v3534 = vpack.c.b16 %v3390, %v3386
        %v3535 = vpack.c.b16 %v3391, %v3387
        %v3536 = vpack.c.b16 %v3396, %v3392
        %v3537 = vpack.c.b16 %v3397, %v3393
        %v3538 = vpack.c.b16 %v3398, %v3394
        %v3539 = vpack.c.b16 %v3399, %v3395
        %v3540 = vpack.c.b16 %v3404, %v3400
        %v3541 = vpack.c.b16 %v3405, %v3401
        %v3542 = vpack.c.b16 %v3406, %v3402
        %v3543 = vpack.c.b16 %v3407, %v3403
        %v3544 = vpack.c.b16 %v3412, %v3408
        %v3545 = vpack.c.b16 %v3413, %v3409
        %v3546 = vpack.c.b16 %v3414, %v3410
        %v3547 = vpack.c.b16 %v3415, %v3411
        %v3548 = vpack.c.b16 %v3420, %v3416
        %v3549 = vpack.c.b16 %v3421, %v3417
        %v3550 = vpack.c.b16 %v3422, %v3418
        %v3551 = vpack.c.b16 %v3423, %v3419
        %v3552 = vpack.c.b16 %v3428, %v3424
        %v3553 = vpack.c.b16 %v3429, %v3425
        %v3554 = vpack.c.b16 %v3430, %v3426
        %v3555 = vpack.c.b16 %v3431, %v3427
        %v3556 = vpack.c.b16 %v3436, %v3432
        %v3557 = vpack.c.b16 %v3437, %v3433
        %v3558 = vpack.c.b16 %v3438, %v3434
        %v3559 = vpack.c.b16 %v3439, %v3435
        %v3560 = vpack.c.b16 %v3444, %v3440
        %v3561 = vpack.c.b16 %v3445, %v3441
        %v3562 = vpack.c.b16 %v3446, %v3442
        %v3563 = vpack.c.b16 %v3447, %v3443
        %v3564 = vpack.c.b16 %v3452, %v3448
        %v3565 = vpack.c.b16 %v3453, %v3449
        %v3566 = vpack.c.b16 %v3454, %v3450
        %v3567 = vpack.c.b16 %v3455, %v3451
        %v3568 = vpack.c.b16 %v3460, %v3456
        %v3569 = vpack.c.b16 %v3461, %v3457
        %v3570 = vpack.c.b16 %v3462, %v3458
        %v3571 = vpack.c.b16 %v3463, %v3459
        %v3572 = vpack.c.b16 %v3464, %v3464
        %v3573 = vpack.c.b16 %v3465, %v3465
        %v3574 = vpack.c.b16 %v3466, %v3466
        %v3575 = vpack.c.b16 %v3467, %v3467
        %v3681 = vsel %vm1089, %v3019, 0
        %v3684 = vsel %vm1093, %v3572, 0
        %v3687 = vsel %vm1093, %v3573, 0
        %v3690 = vsel %vm1093, %v3574, 0
        %v3693 = vsel %vm1093, %v3575, 0
        %3695 = vmatprep.subr.bf16.mxu0 %v3469
        %3696 = vmatpush1.bf16.msra.mxu0 %v3468
        %3697 = vmatprep.subr.bf16.mxu0 %v3473
        %3698 = vmatpush1.bf16.msra.mxu0 %v3472
        %3699 = vmatprep.subr.bf16.mxu0 %v3477
        %3700 = vmatpush1.bf16.msra.mxu0 %v3476
        %3701 = vmatprep.subr.bf16.mxu0 %v3481
        %3702 = vmatpush1.bf16.msra.mxu0 %v3480
        %3703 = vmatprep.subr.bf16.mxu0 %v3485
        %3704 = vmatpush1.bf16.msra.mxu0 %v3484
        %3705 = vmatprep.subr.bf16.mxu0 %v3489
        %3706 = vmatpush1.bf16.msra.mxu0 %v3488
        %3707 = vmatprep.subr.bf16.mxu0 %v3493
        %3708 = vmatpush1.bf16.msra.mxu0 %v3492
        %3709 = vmatprep.subr.bf16.mxu0 %v3497
        %3710 = vmatpush1.bf16.msra.mxu0 %v3496
        %3711 = vmatprep.subr.bf16.mxu0 %v3501
        %3712 = vmatpush1.bf16.msra.mxu0 %v3500
        %3713 = vmatprep.subr.bf16.mxu0 %v3505
        %3714 = vmatpush1.bf16.msra.mxu0 %v3504
        %3715 = vmatprep.subr.bf16.mxu0 %v3509
        %3716 = vmatpush1.bf16.msra.mxu0 %v3508
        %3717 = vmatprep.subr.bf16.mxu0 %v3513
        %3718 = vmatpush1.bf16.msra.mxu0 %v3512
        %3719 = vmatprep.subr.bf16.mxu0 %v3517
        %3720 = vmatpush1.bf16.msra.mxu0 %v3516
        %3721 = vmatprep.subr.bf16.mxu0 %v3521
        %3722 = vmatpush1.bf16.msra.mxu0 %v3520
        %3723 = vmatprep.subr.bf16.mxu0 %v3525
        %3724 = vmatpush1.bf16.msra.mxu0 %v3524
        %3725 = vmatprep.subr.bf16.mxu0 %v3529
        %3726 = vmatpush1.bf16.msra.mxu0 %v3528
        %3727 = vmatprep.mubr.bf16.mxu0 %v3017
        %3728 = vmatmul.mubr.bf16.gmra.mrb[0].mxu0 %v3016
        %v3729 = vpop.f32.mrb[0].mxu0
        %v3730 = vadd.f32 %v3133, %v3729
        %v3731 = vpop.f32.mrb[0].mxu0
        %v3732 = vadd.f32 %v3137, %v3731
        %v3733 = vpop.f32.mrb[0].mxu0
        %v3734 = vpop.f32.mrb[0].mxu0
        %3735 = vdwg.mxu0
        %3736 = vmatprep.subr.bf16.mxu0 %v3533
        %3737 = vmatpush1.bf16.msra.mxu0 %v3532
        %3738 = vmatprep.subr.bf16.mxu0 %v3537
        %3739 = vmatpush1.bf16.msra.mxu0 %v3536
        %3740 = vmatprep.subr.bf16.mxu0 %v3541
        %3741 = vmatpush1.bf16.msra.mxu0 %v3540
        %3742 = vmatprep.subr.bf16.mxu0 %v3545
        %3743 = vmatpush1.bf16.msra.mxu0 %v3544
        %3744 = vmatprep.subr.bf16.mxu0 %v3549
        %3745 = vmatpush1.bf16.msra.mxu0 %v3548
        %3746 = vmatprep.subr.bf16.mxu0 %v3553
        %3747 = vmatpush1.bf16.msra.mxu0 %v3552
        %3748 = vmatprep.subr.bf16.mxu0 %v3557
        %3749 = vmatpush1.bf16.msra.mxu0 %v3556
        %3750 = vmatprep.subr.bf16.mxu0 %v3561
        %3751 = vmatpush1.bf16.msra.mxu0 %v3560
        %3752 = vmatprep.subr.bf16.mxu0 %v3565
        %3753 = vmatpush1.bf16.msra.mxu0 %v3564
        %3754 = vmatprep.subr.bf16.mxu0 %v3569
        %3755 = vmatpush1.bf16.msra.mxu0 %v3568
        %3756 = vmatprep.subr.bf16.mxu0 %v3687
        %3757 = vmatpush1.bf16.msra.mxu0 %v3684
        %3758 = vmatprep.subr.bf16.mxu0 0
        %3759 = vmatpush1.bf16.msra.mxu0 0
        %3760 = vmatprep.subr.bf16.mxu0 0
        %3761 = vmatpush1.bf16.msra.mxu0 0
        %3762 = vmatprep.subr.bf16.mxu0 0
        %3763 = vmatpush1.bf16.msra.mxu0 0
        %3764 = vmatprep.subr.bf16.mxu0 0
        %3765 = vmatpush1.bf16.msra.mxu0 0
        %3766 = vmatprep.subr.bf16.mxu0 0
        %3767 = vmatpush1.bf16.msra.mxu0 0
        %3768 = vmatprep.mubr.bf16.mxu0 %v3681
        %3769 = vmatmul.mubr.bf16.gmra.mrb[0].mxu0 %v3018
        %v3770 = vpop.f32.mrb[0].mxu0
        %v3771 = vadd.f32 %v3730, %v3770
        %v3772 = vpop.f32.mrb[0].mxu0
        %v3773 = vadd.f32 %v3732, %v3772
        %v3774 = vpop.f32.mrb[0].mxu0
        %v3775 = vpop.f32.mrb[0].mxu0
        %3776 = vdwg.mxu0
        %3777 = vmatprep.subr.bf16.mxu0 %v3471
        %3778 = vmatpush1.bf16.msra.mxu0 %v3470
        %3779 = vmatprep.subr.bf16.mxu0 %v3475
        %3780 = vmatpush1.bf16.msra.mxu0 %v3474
        %3781 = vmatprep.subr.bf16.mxu0 %v3479
        %3782 = vmatpush1.bf16.msra.mxu0 %v3478
        %3783 = vmatprep.subr.bf16.mxu0 %v3483
        %3784 = vmatpush1.bf16.msra.mxu0 %v3482
        %3785 = vmatprep.subr.bf16.mxu0 %v3487
        %3786 = vmatpush1.bf16.msra.mxu0 %v3486
        %3787 = vmatprep.subr.bf16.mxu0 %v3491
        %3788 = vmatpush1.bf16.msra.mxu0 %v3490
        %3789 = vmatprep.subr.bf16.mxu0 %v3495
        %3790 = vmatpush1.bf16.msra.mxu0 %v3494
        %3791 = vmatprep.subr.bf16.mxu0 %v3499
        %3792 = vmatpush1.bf16.msra.mxu0 %v3498
        %3793 = vmatprep.subr.bf16.mxu0 %v3503
        %3794 = vmatpush1.bf16.msra.mxu0 %v3502
        %3795 = vmatprep.subr.bf16.mxu0 %v3507
        %3796 = vmatpush1.bf16.msra.mxu0 %v3506
        %3797 = vmatprep.subr.bf16.mxu0 %v3511
        %3798 = vmatpush1.bf16.msra.mxu0 %v3510
        %3799 = vmatprep.subr.bf16.mxu0 %v3515
        %3800 = vmatpush1.bf16.msra.mxu0 %v3514
        %3801 = vmatprep.subr.bf16.mxu0 %v3519
        %3802 = vmatpush1.bf16.msra.mxu0 %v3518
        %3803 = vmatprep.subr.bf16.mxu0 %v3523
        %3804 = vmatpush1.bf16.msra.mxu0 %v3522
        %3805 = vmatprep.subr.bf16.mxu0 %v3527
        %3806 = vmatpush1.bf16.msra.mxu0 %v3526
        %3807 = vmatprep.subr.bf16.mxu0 %v3531
        %3808 = vmatpush1.bf16.msra.mxu0 %v3530
        %3809 = vmatprep.mubr.bf16.mxu0 %v3017
        %3810 = vmatmul.mubr.bf16.gmra.mrb[0].mxu0 %v3016
        %v3811 = vpop.f32.mrb[0].mxu0
        %v3812 = vadd.f32 %v3141, %v3811
        %v3813 = vpop.f32.mrb[0].mxu0
        %v3814 = vadd.f32 %v3145, %v3813
        %v3815 = vpop.f32.mrb[0].mxu0
        %v3816 = vpop.f32.mrb[0].mxu0
        %3817 = vdwg.mxu0
        %3818 = vmatprep.subr.bf16.mxu0 %v3535
        %3819 = vmatpush1.bf16.msra.mxu0 %v3534
        %3820 = vmatprep.subr.bf16.mxu0 %v3539
        %3821 = vmatpush1.bf16.msra.mxu0 %v3538
        %3822 = vmatprep.subr.bf16.mxu0 %v3543
        %3823 = vmatpush1.bf16.msra.mxu0 %v3542
        %3824 = vmatprep.subr.bf16.mxu0 %v3547
        %3825 = vmatpush1.bf16.msra.mxu0 %v3546
        %3826 = vmatprep.subr.bf16.mxu0 %v3551
        %3827 = vmatpush1.bf16.msra.mxu0 %v3550
        %3828 = vmatprep.subr.bf16.mxu0 %v3555
        %3829 = vmatpush1.bf16.msra.mxu0 %v3554
        %3830 = vmatprep.subr.bf16.mxu0 %v3559
        %3831 = vmatpush1.bf16.msra.mxu0 %v3558
        %3832 = vmatprep.subr.bf16.mxu0 %v3563
        %3833 = vmatpush1.bf16.msra.mxu0 %v3562
        %3834 = vmatprep.subr.bf16.mxu0 %v3567
        %3835 = vmatpush1.bf16.msra.mxu0 %v3566
        %3836 = vmatprep.subr.bf16.mxu0 %v3571
        %3837 = vmatpush1.bf16.msra.mxu0 %v3570
        %3838 = vmatprep.subr.bf16.mxu0 %v3693
        %3839 = vmatpush1.bf16.msra.mxu0 %v3690
        %3840 = vmatprep.subr.bf16.mxu0 0
        %3841 = vmatpush1.bf16.msra.mxu0 0
        %3842 = vmatprep.subr.bf16.mxu0 0
        %3843 = vmatpush1.bf16.msra.mxu0 0
        %3844 = vmatprep.subr.bf16.mxu0 0
        %3845 = vmatpush1.bf16.msra.mxu0 0
        %3846 = vmatprep.subr.bf16.mxu0 0
        %3847 = vmatpush1.bf16.msra.mxu0 0
        %3848 = vmatprep.subr.bf16.mxu0 0
        %3849 = vmatpush1.bf16.msra.mxu0 0
        %3850 = vmatprep.mubr.bf16.mxu0 %v3681
        %3851 = vmatmul.mubr.bf16.gmra.mrb[0].mxu0 %v3018
        %v3852 = vpop.f32.mrb[0].mxu0
        %v3853 = vadd.f32 %v3812, %v3852
        %v3854 = vpop.f32.mrb[0].mxu0
        %v3855 = vadd.f32 %v3814, %v3854
        %v3856 = vpop.f32.mrb[0].mxu0
        %v3857 = vpop.f32.mrb[0].mxu0
        %3858 = vdwg.mxu0
        %v3859 = vsub.f32 0.0, %v3771
        %v3860 = vsub.f32 0.0, %v3773
        %v3861 = vsub.f32 0.0, %v3853
        %v3862 = vsub.f32 0.0, %v3855
        %v3863 = vmul.f32 %v3859, 1.442695
        %v3864 = vpow.pop %v3863
        %v3865 = vmul.f32 %v3860, 1.442695
        %v3866 = vpow.pop %v3865
        %v3867 = vmul.f32 %v3861, 1.442695
        %v3868 = vpow.pop %v3867
        %v3869 = vmul.f32 %v3862, 1.442695
        %v3870 = vpow.pop %v3869
        %v3871 = vadd.f32 %v3864, 1.0
        %v3872 = vadd.f32 %v3866, 1.0
        %v3873 = vadd.f32 %v3868, 1.0
        %v3874 = vadd.f32 %v3870, 1.0
        %v3875 = vrcp.pop %v3871
        %v3876 = vrcp.pop %v3872
        %v3877 = vrcp.pop %v3873
        %v3878 = vrcp.pop %v3874
        %3879 = vst [vmem:[%s215] sm:$0xff] %v3875
        %3880 = vst [vmem:[%s215 + $0x8] sm:$0xff] %v3876
        %3881 = vst [vmem:[%s215 + $0x10] sm:$0xff] %v3877
        %3882 = vst.msk [vmem:[%s215 + $0x18] sm:$0xff] %vm1089, %v3878
        %s3883 = sand.u32 %s137, 1
        %s3884 = scalar_lea.sflag [#allocation3], %s3883
        %s3885 = sand.u32 %s137, 1
        %s3886 = smul.addr %s3885, 32
        %s3887 = scalar_lea.vmem [#allocation2], %s3886
        // Predicated region
        $region41: #{tpu_custom_call.1} parent=39 // pred_check
          %p3888 = pneg %p147
        $region42: #{tpu_custom_call.1} parent=39 // pred_check_branch
          %3890 = sbr.rel (%p3888) target = $region44
        $region43: #{tpu_custom_call.1} parent=39 // pred_region
          %s3892 = ssub.s32 512, 512
          %3893 = vsyncadd %s3884, %s3892
          %s3894 = smul.addr %s19, 4
          %s3895 = smul.addr %s3894, 128
          %s3896 = scalar_lea.hbm %s5, %s3895
          %s3898 = sshll.u32 %s3887, 4
          %s3899 = int_to_ptr.vmem [resolvable:$true] %s3898
          %3901 = dma.vmem_to_hbm [thread:$0]  %s3899, 512, %s3896, %s3884
        $region44: #{tpu_custom_call.1} parent=39 // pred_fallthru
          _
      $region40: #{tpu_custom_call.1} parent=5 // pred_fallthru
        _
      %p3902 = scmp.le.s32.totalorder 2, %s14
      // Predicated region
      $region45: #{tpu_custom_call.1} parent=5 // pred_check
        %p3903 = pneg %p3902
      $region46: #{tpu_custom_call.1} parent=5 // pred_check_branch
        %3905 = sbr.rel (%p3903) target = $region48
      $region47: #{tpu_custom_call.1} parent=5 // pred_region
        %s3906 = ssub.s32 %s14, 2
        // Predicated region
        $region49: #{tpu_custom_call.1} parent=47 // pred_check
          %p3907 = pneg %p153
        $region50: #{tpu_custom_call.1} parent=47 // pred_check_branch
          %3909 = sbr.rel (%p3907) target = $region52
        $region51: #{tpu_custom_call.1} parent=47 // pred_region
          %s3910 = sand.u32 %s138, 1
          %s3911 = scalar_lea.sflag [#allocation3], %s3910
          %s3912 = sand.u32 %s138, 1
          %s3913 = smul.addr %s3912, 32
          %s3914 = scalar_lea.vmem [#allocation2], %s3913
          %3915 = dma.done %s3911, 512
        $region52: #{tpu_custom_call.1} parent=47 // pred_fallthru
          _
      $region48: #{tpu_custom_call.1} parent=5 // pred_fallthru
        _
    $region6: #{tpu_custom_call.1} parent=1 // loop_footer
      %s18 = sadd.s32 1, %s14
    $region7: #{tpu_custom_call.1} parent=1 // loop_footer_branch
      %13 = sbr.rel target = $region3
    $region8: #{tpu_custom_call.1} parent=1 // loop_exit
      _
    %3916 = vsyncpa [#allocation3], 1
    %s3917 = scalar_lea.sflag [#allocation3], 1
    %3918 = vsyncpa %s3917, 1

</llo_original>
